<compile_context>
chip_gen: v6e
topology: v6e:2x2x1
jax: 0.10.0
libtpu: 0.0.40
codegen_flags: <defaults>
</compile_context>

<pallas_src>
import jax
import jax.numpy as jnp
from jax.experimental import pallas as pl
from jax.experimental.pallas import tpu as pltpu

IN_DIM = 24 * 120          # 2880 (native feature width; 22*128 + 64 -> still lane-dense)
HID = 128                  # all hidden dims padded to one vreg-lane width

# (in_features, out_features) of the 8 Linear layers, in order.
LAYER_DIMS = [(IN_DIM, 80), (80, 64), (64, 12), (12, 3),
              (3, 12), (12, 64), (64, 80), (80, IN_DIM)]


def _round_up(v, m):
    return -(-v // m) * m


def _ae_kernel(x_ref,
               w0, w1, w2, w3, w4, w5, w6, w7,   # weights (w0/w7 bf16, rest f32, all padded)
               bp,                               # packed biases (8, IN_DIM) f32
               o_ref):
    # ---- encoder ----
    # Layer 0: x is already bf16; bf16 x bf16 MXU matmul with f32 accumulation.
    h = jnp.dot(x_ref[...], w0[...], preferred_element_type=jnp.float32)       # (TM, 128)
    h = jnp.maximum(h + bp[0:1, 0:HID], 0.0)
    # Small middle layers: f32 weights, f32 accumulation. Padded lanes stay exactly zero
    # (zero weight rows/cols + zero bias), so padding never leaks into real lanes.
    h = jnp.maximum(jnp.dot(h, w1[...], preferred_element_type=jnp.float32) + bp[1:2, 0:HID], 0.0)
    h = jnp.maximum(jnp.dot(h, w2[...], preferred_element_type=jnp.float32) + bp[2:3, 0:HID], 0.0)
    h = jnp.dot(h, w3[...], preferred_element_type=jnp.float32) + bp[3:4, 0:HID]   # latent

    # ---- decoder ----
    h = jnp.maximum(jnp.dot(h, w4[...], preferred_element_type=jnp.float32) + bp[4:5, 0:HID], 0.0)
    h = jnp.maximum(jnp.dot(h, w5[...], preferred_element_type=jnp.float32) + bp[5:6, 0:HID], 0.0)
    h = jnp.maximum(jnp.dot(h, w6[...], preferred_element_type=jnp.float32) + bp[6:7, 0:HID], 0.0)
    # Layer 7: big matmul in bf16, f32 accumulate; tanh kept in f32 (EUP).
    h = jnp.dot(h.astype(jnp.bfloat16), w7[...],
                preferred_element_type=jnp.float32) + bp[7:8, :]
    o_ref[...] = jnp.tanh(h)


def autoencoder_forward(x, kparams, *, tm=256):
    """x: (B, 2880) float; kparams: [w0..w7, bias_pack] as produced by pack_params()."""
    B = x.shape[0]

    # ---- batch-tile selection ----
    tm = max(8, _round_up(tm, 8))
    b8 = _round_up(B, 8)
    tm = min(tm, b8)
    # v7x has 2 TensorCores: make sure there are >= 2 grid steps when the batch allows it.
    if b8 > 8 and -(-b8 // tm) < 2:
        tm = _round_up(-(-b8 // 2), 8)
    B_pad = _round_up(B, tm)
    grid_b = B_pad // tm

    # Cast to bf16 in the wrapper (halves the kernel's input HBM stream); pad only the
    # batch dim when needed — the feature dim stays at its native 2880 width.
    x_b = x.astype(jnp.bfloat16)
    if B_pad != B:
        x_b = jnp.pad(x_b, ((0, B_pad - B), (0, 0)))

    def _resident(p):
        shape = p.shape
        # Constant index_map: DMA'd once, stays VMEM-resident across all grid steps.
        return pl.BlockSpec(shape, lambda i: (0,) * len(shape))

    in_specs = [pl.BlockSpec((tm, IN_DIM), lambda i: (i, 0))] + [_resident(p) for p in kparams]
    out_spec = pl.BlockSpec((tm, IN_DIM), lambda i: (i, 0))

    macs = sum(a * b for a, b in LAYER_DIMS)
    param_bytes = sum(int(p.size) * p.dtype.itemsize for p in kparams)
    cost = pl.CostEstimate(
        flops=2 * macs * B_pad,
        transcendentals=B_pad * IN_DIM,                            # tanh
        bytes_accessed=B_pad * IN_DIM * (2 + 4) + param_bytes,     # bf16 x + f32 out + params
    )

    out_pad = pl.pallas_call(
        _ae_kernel,
        out_shape=jax.ShapeDtypeStruct((B_pad, IN_DIM), jnp.float32),
        grid=(grid_b,),
        in_specs=in_specs,
        out_specs=out_spec,
        compiler_params=pltpu.CompilerParams(
            dimension_semantics=("parallel",),     # batch tiles split across TCs on v7x
            vmem_limit_bytes=32 << 20,
        ),
        cost_estimate=cost,
    )(x_b, *kparams)

    return out_pad if B_pad == B else out_pad[:B]


def init_params(key):
    """PyTorch-like init. Returns flat list [w0, b0, ..., w7, b7] in f32.

    Weights are stored transposed vs. PyTorch, i.e. (in_features, out_features),
    so each layer is y = x @ W + b.
    """
    params = []
    for (fan_in, fan_out) in LAYER_DIMS:
        key, kw, kb = jax.random.split(key, 3)
        bound = 1.0 / jnp.sqrt(float(fan_in))
        w = jax.random.uniform(kw, (fan_in, fan_out), jnp.float32, -bound, bound)
        b = jax.random.uniform(kb, (fan_out,), jnp.float32, -bound, bound)
        params += [w, b]
    return params


def pack_params(params):
    """Prepare kernel parameters: pad hidden dims to 128, bf16 the two big weights,
    pack all 8 biases into a single (8, IN_DIM) array (one DMA, static slices)."""
    ws, bs = params[::2], params[1::2]
    # w0: (2880, 80) -> (2880, 128) bf16
    w0 = jnp.zeros((IN_DIM, HID), jnp.float32).at[:, :ws[0].shape[1]].set(ws[0]).astype(jnp.bfloat16)
    # w1..w6: (fi, fo) -> (128, 128) f32, zero-filled
    mids = []
    for w in ws[1:7]:
        fi, fo = w.shape
        mids.append(jnp.zeros((HID, HID), jnp.float32).at[:fi, :fo].set(w))
    # w7: (80, 2880) -> (128, 2880) bf16
    w7 = jnp.zeros((HID, IN_DIM), jnp.float32).at[:ws[7].shape[0], :].set(ws[7]).astype(jnp.bfloat16)
    # biases: rows 0..6 zero-padded within the first 128 lanes, row 7 is full width.
    bp = jnp.zeros((8, IN_DIM), jnp.float32)
    for i, b in enumerate(bs):
        bp = bp.at[i, :b.shape[0]].set(b)
    return [w0] + mids + [w7, bp]


def reference_forward(x, params):
    """Pure-JAX reference.  Mirrors the kernel's bf16 rounding of x, w0, w7 and the
    pre-w7 activation so the comparison only measures accumulation-order differences."""
    ws = list(params[::2])
    bs = list(params[1::2])
    r = lambda a: a.astype(jnp.bfloat16).astype(jnp.float32)
    h = r(x)
    h = jnp.maximum(h @ r(ws[0]) + bs[0], 0.0)
    for i in range(1, 3):                       # remaining encoder ReLU layers
        h = jnp.maximum(h @ ws[i] + bs[i], 0.0)
    h = h @ ws[3] + bs[3]                       # latent
    for i in range(4, 7):                       # decoder ReLU layers
        h = jnp.maximum(h @ ws[i] + bs[i], 0.0)
    return jnp.tanh(r(h) @ r(ws[7]) + bs[7])    # output


if __name__ == "__main__":
    key = jax.random.PRNGKey(0)
    key, kx = jax.random.split(key)
    B = 32                                       # small batch
    x = jax.random.normal(kx, (B, IN_DIM), dtype=jnp.float32)

    params = init_params(key)
    kparams = pack_params(params)

    # Default tm clamps to 16 here -> 2 grid steps, exercising the pipelined batch grid
    # (and the v7x two-TC split).
    out = autoencoder_forward(x, kparams)
    out = jax.block_until_ready(out)

    ref = reference_forward(x, params)
    assert out.shape == (B, IN_DIM)
    assert jnp.allclose(out, ref, atol=2e-2, rtol=2e-2), "mismatch vs JAX reference"

    print("KERNEL_OK")
</pallas_src>

<mosaic_0001>
module attributes {stable_mosaic.version = 11 : i64} {
  func.func @_ae_kernel(%arg0: i32, %arg1: memref<16x2880xbf16, #tpu.memory_space<vmem>>, %arg2: memref<2880x128xbf16, #tpu.memory_space<vmem>>, %arg3: memref<128x128xf32, #tpu.memory_space<vmem>>, %arg4: memref<128x128xf32, #tpu.memory_space<vmem>>, %arg5: memref<128x128xf32, #tpu.memory_space<vmem>>, %arg6: memref<128x128xf32, #tpu.memory_space<vmem>>, %arg7: memref<128x128xf32, #tpu.memory_space<vmem>>, %arg8: memref<128x128xf32, #tpu.memory_space<vmem>>, %arg9: memref<128x2880xbf16, #tpu.memory_space<vmem>>, %arg10: memref<8x2880xf32, #tpu.memory_space<vmem>>, %arg11: memref<16x2880xf32, #tpu.memory_space<vmem>>) attributes {dimension_semantics = [#tpu.dimension_semantics<parallel>], iteration_bounds = array<i64: 2>, scalar_prefetch = 0 : i64, scratch_operands = 0 : i64, tpu.core_type = #tpu.core_type<tc>, window_params = [{transform_indices = @transform_0, window_bounds = array<i64: 16, 2880>}, {pipeline_mode = #tpu.pipeline_mode<synchronous>, transform_indices = @transform_1, window_bounds = array<i64: 2880, 128>}, {pipeline_mode = #tpu.pipeline_mode<synchronous>, transform_indices = @transform_2, window_bounds = array<i64: 128, 128>}, {pipeline_mode = #tpu.pipeline_mode<synchronous>, transform_indices = @transform_3, window_bounds = array<i64: 128, 128>}, {pipeline_mode = #tpu.pipeline_mode<synchronous>, transform_indices = @transform_4, window_bounds = array<i64: 128, 128>}, {pipeline_mode = #tpu.pipeline_mode<synchronous>, transform_indices = @transform_5, window_bounds = array<i64: 128, 128>}, {pipeline_mode = #tpu.pipeline_mode<synchronous>, transform_indices = @transform_6, window_bounds = array<i64: 128, 128>}, {pipeline_mode = #tpu.pipeline_mode<synchronous>, transform_indices = @transform_7, window_bounds = array<i64: 128, 128>}, {pipeline_mode = #tpu.pipeline_mode<synchronous>, transform_indices = @transform_8, window_bounds = array<i64: 128, 2880>}, {pipeline_mode = #tpu.pipeline_mode<synchronous>, transform_indices = @transform_9, window_bounds = array<i64: 8, 2880>}, {transform_indices = @transform_10, window_bounds = array<i64: 16, 2880>}]} {
    %c0 = arith.constant 0 : index
    %c0_0 = arith.constant 0 : index
    %0 = vector.load %arg1[%c0, %c0_0] : memref<16x2880xbf16, #tpu.memory_space<vmem>>, vector<16x2880xbf16>
    %c0_1 = arith.constant 0 : index
    %c0_2 = arith.constant 0 : index
    %1 = vector.load %arg2[%c0_1, %c0_2] : memref<2880x128xbf16, #tpu.memory_space<vmem>>, vector<2880x128xbf16>
    %cst = arith.constant dense<0.000000e+00> : vector<16x128xf32>
    %2 = tpu.matmul %0, %1, %cst {dimension_numbers = #tpu.dot_dimension_numbers<[1], [0], [0], [1], [0, 0, 1, 1], [], []>} : vector<16x2880xbf16>, vector<2880x128xbf16>, vector<16x128xf32> -> vector<16x128xf32>
    %c0_3 = arith.constant 0 : index
    %c0_4 = arith.constant 0 : index
    %3 = vector.load %arg10[%c0_3, %c0_4] : memref<8x2880xf32, #tpu.memory_space<vmem>>, vector<1x128xf32>
    %4 = vector.broadcast %3 : vector<1x128xf32> to vector<16x128xf32>
    %5 = arith.addf %2, %4 : vector<16x128xf32>
    %cst_5 = arith.constant 0.000000e+00 : f32
    %6 = vector.broadcast %cst_5 : f32 to vector<16x128xf32>
    %7 = arith.maximumf %5, %6 : vector<16x128xf32>
    %c0_6 = arith.constant 0 : index
    %c0_7 = arith.constant 0 : index
    %8 = vector.load %arg3[%c0_6, %c0_7] : memref<128x128xf32, #tpu.memory_space<vmem>>, vector<128x128xf32>
    %cst_8 = arith.constant dense<0.000000e+00> : vector<16x128xf32>
    %9 = tpu.matmul %7, %8, %cst_8 {dimension_numbers = #tpu.dot_dimension_numbers<[1], [0], [0], [1], [0, 0, 1, 1], [], []>} : vector<16x128xf32>, vector<128x128xf32>, vector<16x128xf32> -> vector<16x128xf32>
    %c1 = arith.constant 1 : index
    %c0_9 = arith.constant 0 : index
    %10 = vector.load %arg10[%c1, %c0_9] : memref<8x2880xf32, #tpu.memory_space<vmem>>, vector<1x128xf32>
    %11 = vector.broadcast %10 : vector<1x128xf32> to vector<16x128xf32>
    %12 = arith.addf %9, %11 : vector<16x128xf32>
    %cst_10 = arith.constant 0.000000e+00 : f32
    %13 = vector.broadcast %cst_10 : f32 to vector<16x128xf32>
    %14 = arith.maximumf %12, %13 : vector<16x128xf32>
    %c0_11 = arith.constant 0 : index
    %c0_12 = arith.constant 0 : index
    %15 = vector.load %arg4[%c0_11, %c0_12] : memref<128x128xf32, #tpu.memory_space<vmem>>, vector<128x128xf32>
    %cst_13 = arith.constant dense<0.000000e+00> : vector<16x128xf32>
    %16 = tpu.matmul %14, %15, %cst_13 {dimension_numbers = #tpu.dot_dimension_numbers<[1], [0], [0], [1], [0, 0, 1, 1], [], []>} : vector<16x128xf32>, vector<128x128xf32>, vector<16x128xf32> -> vector<16x128xf32>
    %c2 = arith.constant 2 : index
    %c0_14 = arith.constant 0 : index
    %17 = vector.load %arg10[%c2, %c0_14] : memref<8x2880xf32, #tpu.memory_space<vmem>>, vector<1x128xf32>
    %18 = vector.broadcast %17 : vector<1x128xf32> to vector<16x128xf32>
    %19 = arith.addf %16, %18 : vector<16x128xf32>
    %cst_15 = arith.constant 0.000000e+00 : f32
    %20 = vector.broadcast %cst_15 : f32 to vector<16x128xf32>
    %21 = arith.maximumf %19, %20 : vector<16x128xf32>
    %c0_16 = arith.constant 0 : index
    %c0_17 = arith.constant 0 : index
    %22 = vector.load %arg5[%c0_16, %c0_17] : memref<128x128xf32, #tpu.memory_space<vmem>>, vector<128x128xf32>
    %cst_18 = arith.constant dense<0.000000e+00> : vector<16x128xf32>
    %23 = tpu.matmul %21, %22, %cst_18 {dimension_numbers = #tpu.dot_dimension_numbers<[1], [0], [0], [1], [0, 0, 1, 1], [], []>} : vector<16x128xf32>, vector<128x128xf32>, vector<16x128xf32> -> vector<16x128xf32>
    %c3 = arith.constant 3 : index
    %c0_19 = arith.constant 0 : index
    %24 = vector.load %arg10[%c3, %c0_19] : memref<8x2880xf32, #tpu.memory_space<vmem>>, vector<1x128xf32>
    %25 = vector.broadcast %24 : vector<1x128xf32> to vector<16x128xf32>
    %26 = arith.addf %23, %25 : vector<16x128xf32>
    %c0_20 = arith.constant 0 : index
    %c0_21 = arith.constant 0 : index
    %27 = vector.load %arg6[%c0_20, %c0_21] : memref<128x128xf32, #tpu.memory_space<vmem>>, vector<128x128xf32>
    %cst_22 = arith.constant dense<0.000000e+00> : vector<16x128xf32>
    %28 = tpu.matmul %26, %27, %cst_22 {dimension_numbers = #tpu.dot_dimension_numbers<[1], [0], [0], [1], [0, 0, 1, 1], [], []>} : vector<16x128xf32>, vector<128x128xf32>, vector<16x128xf32> -> vector<16x128xf32>
    %c4 = arith.constant 4 : index
    %c0_23 = arith.constant 0 : index
    %29 = vector.load %arg10[%c4, %c0_23] : memref<8x2880xf32, #tpu.memory_space<vmem>>, vector<1x128xf32>
    %30 = vector.broadcast %29 : vector<1x128xf32> to vector<16x128xf32>
    %31 = arith.addf %28, %30 : vector<16x128xf32>
    %cst_24 = arith.constant 0.000000e+00 : f32
    %32 = vector.broadcast %cst_24 : f32 to vector<16x128xf32>
    %33 = arith.maximumf %31, %32 : vector<16x128xf32>
    %c0_25 = arith.constant 0 : index
    %c0_26 = arith.constant 0 : index
    %34 = vector.load %arg7[%c0_25, %c0_26] : memref<128x128xf32, #tpu.memory_space<vmem>>, vector<128x128xf32>
    %cst_27 = arith.constant dense<0.000000e+00> : vector<16x128xf32>
    %35 = tpu.matmul %33, %34, %cst_27 {dimension_numbers = #tpu.dot_dimension_numbers<[1], [0], [0], [1], [0, 0, 1, 1], [], []>} : vector<16x128xf32>, vector<128x128xf32>, vector<16x128xf32> -> vector<16x128xf32>
    %c5 = arith.constant 5 : index
    %c0_28 = arith.constant 0 : index
    %36 = vector.load %arg10[%c5, %c0_28] : memref<8x2880xf32, #tpu.memory_space<vmem>>, vector<1x128xf32>
    %37 = vector.broadcast %36 : vector<1x128xf32> to vector<16x128xf32>
    %38 = arith.addf %35, %37 : vector<16x128xf32>
    %cst_29 = arith.constant 0.000000e+00 : f32
    %39 = vector.broadcast %cst_29 : f32 to vector<16x128xf32>
    %40 = arith.maximumf %38, %39 : vector<16x128xf32>
    %c0_30 = arith.constant 0 : index
    %c0_31 = arith.constant 0 : index
    %41 = vector.load %arg8[%c0_30, %c0_31] : memref<128x128xf32, #tpu.memory_space<vmem>>, vector<128x128xf32>
    %cst_32 = arith.constant dense<0.000000e+00> : vector<16x128xf32>
    %42 = tpu.matmul %40, %41, %cst_32 {dimension_numbers = #tpu.dot_dimension_numbers<[1], [0], [0], [1], [0, 0, 1, 1], [], []>} : vector<16x128xf32>, vector<128x128xf32>, vector<16x128xf32> -> vector<16x128xf32>
    %c6 = arith.constant 6 : index
    %c0_33 = arith.constant 0 : index
    %43 = vector.load %arg10[%c6, %c0_33] : memref<8x2880xf32, #tpu.memory_space<vmem>>, vector<1x128xf32>
    %44 = vector.broadcast %43 : vector<1x128xf32> to vector<16x128xf32>
    %45 = arith.addf %42, %44 : vector<16x128xf32>
    %cst_34 = arith.constant 0.000000e+00 : f32
    %46 = vector.broadcast %cst_34 : f32 to vector<16x128xf32>
    %47 = arith.maximumf %45, %46 : vector<16x128xf32>
    %48 = arith.truncf %47 : vector<16x128xf32> to vector<16x128xbf16>
    %c0_35 = arith.constant 0 : index
    %c0_36 = arith.constant 0 : index
    %49 = vector.load %arg9[%c0_35, %c0_36] : memref<128x2880xbf16, #tpu.memory_space<vmem>>, vector<128x2880xbf16>
    %cst_37 = arith.constant dense<0.000000e+00> : vector<16x2880xf32>
    %50 = tpu.matmul %48, %49, %cst_37 {dimension_numbers = #tpu.dot_dimension_numbers<[1], [0], [0], [1], [0, 0, 1, 1], [], []>} : vector<16x128xbf16>, vector<128x2880xbf16>, vector<16x2880xf32> -> vector<16x2880xf32>
    %c7 = arith.constant 7 : index
    %c0_38 = arith.constant 0 : index
    %51 = vector.load %arg10[%c7, %c0_38] : memref<8x2880xf32, #tpu.memory_space<vmem>>, vector<1x2880xf32>
    %52 = vector.broadcast %51 : vector<1x2880xf32> to vector<16x2880xf32>
    %53 = arith.addf %50, %52 : vector<16x2880xf32>
    %54 = math.tanh %53 : vector<16x2880xf32>
    %c0_39 = arith.constant 0 : index
    %c0_40 = arith.constant 0 : index
    %55 = vector.load %arg11[%c0_39, %c0_40] : memref<16x2880xf32, #tpu.memory_space<vmem>>, vector<16x2880xf32>
    tpu.vector_store %arg11[%c0_39, %c0_40], %54 {strides = array<i32>} : memref<16x2880xf32, #tpu.memory_space<vmem>>, vector<16x2880xf32>,
    return
  }
  func.func @transform_0(%arg0: i32) -> (i32, i32) {
    %c0_i32 = arith.constant 0 : i32
    %c0_i32_0 = arith.constant 0 : i32
    return %arg0, %c0_i32 : i32, i32
  }
  func.func @transform_1(%arg0: i32) -> (i32, i32) {
    %c0_i32 = arith.constant 0 : i32
    %c0_i32_0 = arith.constant 0 : i32
    %c0_i32_1 = arith.constant 0 : i32
    return %c0_i32, %c0_i32_0 : i32, i32
  }
  func.func @transform_2(%arg0: i32) -> (i32, i32) {
    %c0_i32 = arith.constant 0 : i32
    %c0_i32_0 = arith.constant 0 : i32
    %c0_i32_1 = arith.constant 0 : i32
    return %c0_i32, %c0_i32_0 : i32, i32
  }
  func.func @transform_3(%arg0: i32) -> (i32, i32) {
    %c0_i32 = arith.constant 0 : i32
    %c0_i32_0 = arith.constant 0 : i32
    %c0_i32_1 = arith.constant 0 : i32
    return %c0_i32, %c0_i32_0 : i32, i32
  }
  func.func @transform_4(%arg0: i32) -> (i32, i32) {
    %c0_i32 = arith.constant 0 : i32
    %c0_i32_0 = arith.constant 0 : i32
    %c0_i32_1 = arith.constant 0 : i32
    return %c0_i32, %c0_i32_0 : i32, i32
  }
  func.func @transform_5(%arg0: i32) -> (i32, i32) {
    %c0_i32 = arith.constant 0 : i32
    %c0_i32_0 = arith.constant 0 : i32
    %c0_i32_1 = arith.constant 0 : i32
    return %c0_i32, %c0_i32_0 : i32, i32
  }
  func.func @transform_6(%arg0: i32) -> (i32, i32) {
    %c0_i32 = arith.constant 0 : i32
    %c0_i32_0 = arith.constant 0 : i32
    %c0_i32_1 = arith.constant 0 : i32
    return %c0_i32, %c0_i32_0 : i32, i32
  }
  func.func @transform_7(%arg0: i32) -> (i32, i32) {
    %c0_i32 = arith.constant 0 : i32
    %c0_i32_0 = arith.constant 0 : i32
    %c0_i32_1 = arith.constant 0 : i32
    return %c0_i32, %c0_i32_0 : i32, i32
  }
  func.func @transform_8(%arg0: i32) -> (i32, i32) {
    %c0_i32 = arith.constant 0 : i32
    %c0_i32_0 = arith.constant 0 : i32
    %c0_i32_1 = arith.constant 0 : i32
    return %c0_i32, %c0_i32_0 : i32, i32
  }
  func.func @transform_9(%arg0: i32) -> (i32, i32) {
    %c0_i32 = arith.constant 0 : i32
    %c0_i32_0 = arith.constant 0 : i32
    %c0_i32_1 = arith.constant 0 : i32
    return %c0_i32, %c0_i32_0 : i32, i32
  }
  func.func @transform_10(%arg0: i32) -> (i32, i32) {
    %c0_i32 = arith.constant 0 : i32
    %c0_i32_0 = arith.constant 0 : i32
    return %arg0, %c0_i32 : i32, i32
  }
}

</mosaic_0001>

<llo_original>
// kernel: tpu_custom_call.1
$region0: #{tpu_custom_call.1}
  #allocation0 [shape = 'u32[]', space=smem, size = 0x4, offset = 0x4, fixed_abs, tag = 'smem constant byte address 0x4 - core index']
  #allocation1 [shape = 'u32[144,128]{1,0:T(1,128)}', space=vmem, size = 0x12000, scoped, tag = 'internal scratch']
  %s0 = inlined_call_operand.vmem [shape: bf16[32,2880], index: 0, kind: input, shape index: {}]
  %s1 = inlined_call_operand.vmem [shape: bf16[2880,128], index: 1, kind: input, shape index: {}]
  %s2 = inlined_call_operand.vmem [shape: f32[128,128], index: 2, kind: input, shape index: {}]
  %s3 = inlined_call_operand.vmem [shape: f32[128,128], index: 3, kind: input, shape index: {}]
  %s4 = inlined_call_operand.vmem [shape: f32[128,128], index: 4, kind: input, shape index: {}]
  %s5 = inlined_call_operand.vmem [shape: f32[128,128], index: 5, kind: input, shape index: {}]
  %s6 = inlined_call_operand.vmem [shape: f32[128,128], index: 6, kind: input, shape index: {}]
  %s7 = inlined_call_operand.vmem [shape: f32[128,128], index: 7, kind: input, shape index: {}]
  %s8 = inlined_call_operand.vmem [shape: bf16[128,2880], index: 8, kind: input, shape index: {}]
  %s9 = inlined_call_operand.vmem [shape: f32[8,2880], index: 9, kind: input, shape index: {}]
  %s10 = inlined_call_operand.hbm [shape: f32[32,2880], index: 10, kind: output, shape index: {}]
  %s11 = sld [smem:[#allocation0]]
  $region73: #{tpu_custom_call.1} parent=0
    _
  %s13 = ssub.s32 1, %s11
  %s14 = scalar_select 0, %s13, %s11
  $region1: #{tpu_custom_call.1} parent=0
    #allocation2 [shape = 'u8[376832]{0}', space=vmem, size = 0x5c000, scoped, tag = 'output window, operand 0']
    #allocation3 [shape = 's32[2]{0}', space=sflag, size = 0x8, scoped, tag = 'scoped memory for tpu_custom_call.1']
    %15 = vsyncpa [#allocation3], 0
    %s16 = scalar_lea.sflag [#allocation3], 1
    %17 = vsyncpa %s16, 0
    loop: start=0, step=1, limit=4
    $region2: #{tpu_custom_call.1} parent=1 // loop_pre_header
      _
    $region3: #{tpu_custom_call.1} parent=1 // loop_header
      %s19 = sphi 0, %s23
      %p20 = scmp.ge.s32.totalorder %s19, 4
      %s29 = sphi 0, %s31
      %s32 = sphi 0, %s29
      %s33 = sphi 0, %s32
      %s49 = sphi 0, %s33
      %s53 = sphi 0, %s53
      %s55 = sphi 0, %s53
      %s56 = sphi 0, %s55
      %s70 = sphi 0, %s56
      %s74 = sphi 0, %s74
      %s76 = sphi 0, %s74
      %s77 = sphi 0, %s76
      %s91 = sphi 0, %s77
      %s95 = sphi 0, %s95
      %s97 = sphi 0, %s95
      %s98 = sphi 0, %s97
      %s112 = sphi 0, %s98
      %s116 = sphi 0, %s116
      %s118 = sphi 0, %s116
      %s119 = sphi 0, %s118
      %s133 = sphi 0, %s119
      %s137 = sphi 0, %s137
      %s139 = sphi 0, %s137
      %s140 = sphi 0, %s139
      %s154 = sphi 0, %s140
      %s158 = sphi 0, %s158
      %s160 = sphi 0, %s158
      %s161 = sphi 0, %s160
      %s175 = sphi 0, %s161
      %s179 = sphi 0, %s179
      %s181 = sphi 0, %s179
      %s182 = sphi 0, %s181
      %s196 = sphi 0, %s182
      %s200 = sphi 0, %s200
      %s202 = sphi 0, %s200
      %s203 = sphi 0, %s202
      %s217 = sphi 0, %s203
      %s221 = sphi 0, %s221
      %s223 = sphi 0, %s221
      %s224 = sphi 0, %s223
      %s238 = sphi 0, %s224
      %s244 = sphi 0, %s246
      %s247 = sphi 0, %s244
      %s248 = sphi 0, %s247
      %s264 = sphi 0, %s248
    $region4: #{tpu_custom_call.1} parent=1 // loop_header_branch
      %22 = sbr.rel (%p20) target = $region8
    $region5: #{tpu_custom_call.1} parent=1 // loop_body
      %s24 = ssub.s32 %s19, 1
      %s25 = ssub.s32 %s19, 2
      %s26 = sadd.s32 %s19, 1
      %s27 = ssub.s32 %s19, %s26
      %p28 = scmp.eq.s32.totalorder %s27, 0
      %s30 = sadd.s32 %s29, 1
      %s31 = scalar_select %p28, %s29, %s30
      %p34 = pneg %p28
      %p35 = scmp.eq.s32.totalorder %s19, 1
      %p36 = por %p34, %p35
      %p37 = scmp.ne.s32.totalorder %s29, %s32
      %p38 = scmp.eq.s32.totalorder %s19, 0
      %p39 = por %p37, %p38
      %p40 = scmp.ne.s32.totalorder %s29, %s32
      %p41 = scmp.eq.s32.totalorder %s24, 1
      %p42 = por %p40, %p41
      %p43 = scmp.ne.s32.totalorder %s32, %s33
      %p44 = scmp.eq.s32.totalorder %s24, 0
      %p45 = por %p43, %p44
      %p46 = scmp.ne.s32.totalorder %s32, %s33
      %p47 = scmp.eq.s32.totalorder %s25, 1
      %p48 = por %p46, %p47
      %p50 = scmp.ne.s32.totalorder %s33, %s49
      %p51 = scmp.eq.s32.totalorder %s25, 0
      %p52 = por %p50, %p51
      %s54 = sadd.s32 %s53, 1
      %p57 = scmp.eq.s32.totalorder %s19, 1
      %p58 = scmp.ne.s32.totalorder %s53, %s55
      %p59 = scmp.eq.s32.totalorder %s19, 0
      %p60 = por %p58, %p59
      %p61 = scmp.ne.s32.totalorder %s53, %s55
      %p62 = scmp.eq.s32.totalorder %s24, 1
      %p63 = por %p61, %p62
      %p64 = scmp.ne.s32.totalorder %s55, %s56
      %p65 = scmp.eq.s32.totalorder %s24, 0
      %p66 = por %p64, %p65
      %p67 = scmp.ne.s32.totalorder %s55, %s56
      %p68 = scmp.eq.s32.totalorder %s25, 1
      %p69 = por %p67, %p68
      %p71 = scmp.ne.s32.totalorder %s56, %s70
      %p72 = scmp.eq.s32.totalorder %s25, 0
      %p73 = por %p71, %p72
      %s75 = sadd.s32 %s74, 1
      %p78 = scmp.eq.s32.totalorder %s19, 1
      %p79 = scmp.ne.s32.totalorder %s74, %s76
      %p80 = scmp.eq.s32.totalorder %s19, 0
      %p81 = por %p79, %p80
      %p82 = scmp.ne.s32.totalorder %s74, %s76
      %p83 = scmp.eq.s32.totalorder %s24, 1
      %p84 = por %p82, %p83
      %p85 = scmp.ne.s32.totalorder %s76, %s77
      %p86 = scmp.eq.s32.totalorder %s24, 0
      %p87 = por %p85, %p86
      %p88 = scmp.ne.s32.totalorder %s76, %s77
      %p89 = scmp.eq.s32.totalorder %s25, 1
      %p90 = por %p88, %p89
      %p92 = scmp.ne.s32.totalorder %s77, %s91
      %p93 = scmp.eq.s32.totalorder %s25, 0
      %p94 = por %p92, %p93
      %s96 = sadd.s32 %s95, 1
      %p99 = scmp.eq.s32.totalorder %s19, 1
      %p100 = scmp.ne.s32.totalorder %s95, %s97
      %p101 = scmp.eq.s32.totalorder %s19, 0
      %p102 = por %p100, %p101
      %p103 = scmp.ne.s32.totalorder %s95, %s97
      %p104 = scmp.eq.s32.totalorder %s24, 1
      %p105 = por %p103, %p104
      %p106 = scmp.ne.s32.totalorder %s97, %s98
      %p107 = scmp.eq.s32.totalorder %s24, 0
      %p108 = por %p106, %p107
      %p109 = scmp.ne.s32.totalorder %s97, %s98
      %p110 = scmp.eq.s32.totalorder %s25, 1
      %p111 = por %p109, %p110
      %p113 = scmp.ne.s32.totalorder %s98, %s112
      %p114 = scmp.eq.s32.totalorder %s25, 0
      %p115 = por %p113, %p114
      %s117 = sadd.s32 %s116, 1
      %p120 = scmp.eq.s32.totalorder %s19, 1
      %p121 = scmp.ne.s32.totalorder %s116, %s118
      %p122 = scmp.eq.s32.totalorder %s19, 0
      %p123 = por %p121, %p122
      %p124 = scmp.ne.s32.totalorder %s116, %s118
      %p125 = scmp.eq.s32.totalorder %s24, 1
      %p126 = por %p124, %p125
      %p127 = scmp.ne.s32.totalorder %s118, %s119
      %p128 = scmp.eq.s32.totalorder %s24, 0
      %p129 = por %p127, %p128
      %p130 = scmp.ne.s32.totalorder %s118, %s119
      %p131 = scmp.eq.s32.totalorder %s25, 1
      %p132 = por %p130, %p131
      %p134 = scmp.ne.s32.totalorder %s119, %s133
      %p135 = scmp.eq.s32.totalorder %s25, 0
      %p136 = por %p134, %p135
      %s138 = sadd.s32 %s137, 1
      %p141 = scmp.eq.s32.totalorder %s19, 1
      %p142 = scmp.ne.s32.totalorder %s137, %s139
      %p143 = scmp.eq.s32.totalorder %s19, 0
      %p144 = por %p142, %p143
      %p145 = scmp.ne.s32.totalorder %s137, %s139
      %p146 = scmp.eq.s32.totalorder %s24, 1
      %p147 = por %p145, %p146
      %p148 = scmp.ne.s32.totalorder %s139, %s140
      %p149 = scmp.eq.s32.totalorder %s24, 0
      %p150 = por %p148, %p149
      %p151 = scmp.ne.s32.totalorder %s139, %s140
      %p152 = scmp.eq.s32.totalorder %s25, 1
      %p153 = por %p151, %p152
      %p155 = scmp.ne.s32.totalorder %s140, %s154
      %p156 = scmp.eq.s32.totalorder %s25, 0
      %p157 = por %p155, %p156
      %s159 = sadd.s32 %s158, 1
      %p162 = scmp.eq.s32.totalorder %s19, 1
      %p163 = scmp.ne.s32.totalorder %s158, %s160
      %p164 = scmp.eq.s32.totalorder %s19, 0
      %p165 = por %p163, %p164
      %p166 = scmp.ne.s32.totalorder %s158, %s160
      %p167 = scmp.eq.s32.totalorder %s24, 1
      %p168 = por %p166, %p167
      %p169 = scmp.ne.s32.totalorder %s160, %s161
      %p170 = scmp.eq.s32.totalorder %s24, 0
      %p171 = por %p169, %p170
      %p172 = scmp.ne.s32.totalorder %s160, %s161
      %p173 = scmp.eq.s32.totalorder %s25, 1
      %p174 = por %p172, %p173
      %p176 = scmp.ne.s32.totalorder %s161, %s175
      %p177 = scmp.eq.s32.totalorder %s25, 0
      %p178 = por %p176, %p177
      %s180 = sadd.s32 %s179, 1
      %p183 = scmp.eq.s32.totalorder %s19, 1
      %p184 = scmp.ne.s32.totalorder %s179, %s181
      %p185 = scmp.eq.s32.totalorder %s19, 0
      %p186 = por %p184, %p185
      %p187 = scmp.ne.s32.totalorder %s179, %s181
      %p188 = scmp.eq.s32.totalorder %s24, 1
      %p189 = por %p187, %p188
      %p190 = scmp.ne.s32.totalorder %s181, %s182
      %p191 = scmp.eq.s32.totalorder %s24, 0
      %p192 = por %p190, %p191
      %p193 = scmp.ne.s32.totalorder %s181, %s182
      %p194 = scmp.eq.s32.totalorder %s25, 1
      %p195 = por %p193, %p194
      %p197 = scmp.ne.s32.totalorder %s182, %s196
      %p198 = scmp.eq.s32.totalorder %s25, 0
      %p199 = por %p197, %p198
      %s201 = sadd.s32 %s200, 1
      %p204 = scmp.eq.s32.totalorder %s19, 1
      %p205 = scmp.ne.s32.totalorder %s200, %s202
      %p206 = scmp.eq.s32.totalorder %s19, 0
      %p207 = por %p205, %p206
      %p208 = scmp.ne.s32.totalorder %s200, %s202
      %p209 = scmp.eq.s32.totalorder %s24, 1
      %p210 = por %p208, %p209
      %p211 = scmp.ne.s32.totalorder %s202, %s203
      %p212 = scmp.eq.s32.totalorder %s24, 0
      %p213 = por %p211, %p212
      %p214 = scmp.ne.s32.totalorder %s202, %s203
      %p215 = scmp.eq.s32.totalorder %s25, 1
      %p216 = por %p214, %p215
      %p218 = scmp.ne.s32.totalorder %s203, %s217
      %p219 = scmp.eq.s32.totalorder %s25, 0
      %p220 = por %p218, %p219
      %s222 = sadd.s32 %s221, 1
      %p225 = scmp.eq.s32.totalorder %s19, 1
      %p226 = scmp.ne.s32.totalorder %s221, %s223
      %p227 = scmp.eq.s32.totalorder %s19, 0
      %p228 = por %p226, %p227
      %p229 = scmp.ne.s32.totalorder %s221, %s223
      %p230 = scmp.eq.s32.totalorder %s24, 1
      %p231 = por %p229, %p230
      %p232 = scmp.ne.s32.totalorder %s223, %s224
      %p233 = scmp.eq.s32.totalorder %s24, 0
      %p234 = por %p232, %p233
      %p235 = scmp.ne.s32.totalorder %s223, %s224
      %p236 = scmp.eq.s32.totalorder %s25, 1
      %p237 = por %p235, %p236
      %p239 = scmp.ne.s32.totalorder %s224, %s238
      %p240 = scmp.eq.s32.totalorder %s25, 0
      %p241 = por %p239, %p240
      %s242 = ssub.s32 %s19, %s26
      %p243 = scmp.eq.s32.totalorder %s242, 0
      %s245 = sadd.s32 %s244, 1
      %s246 = scalar_select %p243, %s244, %s245
      %p249 = pneg %p243
      %p250 = scmp.eq.s32.totalorder %s19, 1
      %p251 = por %p249, %p250
      %p252 = scmp.ne.s32.totalorder %s244, %s247
      %p253 = scmp.eq.s32.totalorder %s19, 0
      %p254 = por %p252, %p253
      %p255 = scmp.ne.s32.totalorder %s244, %s247
      %p256 = scmp.eq.s32.totalorder %s24, 1
      %p257 = por %p255, %p256
      %p258 = scmp.ne.s32.totalorder %s247, %s248
      %p259 = scmp.eq.s32.totalorder %s24, 0
      %p260 = por %p258, %p259
      %p261 = scmp.ne.s32.totalorder %s247, %s248
      %p262 = scmp.eq.s32.totalorder %s25, 1
      %p263 = por %p261, %p262
      %p265 = scmp.ne.s32.totalorder %s248, %s264
      %p266 = scmp.eq.s32.totalorder %s25, 0
      %p267 = por %p265, %p266
      %p268 = scmp.le.s32.totalorder 1, %s19
      %p269 = scmp.lt.s32.totalorder %s19, 3
      %p270 = pnand %p268, %p269
      %p271 = pneg %p270
      // Predicated region
      $region9: #{tpu_custom_call.1} parent=5 // pred_check
        _
      $region10: #{tpu_custom_call.1} parent=5 // pred_check_branch
        %273 = sbr.rel (%p270) target = $region12
      $region11: #{tpu_custom_call.1} parent=5 // pred_region
        %s274 = ssub.s32 %s19, 1
        // Predicated region
        $region13: #{tpu_custom_call.1} parent=11 // pred_check
          %p275 = pneg %p66
        $region14: #{tpu_custom_call.1} parent=11 // pred_check_branch
          %277 = sbr.rel (%p275) target = $region16
        $region15: #{tpu_custom_call.1} parent=11 // pred_region
          _
        $region16: #{tpu_custom_call.1} parent=11 // pred_fallthru
          _
        // Predicated region
        $region17: #{tpu_custom_call.1} parent=11 // pred_check
          %p278 = pneg %p87
        $region18: #{tpu_custom_call.1} parent=11 // pred_check_branch
          %280 = sbr.rel (%p278) target = $region20
        $region19: #{tpu_custom_call.1} parent=11 // pred_region
          _
        $region20: #{tpu_custom_call.1} parent=11 // pred_fallthru
          _
        // Predicated region
        $region21: #{tpu_custom_call.1} parent=11 // pred_check
          %p281 = pneg %p108
        $region22: #{tpu_custom_call.1} parent=11 // pred_check_branch
          %283 = sbr.rel (%p281) target = $region24
        $region23: #{tpu_custom_call.1} parent=11 // pred_region
          _
        $region24: #{tpu_custom_call.1} parent=11 // pred_fallthru
          _
        // Predicated region
        $region25: #{tpu_custom_call.1} parent=11 // pred_check
          %p284 = pneg %p129
        $region26: #{tpu_custom_call.1} parent=11 // pred_check_branch
          %286 = sbr.rel (%p284) target = $region28
        $region27: #{tpu_custom_call.1} parent=11 // pred_region
          _
        $region28: #{tpu_custom_call.1} parent=11 // pred_fallthru
          _
        // Predicated region
        $region29: #{tpu_custom_call.1} parent=11 // pred_check
          %p287 = pneg %p150
        $region30: #{tpu_custom_call.1} parent=11 // pred_check_branch
          %289 = sbr.rel (%p287) target = $region32
        $region31: #{tpu_custom_call.1} parent=11 // pred_region
          _
        $region32: #{tpu_custom_call.1} parent=11 // pred_fallthru
          _
        // Predicated region
        $region33: #{tpu_custom_call.1} parent=11 // pred_check
          %p290 = pneg %p171
        $region34: #{tpu_custom_call.1} parent=11 // pred_check_branch
          %292 = sbr.rel (%p290) target = $region36
        $region35: #{tpu_custom_call.1} parent=11 // pred_region
          _
        $region36: #{tpu_custom_call.1} parent=11 // pred_fallthru
          _
        // Predicated region
        $region37: #{tpu_custom_call.1} parent=11 // pred_check
          %p293 = pneg %p192
        $region38: #{tpu_custom_call.1} parent=11 // pred_check_branch
          %295 = sbr.rel (%p293) target = $region40
        $region39: #{tpu_custom_call.1} parent=11 // pred_region
          _
        $region40: #{tpu_custom_call.1} parent=11 // pred_fallthru
          _
        // Predicated region
        $region41: #{tpu_custom_call.1} parent=11 // pred_check
          %p296 = pneg %p213
        $region42: #{tpu_custom_call.1} parent=11 // pred_check_branch
          %298 = sbr.rel (%p296) target = $region44
        $region43: #{tpu_custom_call.1} parent=11 // pred_region
          _
        $region44: #{tpu_custom_call.1} parent=11 // pred_fallthru
          _
        // Predicated region
        $region45: #{tpu_custom_call.1} parent=11 // pred_check
          %p299 = pneg %p234
        $region46: #{tpu_custom_call.1} parent=11 // pred_check_branch
          %301 = sbr.rel (%p299) target = $region48
        $region47: #{tpu_custom_call.1} parent=11 // pred_region
          _
        $region48: #{tpu_custom_call.1} parent=11 // pred_fallthru
          _
      $region12: #{tpu_custom_call.1} parent=5 // pred_fallthru
        _
      %p302 = scmp.lt.s32.totalorder %s19, 2
      // Predicated region
      $region49: #{tpu_custom_call.1} parent=5 // pred_check
        %p303 = pneg %p302
      $region50: #{tpu_custom_call.1} parent=5 // pred_check_branch
        %305 = sbr.rel (%p303) target = $region52
      $region51: #{tpu_custom_call.1} parent=5 // pred_region
        // Predicated region
        $region53: #{tpu_custom_call.1} parent=51 // pred_check
          %p306 = pneg %p39
        $region54: #{tpu_custom_call.1} parent=51 // pred_check_branch
          %308 = sbr.rel (%p306) target = $region56
        $region55: #{tpu_custom_call.1} parent=51 // pred_region
          %s309 = smul.u32 2, %s19
          %p310 = scmp.lt.s32.totalorder %s309, 3
          %s311 = scalar_select %p310, %s309, 3
          %s312 = smul.addr %s311, 23
          %s313 = smul.addr %s312, 4
          %s314 = scalar_lea.vmem %s0, %s313
          %s315 = smul.u32 2, %s19
        $region56: #{tpu_custom_call.1} parent=51 // pred_fallthru
          _
      $region52: #{tpu_custom_call.1} parent=5 // pred_fallthru
        _
      %p316 = scmp.le.s32.totalorder 1, %s19
      %p317 = scmp.lt.s32.totalorder %s19, 3
      %p318 = pnand %p316, %p317
      %p319 = pneg %p318
      // Predicated region
      $region57: #{tpu_custom_call.1} parent=5 // pred_check
        _
      $region58: #{tpu_custom_call.1} parent=5 // pred_check_branch
        %321 = sbr.rel (%p318) target = $region60
      $region59: #{tpu_custom_call.1} parent=5 // pred_region
        %s322 = ssub.s32 %s19, 1
        %s323 = smul.u32 2, %s24
        %p324 = scmp.lt.s32.totalorder %s323, 3
        %s325 = scalar_select %p324, %s323, 3
        %s326 = smul.addr %s325, 23
        %s327 = smul.addr %s326, 4
        %s328 = scalar_lea.vmem %s0, %s327
        %p329 = pneg %p45
        %p330 = pneg %p42
        %p331 = pneg %p66
        %p332 = pneg %p63
        %p333 = pneg %p87
        %p334 = pneg %p84
        %p335 = pneg %p108
        %p336 = pneg %p105
        %p337 = pneg %p129
        %p338 = pneg %p126
        %p339 = pneg %p150
        %p340 = pneg %p147
        %p341 = pneg %p171
        %p342 = pneg %p168
        %p343 = pneg %p192
        %p344 = pneg %p189
        %p345 = pneg %p213
        %p346 = pneg %p210
        %p347 = pneg %p234
        %p348 = pneg %p231
        %p349 = pneg %p260
        %p350 = pneg %p257
        %s351 = sand.u32 %s247, 1
        %s352 = scalar_lea.sflag [#allocation3], %s351
        %s353 = sand.u32 %s247, 1
        %s354 = smul.addr %s353, 368
        %s355 = scalar_lea.vmem [#allocation2], %s354
        %s356 = smul.u32 2, %s24
        %p357 = scmp.lt.s32.totalorder %s356, 3
        %s358 = scalar_select %p357, %s356, 3
        %s359 = smul.addr %s358, 23
        %s360 = smul.addr %s359, 4
        %s361 = scalar_lea.vmem %s0, %s360
        %s362 = smul.u32 2, %s24
        %s363 = smul.u32 2, %s24
        %v365 = vld [vmem:[%s361] sm:$0xff]
        %v366 = vld [vmem:[%s361 + $0x8] sm:$0xff]
        %v367 = vld [vmem:[%s361 + $0x10] sm:$0xff]
        %v368 = vld [vmem:[%s361 + $0x18] sm:$0xff]
        %v369 = vld [vmem:[%s361 + $0x20] sm:$0xff]
        %v370 = vld [vmem:[%s361 + $0x28] sm:$0xff]
        %v371 = vld [vmem:[%s361 + $0x30] sm:$0xff]
        %v372 = vld [vmem:[%s361 + $0x38] sm:$0xff]
        %v373 = vld [vmem:[%s361 + $0x40] sm:$0xff]
        %v374 = vld [vmem:[%s361 + $0x48] sm:$0xff]
        %v375 = vld [vmem:[%s361 + $0x50] sm:$0xff]
        %v376 = vld [vmem:[%s361 + $0x58] sm:$0xf]
        %v377 = vld [vmem:[%s361 + $0x5c] sm:$0xff]
        %v378 = vld [vmem:[%s361 + $0x64] sm:$0xff]
        %v379 = vld [vmem:[%s361 + $0x6c] sm:$0xff]
        %v380 = vld [vmem:[%s361 + $0x74] sm:$0xff]
        %v381 = vld [vmem:[%s361 + $0x7c] sm:$0xff]
        %v382 = vld [vmem:[%s361 + $0x84] sm:$0xff]
        %v383 = vld [vmem:[%s361 + $0x8c] sm:$0xff]
        %v384 = vld [vmem:[%s361 + $0x94] sm:$0xff]
        %v385 = vld [vmem:[%s361 + $0x9c] sm:$0xff]
        %v386 = vld [vmem:[%s361 + $0xa4] sm:$0xff]
        %v387 = vld [vmem:[%s361 + $0xac] sm:$0xff]
        %v388 = vld [vmem:[%s361 + $0xb4] sm:$0xf]
        %v389 = vld [vmem:[%s1] sm:$0xf]
        %v390 = vld [vmem:[%s1 + $0x4] sm:$0xf]
        %v391 = vld [vmem:[%s1 + $0x8] sm:$0xf]
        %v392 = vld [vmem:[%s1 + $0xc] sm:$0xf]
        %v393 = vld [vmem:[%s1 + $0x10] sm:$0xf]
        %v394 = vld [vmem:[%s1 + $0x14] sm:$0xf]
        %v395 = vld [vmem:[%s1 + $0x18] sm:$0xf]
        %v396 = vld [vmem:[%s1 + $0x1c] sm:$0xf]
        %v397 = vld [vmem:[%s1 + $0x20] sm:$0xf]
        %v398 = vld [vmem:[%s1 + $0x24] sm:$0xf]
        %v399 = vld [vmem:[%s1 + $0x28] sm:$0xf]
        %v400 = vld [vmem:[%s1 + $0x2c] sm:$0xf]
        %v401 = vld [vmem:[%s1 + $0x30] sm:$0xf]
        %v402 = vld [vmem:[%s1 + $0x34] sm:$0xf]
        %v403 = vld [vmem:[%s1 + $0x38] sm:$0xf]
        %v404 = vld [vmem:[%s1 + $0x3c] sm:$0xf]
        %v405 = vld [vmem:[%s1 + $0x40] sm:$0xf]
        %v406 = vld [vmem:[%s1 + $0x44] sm:$0xf]
        %v407 = vld [vmem:[%s1 + $0x48] sm:$0xf]
        %v408 = vld [vmem:[%s1 + $0x4c] sm:$0xf]
        %v409 = vld [vmem:[%s1 + $0x50] sm:$0xf]
        %v410 = vld [vmem:[%s1 + $0x54] sm:$0xf]
        %v411 = vld [vmem:[%s1 + $0x58] sm:$0xf]
        %v412 = vld [vmem:[%s1 + $0x5c] sm:$0xf]
        %v413 = vld [vmem:[%s1 + $0x60] sm:$0xf]
        %v414 = vld [vmem:[%s1 + $0x64] sm:$0xf]
        %v415 = vld [vmem:[%s1 + $0x68] sm:$0xf]
        %v416 = vld [vmem:[%s1 + $0x6c] sm:$0xf]
        %v417 = vld [vmem:[%s1 + $0x70] sm:$0xf]
        %v418 = vld [vmem:[%s1 + $0x74] sm:$0xf]
        %v419 = vld [vmem:[%s1 + $0x78] sm:$0xf]
        %v420 = vld [vmem:[%s1 + $0x7c] sm:$0xf]
        %v421 = vld [vmem:[%s1 + $0x80] sm:$0xf]
        %v422 = vld [vmem:[%s1 + $0x84] sm:$0xf]
        %v423 = vld [vmem:[%s1 + $0x88] sm:$0xf]
        %v424 = vld [vmem:[%s1 + $0x8c] sm:$0xf]
        %v425 = vld [vmem:[%s1 + $0x90] sm:$0xf]
        %v426 = vld [vmem:[%s1 + $0x94] sm:$0xf]
        %v427 = vld [vmem:[%s1 + $0x98] sm:$0xf]
        %v428 = vld [vmem:[%s1 + $0x9c] sm:$0xf]
        %v429 = vld [vmem:[%s1 + $0xa0] sm:$0xf]
        %v430 = vld [vmem:[%s1 + $0xa4] sm:$0xf]
        %v431 = vld [vmem:[%s1 + $0xa8] sm:$0xf]
        %v432 = vld [vmem:[%s1 + $0xac] sm:$0xf]
        %v433 = vld [vmem:[%s1 + $0xb0] sm:$0xf]
        %v434 = vld [vmem:[%s1 + $0xb4] sm:$0xf]
        %v435 = vld [vmem:[%s1 + $0xb8] sm:$0xf]
        %v436 = vld [vmem:[%s1 + $0xbc] sm:$0xf]
        %v437 = vld [vmem:[%s1 + $0xc0] sm:$0xf]
        %v438 = vld [vmem:[%s1 + $0xc4] sm:$0xf]
        %v439 = vld [vmem:[%s1 + $0xc8] sm:$0xf]
        %v440 = vld [vmem:[%s1 + $0xcc] sm:$0xf]
        %v441 = vld [vmem:[%s1 + $0xd0] sm:$0xf]
        %v442 = vld [vmem:[%s1 + $0xd4] sm:$0xf]
        %v443 = vld [vmem:[%s1 + $0xd8] sm:$0xf]
        %v444 = vld [vmem:[%s1 + $0xdc] sm:$0xf]
        %v445 = vld [vmem:[%s1 + $0xe0] sm:$0xf]
        %v446 = vld [vmem:[%s1 + $0xe4] sm:$0xf]
        %v447 = vld [vmem:[%s1 + $0xe8] sm:$0xf]
        %v448 = vld [vmem:[%s1 + $0xec] sm:$0xf]
        %v449 = vld [vmem:[%s1 + $0xf0] sm:$0xf]
        %v450 = vld [vmem:[%s1 + $0xf4] sm:$0xf]
        %v451 = vld [vmem:[%s1 + $0xf8] sm:$0xf]
        %v452 = vld [vmem:[%s1 + $0xfc] sm:$0xf]
        %v453 = vld [vmem:[%s1 + $0x100] sm:$0xf]
        %v454 = vld [vmem:[%s1 + $0x104] sm:$0xf]
        %v455 = vld [vmem:[%s1 + $0x108] sm:$0xf]
        %v456 = vld [vmem:[%s1 + $0x10c] sm:$0xf]
        %v457 = vld [vmem:[%s1 + $0x110] sm:$0xf]
        %v458 = vld [vmem:[%s1 + $0x114] sm:$0xf]
        %v459 = vld [vmem:[%s1 + $0x118] sm:$0xf]
        %v460 = vld [vmem:[%s1 + $0x11c] sm:$0xf]
        %v461 = vld [vmem:[%s1 + $0x120] sm:$0xf]
        %v462 = vld [vmem:[%s1 + $0x124] sm:$0xf]
        %v463 = vld [vmem:[%s1 + $0x128] sm:$0xf]
        %v464 = vld [vmem:[%s1 + $0x12c] sm:$0xf]
        %v465 = vld [vmem:[%s1 + $0x130] sm:$0xf]
        %v466 = vld [vmem:[%s1 + $0x134] sm:$0xf]
        %v467 = vld [vmem:[%s1 + $0x138] sm:$0xf]
        %v468 = vld [vmem:[%s1 + $0x13c] sm:$0xf]
        %v469 = vld [vmem:[%s1 + $0x140] sm:$0xf]
        %v470 = vld [vmem:[%s1 + $0x144] sm:$0xf]
        %v471 = vld [vmem:[%s1 + $0x148] sm:$0xf]
        %v472 = vld [vmem:[%s1 + $0x14c] sm:$0xf]
        %v473 = vld [vmem:[%s1 + $0x150] sm:$0xf]
        %v474 = vld [vmem:[%s1 + $0x154] sm:$0xf]
        %v475 = vld [vmem:[%s1 + $0x158] sm:$0xf]
        %v476 = vld [vmem:[%s1 + $0x15c] sm:$0xf]
        %v477 = vld [vmem:[%s1 + $0x160] sm:$0xf]
        %v478 = vld [vmem:[%s1 + $0x164] sm:$0xf]
        %v479 = vld [vmem:[%s1 + $0x168] sm:$0xf]
        %v480 = vld [vmem:[%s1 + $0x16c] sm:$0xf]
        %v481 = vld [vmem:[%s1 + $0x170] sm:$0xf]
        %v482 = vld [vmem:[%s1 + $0x174] sm:$0xf]
        %v483 = vld [vmem:[%s1 + $0x178] sm:$0xf]
        %v484 = vld [vmem:[%s1 + $0x17c] sm:$0xf]
        %v485 = vld [vmem:[%s1 + $0x180] sm:$0xf]
        %v486 = vld [vmem:[%s1 + $0x184] sm:$0xf]
        %v487 = vld [vmem:[%s1 + $0x188] sm:$0xf]
        %v488 = vld [vmem:[%s1 + $0x18c] sm:$0xf]
        %v489 = vld [vmem:[%s1 + $0x190] sm:$0xf]
        %v490 = vld [vmem:[%s1 + $0x194] sm:$0xf]
        %v491 = vld [vmem:[%s1 + $0x198] sm:$0xf]
        %v492 = vld [vmem:[%s1 + $0x19c] sm:$0xf]
        %v493 = vld [vmem:[%s1 + $0x1a0] sm:$0xf]
        %v494 = vld [vmem:[%s1 + $0x1a4] sm:$0xf]
        %v495 = vld [vmem:[%s1 + $0x1a8] sm:$0xf]
        %v496 = vld [vmem:[%s1 + $0x1ac] sm:$0xf]
        %v497 = vld [vmem:[%s1 + $0x1b0] sm:$0xf]
        %v498 = vld [vmem:[%s1 + $0x1b4] sm:$0xf]
        %v499 = vld [vmem:[%s1 + $0x1b8] sm:$0xf]
        %v500 = vld [vmem:[%s1 + $0x1bc] sm:$0xf]
        %v501 = vld [vmem:[%s1 + $0x1c0] sm:$0xf]
        %v502 = vld [vmem:[%s1 + $0x1c4] sm:$0xf]
        %v503 = vld [vmem:[%s1 + $0x1c8] sm:$0xf]
        %v504 = vld [vmem:[%s1 + $0x1cc] sm:$0xf]
        %v505 = vld [vmem:[%s1 + $0x1d0] sm:$0xf]
        %v506 = vld [vmem:[%s1 + $0x1d4] sm:$0xf]
        %v507 = vld [vmem:[%s1 + $0x1d8] sm:$0xf]
        %v508 = vld [vmem:[%s1 + $0x1dc] sm:$0xf]
        %v509 = vld [vmem:[%s1 + $0x1e0] sm:$0xf]
        %v510 = vld [vmem:[%s1 + $0x1e4] sm:$0xf]
        %v511 = vld [vmem:[%s1 + $0x1e8] sm:$0xf]
        %v512 = vld [vmem:[%s1 + $0x1ec] sm:$0xf]
        %v513 = vld [vmem:[%s1 + $0x1f0] sm:$0xf]
        %v514 = vld [vmem:[%s1 + $0x1f4] sm:$0xf]
        %v515 = vld [vmem:[%s1 + $0x1f8] sm:$0xf]
        %v516 = vld [vmem:[%s1 + $0x1fc] sm:$0xf]
        %v517 = vld [vmem:[%s1 + $0x200] sm:$0xf]
        %v518 = vld [vmem:[%s1 + $0x204] sm:$0xf]
        %v519 = vld [vmem:[%s1 + $0x208] sm:$0xf]
        %v520 = vld [vmem:[%s1 + $0x20c] sm:$0xf]
        %v521 = vld [vmem:[%s1 + $0x210] sm:$0xf]
        %v522 = vld [vmem:[%s1 + $0x214] sm:$0xf]
        %v523 = vld [vmem:[%s1 + $0x218] sm:$0xf]
        %v524 = vld [vmem:[%s1 + $0x21c] sm:$0xf]
        %v525 = vld [vmem:[%s1 + $0x220] sm:$0xf]
        %v526 = vld [vmem:[%s1 + $0x224] sm:$0xf]
        %v527 = vld [vmem:[%s1 + $0x228] sm:$0xf]
        %v528 = vld [vmem:[%s1 + $0x22c] sm:$0xf]
        %v529 = vld [vmem:[%s1 + $0x230] sm:$0xf]
        %v530 = vld [vmem:[%s1 + $0x234] sm:$0xf]
        %v531 = vld [vmem:[%s1 + $0x238] sm:$0xf]
        %v532 = vld [vmem:[%s1 + $0x23c] sm:$0xf]
        %v533 = vld [vmem:[%s1 + $0x240] sm:$0xf]
        %v534 = vld [vmem:[%s1 + $0x244] sm:$0xf]
        %v535 = vld [vmem:[%s1 + $0x248] sm:$0xf]
        %v536 = vld [vmem:[%s1 + $0x24c] sm:$0xf]
        %v537 = vld [vmem:[%s1 + $0x250] sm:$0xf]
        %v538 = vld [vmem:[%s1 + $0x254] sm:$0xf]
        %v539 = vld [vmem:[%s1 + $0x258] sm:$0xf]
        %v540 = vld [vmem:[%s1 + $0x25c] sm:$0xf]
        %v541 = vld [vmem:[%s1 + $0x260] sm:$0xf]
        %v542 = vld [vmem:[%s1 + $0x264] sm:$0xf]
        %v543 = vld [vmem:[%s1 + $0x268] sm:$0xf]
        %v544 = vld [vmem:[%s1 + $0x26c] sm:$0xf]
        %v545 = vld [vmem:[%s1 + $0x270] sm:$0xf]
        %v546 = vld [vmem:[%s1 + $0x274] sm:$0xf]
        %v547 = vld [vmem:[%s1 + $0x278] sm:$0xf]
        %v548 = vld [vmem:[%s1 + $0x27c] sm:$0xf]
        %v549 = vld [vmem:[%s1 + $0x280] sm:$0xf]
        %v550 = vld [vmem:[%s1 + $0x284] sm:$0xf]
        %v551 = vld [vmem:[%s1 + $0x288] sm:$0xf]
        %v552 = vld [vmem:[%s1 + $0x28c] sm:$0xf]
        %v553 = vld [vmem:[%s1 + $0x290] sm:$0xf]
        %v554 = vld [vmem:[%s1 + $0x294] sm:$0xf]
        %v555 = vld [vmem:[%s1 + $0x298] sm:$0xf]
        %v556 = vld [vmem:[%s1 + $0x29c] sm:$0xf]
        %v557 = vld [vmem:[%s1 + $0x2a0] sm:$0xf]
        %v558 = vld [vmem:[%s1 + $0x2a4] sm:$0xf]
        %v559 = vld [vmem:[%s1 + $0x2a8] sm:$0xf]
        %v560 = vld [vmem:[%s1 + $0x2ac] sm:$0xf]
        %v561 = vld [vmem:[%s1 + $0x2b0] sm:$0xf]
        %v562 = vld [vmem:[%s1 + $0x2b4] sm:$0xf]
        %v563 = vld [vmem:[%s1 + $0x2b8] sm:$0xf]
        %v564 = vld [vmem:[%s1 + $0x2bc] sm:$0xf]
        %v565 = vld [vmem:[%s1 + $0x2c0] sm:$0xf]
        %v566 = vld [vmem:[%s1 + $0x2c4] sm:$0xf]
        %v567 = vld [vmem:[%s1 + $0x2c8] sm:$0xf]
        %v568 = vld [vmem:[%s1 + $0x2cc] sm:$0xf]
        %v569 = vld [vmem:[%s1 + $0x2d0] sm:$0xf]
        %v570 = vld [vmem:[%s1 + $0x2d4] sm:$0xf]
        %v571 = vld [vmem:[%s1 + $0x2d8] sm:$0xf]
        %v572 = vld [vmem:[%s1 + $0x2dc] sm:$0xf]
        %v573 = vld [vmem:[%s1 + $0x2e0] sm:$0xf]
        %v574 = vld [vmem:[%s1 + $0x2e4] sm:$0xf]
        %v575 = vld [vmem:[%s1 + $0x2e8] sm:$0xf]
        %v576 = vld [vmem:[%s1 + $0x2ec] sm:$0xf]
        %v577 = vld [vmem:[%s1 + $0x2f0] sm:$0xf]
        %v578 = vld [vmem:[%s1 + $0x2f4] sm:$0xf]
        %v579 = vld [vmem:[%s1 + $0x2f8] sm:$0xf]
        %v580 = vld [vmem:[%s1 + $0x2fc] sm:$0xf]
        %v581 = vld [vmem:[%s1 + $0x300] sm:$0xf]
        %v582 = vld [vmem:[%s1 + $0x304] sm:$0xf]
        %v583 = vld [vmem:[%s1 + $0x308] sm:$0xf]
        %v584 = vld [vmem:[%s1 + $0x30c] sm:$0xf]
        %v585 = vld [vmem:[%s1 + $0x310] sm:$0xf]
        %v586 = vld [vmem:[%s1 + $0x314] sm:$0xf]
        %v587 = vld [vmem:[%s1 + $0x318] sm:$0xf]
        %v588 = vld [vmem:[%s1 + $0x31c] sm:$0xf]
        %v589 = vld [vmem:[%s1 + $0x320] sm:$0xf]
        %v590 = vld [vmem:[%s1 + $0x324] sm:$0xf]
        %v591 = vld [vmem:[%s1 + $0x328] sm:$0xf]
        %v592 = vld [vmem:[%s1 + $0x32c] sm:$0xf]
        %v593 = vld [vmem:[%s1 + $0x330] sm:$0xf]
        %v594 = vld [vmem:[%s1 + $0x334] sm:$0xf]
        %v595 = vld [vmem:[%s1 + $0x338] sm:$0xf]
        %v596 = vld [vmem:[%s1 + $0x33c] sm:$0xf]
        %v597 = vld [vmem:[%s1 + $0x340] sm:$0xf]
        %v598 = vld [vmem:[%s1 + $0x344] sm:$0xf]
        %v599 = vld [vmem:[%s1 + $0x348] sm:$0xf]
        %v600 = vld [vmem:[%s1 + $0x34c] sm:$0xf]
        %v601 = vld [vmem:[%s1 + $0x350] sm:$0xf]
        %v602 = vld [vmem:[%s1 + $0x354] sm:$0xf]
        %v603 = vld [vmem:[%s1 + $0x358] sm:$0xf]
        %v604 = vld [vmem:[%s1 + $0x35c] sm:$0xf]
        %v605 = vld [vmem:[%s1 + $0x360] sm:$0xf]
        %v606 = vld [vmem:[%s1 + $0x364] sm:$0xf]
        %v607 = vld [vmem:[%s1 + $0x368] sm:$0xf]
        %v608 = vld [vmem:[%s1 + $0x36c] sm:$0xf]
        %v609 = vld [vmem:[%s1 + $0x370] sm:$0xf]
        %v610 = vld [vmem:[%s1 + $0x374] sm:$0xf]
        %v611 = vld [vmem:[%s1 + $0x378] sm:$0xf]
        %v612 = vld [vmem:[%s1 + $0x37c] sm:$0xf]
        %v613 = vld [vmem:[%s1 + $0x380] sm:$0xf]
        %v614 = vld [vmem:[%s1 + $0x384] sm:$0xf]
        %v615 = vld [vmem:[%s1 + $0x388] sm:$0xf]
        %v616 = vld [vmem:[%s1 + $0x38c] sm:$0xf]
        %v617 = vld [vmem:[%s1 + $0x390] sm:$0xf]
        %v618 = vld [vmem:[%s1 + $0x394] sm:$0xf]
        %v619 = vld [vmem:[%s1 + $0x398] sm:$0xf]
        %v620 = vld [vmem:[%s1 + $0x39c] sm:$0xf]
        %v621 = vld [vmem:[%s1 + $0x3a0] sm:$0xf]
        %v622 = vld [vmem:[%s1 + $0x3a4] sm:$0xf]
        %v623 = vld [vmem:[%s1 + $0x3a8] sm:$0xf]
        %v624 = vld [vmem:[%s1 + $0x3ac] sm:$0xf]
        %v625 = vld [vmem:[%s1 + $0x3b0] sm:$0xf]
        %v626 = vld [vmem:[%s1 + $0x3b4] sm:$0xf]
        %v627 = vld [vmem:[%s1 + $0x3b8] sm:$0xf]
        %v628 = vld [vmem:[%s1 + $0x3bc] sm:$0xf]
        %v629 = vld [vmem:[%s1 + $0x3c0] sm:$0xf]
        %v630 = vld [vmem:[%s1 + $0x3c4] sm:$0xf]
        %v631 = vld [vmem:[%s1 + $0x3c8] sm:$0xf]
        %v632 = vld [vmem:[%s1 + $0x3cc] sm:$0xf]
        %v633 = vld [vmem:[%s1 + $0x3d0] sm:$0xf]
        %v634 = vld [vmem:[%s1 + $0x3d4] sm:$0xf]
        %v635 = vld [vmem:[%s1 + $0x3d8] sm:$0xf]
        %v636 = vld [vmem:[%s1 + $0x3dc] sm:$0xf]
        %v637 = vld [vmem:[%s1 + $0x3e0] sm:$0xf]
        %v638 = vld [vmem:[%s1 + $0x3e4] sm:$0xf]
        %v639 = vld [vmem:[%s1 + $0x3e8] sm:$0xf]
        %v640 = vld [vmem:[%s1 + $0x3ec] sm:$0xf]
        %v641 = vld [vmem:[%s1 + $0x3f0] sm:$0xf]
        %v642 = vld [vmem:[%s1 + $0x3f4] sm:$0xf]
        %v643 = vld [vmem:[%s1 + $0x3f8] sm:$0xf]
        %v644 = vld [vmem:[%s1 + $0x3fc] sm:$0xf]
        %v645 = vld [vmem:[%s1 + $0x400] sm:$0xf]
        %v646 = vld [vmem:[%s1 + $0x404] sm:$0xf]
        %v647 = vld [vmem:[%s1 + $0x408] sm:$0xf]
        %v648 = vld [vmem:[%s1 + $0x40c] sm:$0xf]
        %v649 = vld [vmem:[%s1 + $0x410] sm:$0xf]
        %v650 = vld [vmem:[%s1 + $0x414] sm:$0xf]
        %v651 = vld [vmem:[%s1 + $0x418] sm:$0xf]
        %v652 = vld [vmem:[%s1 + $0x41c] sm:$0xf]
        %v653 = vld [vmem:[%s1 + $0x420] sm:$0xf]
        %v654 = vld [vmem:[%s1 + $0x424] sm:$0xf]
        %v655 = vld [vmem:[%s1 + $0x428] sm:$0xf]
        %v656 = vld [vmem:[%s1 + $0x42c] sm:$0xf]
        %v657 = vld [vmem:[%s1 + $0x430] sm:$0xf]
        %v658 = vld [vmem:[%s1 + $0x434] sm:$0xf]
        %v659 = vld [vmem:[%s1 + $0x438] sm:$0xf]
        %v660 = vld [vmem:[%s1 + $0x43c] sm:$0xf]
        %v661 = vld [vmem:[%s1 + $0x440] sm:$0xf]
        %v662 = vld [vmem:[%s1 + $0x444] sm:$0xf]
        %v663 = vld [vmem:[%s1 + $0x448] sm:$0xf]
        %v664 = vld [vmem:[%s1 + $0x44c] sm:$0xf]
        %v665 = vld [vmem:[%s1 + $0x450] sm:$0xf]
        %v666 = vld [vmem:[%s1 + $0x454] sm:$0xf]
        %v667 = vld [vmem:[%s1 + $0x458] sm:$0xf]
        %v668 = vld [vmem:[%s1 + $0x45c] sm:$0xf]
        %v669 = vld [vmem:[%s1 + $0x460] sm:$0xf]
        %v670 = vld [vmem:[%s1 + $0x464] sm:$0xf]
        %v671 = vld [vmem:[%s1 + $0x468] sm:$0xf]
        %v672 = vld [vmem:[%s1 + $0x46c] sm:$0xf]
        %v673 = vld [vmem:[%s1 + $0x470] sm:$0xf]
        %v674 = vld [vmem:[%s1 + $0x474] sm:$0xf]
        %v675 = vld [vmem:[%s1 + $0x478] sm:$0xf]
        %v676 = vld [vmem:[%s1 + $0x47c] sm:$0xf]
        %v677 = vld [vmem:[%s1 + $0x480] sm:$0xf]
        %v678 = vld [vmem:[%s1 + $0x484] sm:$0xf]
        %v679 = vld [vmem:[%s1 + $0x488] sm:$0xf]
        %v680 = vld [vmem:[%s1 + $0x48c] sm:$0xf]
        %v681 = vld [vmem:[%s1 + $0x490] sm:$0xf]
        %v682 = vld [vmem:[%s1 + $0x494] sm:$0xf]
        %v683 = vld [vmem:[%s1 + $0x498] sm:$0xf]
        %v684 = vld [vmem:[%s1 + $0x49c] sm:$0xf]
        %v685 = vld [vmem:[%s1 + $0x4a0] sm:$0xf]
        %v686 = vld [vmem:[%s1 + $0x4a4] sm:$0xf]
        %v687 = vld [vmem:[%s1 + $0x4a8] sm:$0xf]
        %v688 = vld [vmem:[%s1 + $0x4ac] sm:$0xf]
        %v689 = vld [vmem:[%s1 + $0x4b0] sm:$0xf]
        %v690 = vld [vmem:[%s1 + $0x4b4] sm:$0xf]
        %v691 = vld [vmem:[%s1 + $0x4b8] sm:$0xf]
        %v692 = vld [vmem:[%s1 + $0x4bc] sm:$0xf]
        %v693 = vld [vmem:[%s1 + $0x4c0] sm:$0xf]
        %v694 = vld [vmem:[%s1 + $0x4c4] sm:$0xf]
        %v695 = vld [vmem:[%s1 + $0x4c8] sm:$0xf]
        %v696 = vld [vmem:[%s1 + $0x4cc] sm:$0xf]
        %v697 = vld [vmem:[%s1 + $0x4d0] sm:$0xf]
        %v698 = vld [vmem:[%s1 + $0x4d4] sm:$0xf]
        %v699 = vld [vmem:[%s1 + $0x4d8] sm:$0xf]
        %v700 = vld [vmem:[%s1 + $0x4dc] sm:$0xf]
        %v701 = vld [vmem:[%s1 + $0x4e0] sm:$0xf]
        %v702 = vld [vmem:[%s1 + $0x4e4] sm:$0xf]
        %v703 = vld [vmem:[%s1 + $0x4e8] sm:$0xf]
        %v704 = vld [vmem:[%s1 + $0x4ec] sm:$0xf]
        %v705 = vld [vmem:[%s1 + $0x4f0] sm:$0xf]
        %v706 = vld [vmem:[%s1 + $0x4f4] sm:$0xf]
        %v707 = vld [vmem:[%s1 + $0x4f8] sm:$0xf]
        %v708 = vld [vmem:[%s1 + $0x4fc] sm:$0xf]
        %v709 = vld [vmem:[%s1 + $0x500] sm:$0xf]
        %v710 = vld [vmem:[%s1 + $0x504] sm:$0xf]
        %v711 = vld [vmem:[%s1 + $0x508] sm:$0xf]
        %v712 = vld [vmem:[%s1 + $0x50c] sm:$0xf]
        %v713 = vld [vmem:[%s1 + $0x510] sm:$0xf]
        %v714 = vld [vmem:[%s1 + $0x514] sm:$0xf]
        %v715 = vld [vmem:[%s1 + $0x518] sm:$0xf]
        %v716 = vld [vmem:[%s1 + $0x51c] sm:$0xf]
        %v717 = vld [vmem:[%s1 + $0x520] sm:$0xf]
        %v718 = vld [vmem:[%s1 + $0x524] sm:$0xf]
        %v719 = vld [vmem:[%s1 + $0x528] sm:$0xf]
        %v720 = vld [vmem:[%s1 + $0x52c] sm:$0xf]
        %v721 = vld [vmem:[%s1 + $0x530] sm:$0xf]
        %v722 = vld [vmem:[%s1 + $0x534] sm:$0xf]
        %v723 = vld [vmem:[%s1 + $0x538] sm:$0xf]
        %v724 = vld [vmem:[%s1 + $0x53c] sm:$0xf]
        %v725 = vld [vmem:[%s1 + $0x540] sm:$0xf]
        %v726 = vld [vmem:[%s1 + $0x544] sm:$0xf]
        %v727 = vld [vmem:[%s1 + $0x548] sm:$0xf]
        %v728 = vld [vmem:[%s1 + $0x54c] sm:$0xf]
        %v729 = vld [vmem:[%s1 + $0x550] sm:$0xf]
        %v730 = vld [vmem:[%s1 + $0x554] sm:$0xf]
        %v731 = vld [vmem:[%s1 + $0x558] sm:$0xf]
        %v732 = vld [vmem:[%s1 + $0x55c] sm:$0xf]
        %v733 = vld [vmem:[%s1 + $0x560] sm:$0xf]
        %v734 = vld [vmem:[%s1 + $0x564] sm:$0xf]
        %v735 = vld [vmem:[%s1 + $0x568] sm:$0xf]
        %v736 = vld [vmem:[%s1 + $0x56c] sm:$0xf]
        %v737 = vld [vmem:[%s1 + $0x570] sm:$0xf]
        %v738 = vld [vmem:[%s1 + $0x574] sm:$0xf]
        %v739 = vld [vmem:[%s1 + $0x578] sm:$0xf]
        %v740 = vld [vmem:[%s1 + $0x57c] sm:$0xf]
        %v741 = vld [vmem:[%s1 + $0x580] sm:$0xf]
        %v742 = vld [vmem:[%s1 + $0x584] sm:$0xf]
        %v743 = vld [vmem:[%s1 + $0x588] sm:$0xf]
        %v744 = vld [vmem:[%s1 + $0x58c] sm:$0xf]
        %v745 = vld [vmem:[%s1 + $0x590] sm:$0xf]
        %v746 = vld [vmem:[%s1 + $0x594] sm:$0xf]
        %v747 = vld [vmem:[%s1 + $0x598] sm:$0xf]
        %v748 = vld [vmem:[%s1 + $0x59c] sm:$0xf]
        %v749 = vld [vmem:[%s9] ss:$0 sm:$0xff]
        %v774 = vunpack.c.l.b16 %v365
        %v775 = vunpack.c.h.b16 %v365
        %v776 = vunpack.c.l.b16 %v366
        %v777 = vunpack.c.h.b16 %v366
        %v778 = vunpack.c.l.b16 %v367
        %v779 = vunpack.c.h.b16 %v367
        %v780 = vunpack.c.l.b16 %v368
        %v781 = vunpack.c.h.b16 %v368
        %v782 = vunpack.c.l.b16 %v369
        %v783 = vunpack.c.h.b16 %v369
        %v784 = vunpack.c.l.b16 %v370
        %v785 = vunpack.c.h.b16 %v370
        %v786 = vunpack.c.l.b16 %v371
        %v787 = vunpack.c.h.b16 %v371
        %v788 = vunpack.c.l.b16 %v372
        %v789 = vunpack.c.h.b16 %v372
        %v790 = vunpack.c.l.b16 %v373
        %v791 = vunpack.c.h.b16 %v373
        %v792 = vunpack.c.l.b16 %v374
        %v793 = vunpack.c.h.b16 %v374
        %v794 = vunpack.c.l.b16 %v375
        %v795 = vunpack.c.h.b16 %v375
        %v796 = vunpack.c.l.b16 %v376
        %v797 = vunpack.c.l.b16 %v377
        %v798 = vunpack.c.h.b16 %v377
        %v799 = vunpack.c.l.b16 %v378
        %v800 = vunpack.c.h.b16 %v378
        %v801 = vunpack.c.l.b16 %v379
        %v802 = vunpack.c.h.b16 %v379
        %v803 = vunpack.c.l.b16 %v380
        %v804 = vunpack.c.h.b16 %v380
        %v805 = vunpack.c.l.b16 %v381
        %v806 = vunpack.c.h.b16 %v381
        %v807 = vunpack.c.l.b16 %v382
        %v808 = vunpack.c.h.b16 %v382
        %v809 = vunpack.c.l.b16 %v383
        %v810 = vunpack.c.h.b16 %v383
        %v811 = vunpack.c.l.b16 %v384
        %v812 = vunpack.c.h.b16 %v384
        %v813 = vunpack.c.l.b16 %v385
        %v814 = vunpack.c.h.b16 %v385
        %v815 = vunpack.c.l.b16 %v386
        %v816 = vunpack.c.h.b16 %v386
        %v817 = vunpack.c.l.b16 %v387
        %v818 = vunpack.c.h.b16 %v387
        %v819 = vunpack.c.l.b16 %v388
        %v820 = vpack.c.b16 %v797, %v774
        %v821 = vpack.c.b16 %v798, %v775
        %v822 = vpack.c.b16 %v799, %v776
        %v823 = vpack.c.b16 %v800, %v777
        %v824 = vpack.c.b16 %v801, %v778
        %v825 = vpack.c.b16 %v802, %v779
        %v826 = vpack.c.b16 %v803, %v780
        %v827 = vpack.c.b16 %v804, %v781
        %v828 = vpack.c.b16 %v805, %v782
        %v829 = vpack.c.b16 %v806, %v783
        %v830 = vpack.c.b16 %v807, %v784
        %v831 = vpack.c.b16 %v808, %v785
        %v832 = vpack.c.b16 %v809, %v786
        %v833 = vpack.c.b16 %v810, %v787
        %v834 = vpack.c.b16 %v811, %v788
        %v835 = vpack.c.b16 %v812, %v789
        %v836 = vpack.c.b16 %v813, %v790
        %v837 = vpack.c.b16 %v814, %v791
        %v838 = vpack.c.b16 %v815, %v792
        %v839 = vpack.c.b16 %v816, %v793
        %v840 = vpack.c.b16 %v817, %v794
        %v841 = vpack.c.b16 %v818, %v795
        %v842 = vpack.c.b16 %v819, %v796
        %v1225 = vunpack.c.l.b16 %v389
        %v1226 = vunpack.c.l.b16 %v390
        %v1227 = vunpack.c.l.b16 %v391
        %v1228 = vunpack.c.l.b16 %v392
        %v1229 = vunpack.c.l.b16 %v393
        %v1230 = vunpack.c.l.b16 %v394
        %v1231 = vunpack.c.l.b16 %v395
        %v1232 = vunpack.c.l.b16 %v396
        %v1233 = vunpack.c.l.b16 %v397
        %v1234 = vunpack.c.l.b16 %v398
        %v1235 = vunpack.c.l.b16 %v399
        %v1236 = vunpack.c.l.b16 %v400
        %v1237 = vunpack.c.l.b16 %v401
        %v1238 = vunpack.c.l.b16 %v402
        %v1239 = vunpack.c.l.b16 %v403
        %v1240 = vunpack.c.l.b16 %v404
        %v1241 = vunpack.c.l.b16 %v405
        %v1242 = vunpack.c.l.b16 %v406
        %v1243 = vunpack.c.l.b16 %v407
        %v1244 = vunpack.c.l.b16 %v408
        %v1245 = vunpack.c.l.b16 %v409
        %v1246 = vunpack.c.l.b16 %v410
        %v1247 = vunpack.c.l.b16 %v411
        %v1248 = vunpack.c.l.b16 %v412
        %v1249 = vunpack.c.l.b16 %v413
        %v1250 = vunpack.c.l.b16 %v414
        %v1251 = vunpack.c.l.b16 %v415
        %v1252 = vunpack.c.l.b16 %v416
        %v1253 = vunpack.c.l.b16 %v417
        %v1254 = vunpack.c.l.b16 %v418
        %v1255 = vunpack.c.l.b16 %v419
        %v1256 = vunpack.c.l.b16 %v420
        %v1257 = vunpack.c.l.b16 %v421
        %v1258 = vunpack.c.l.b16 %v422
        %v1259 = vunpack.c.l.b16 %v423
        %v1260 = vunpack.c.l.b16 %v424
        %v1261 = vunpack.c.l.b16 %v425
        %v1262 = vunpack.c.l.b16 %v426
        %v1263 = vunpack.c.l.b16 %v427
        %v1264 = vunpack.c.l.b16 %v428
        %v1265 = vunpack.c.l.b16 %v429
        %v1266 = vunpack.c.l.b16 %v430
        %v1267 = vunpack.c.l.b16 %v431
        %v1268 = vunpack.c.l.b16 %v432
        %v1269 = vunpack.c.l.b16 %v433
        %v1270 = vunpack.c.l.b16 %v434
        %v1271 = vunpack.c.l.b16 %v435
        %v1272 = vunpack.c.l.b16 %v436
        %v1273 = vunpack.c.l.b16 %v437
        %v1274 = vunpack.c.l.b16 %v438
        %v1275 = vunpack.c.l.b16 %v439
        %v1276 = vunpack.c.l.b16 %v440
        %v1277 = vunpack.c.l.b16 %v441
        %v1278 = vunpack.c.l.b16 %v442
        %v1279 = vunpack.c.l.b16 %v443
        %v1280 = vunpack.c.l.b16 %v444
        %v1281 = vunpack.c.l.b16 %v445
        %v1282 = vunpack.c.l.b16 %v446
        %v1283 = vunpack.c.l.b16 %v447
        %v1284 = vunpack.c.l.b16 %v448
        %v1285 = vunpack.c.l.b16 %v449
        %v1286 = vunpack.c.l.b16 %v450
        %v1287 = vunpack.c.l.b16 %v451
        %v1288 = vunpack.c.l.b16 %v452
        %v1289 = vunpack.c.l.b16 %v453
        %v1290 = vunpack.c.l.b16 %v454
        %v1291 = vunpack.c.l.b16 %v455
        %v1292 = vunpack.c.l.b16 %v456
        %v1293 = vunpack.c.l.b16 %v457
        %v1294 = vunpack.c.l.b16 %v458
        %v1295 = vunpack.c.l.b16 %v459
        %v1296 = vunpack.c.l.b16 %v460
        %v1297 = vunpack.c.l.b16 %v461
        %v1298 = vunpack.c.l.b16 %v462
        %v1299 = vunpack.c.l.b16 %v463
        %v1300 = vunpack.c.l.b16 %v464
        %v1301 = vunpack.c.l.b16 %v465
        %v1302 = vunpack.c.l.b16 %v466
        %v1303 = vunpack.c.l.b16 %v467
        %v1304 = vunpack.c.l.b16 %v468
        %v1305 = vunpack.c.l.b16 %v469
        %v1306 = vunpack.c.l.b16 %v470
        %v1307 = vunpack.c.l.b16 %v471
        %v1308 = vunpack.c.l.b16 %v472
        %v1309 = vunpack.c.l.b16 %v473
        %v1310 = vunpack.c.l.b16 %v474
        %v1311 = vunpack.c.l.b16 %v475
        %v1312 = vunpack.c.l.b16 %v476
        %v1313 = vunpack.c.l.b16 %v477
        %v1314 = vunpack.c.l.b16 %v478
        %v1315 = vunpack.c.l.b16 %v479
        %v1316 = vunpack.c.l.b16 %v480
        %v1317 = vunpack.c.l.b16 %v481
        %v1318 = vunpack.c.l.b16 %v482
        %v1319 = vunpack.c.l.b16 %v483
        %v1320 = vunpack.c.l.b16 %v484
        %v1321 = vunpack.c.l.b16 %v485
        %v1322 = vunpack.c.l.b16 %v486
        %v1323 = vunpack.c.l.b16 %v487
        %v1324 = vunpack.c.l.b16 %v488
        %v1325 = vunpack.c.l.b16 %v489
        %v1326 = vunpack.c.l.b16 %v490
        %v1327 = vunpack.c.l.b16 %v491
        %v1328 = vunpack.c.l.b16 %v492
        %v1329 = vunpack.c.l.b16 %v493
        %v1330 = vunpack.c.l.b16 %v494
        %v1331 = vunpack.c.l.b16 %v495
        %v1332 = vunpack.c.l.b16 %v496
        %v1333 = vunpack.c.l.b16 %v497
        %v1334 = vunpack.c.l.b16 %v498
        %v1335 = vunpack.c.l.b16 %v499
        %v1336 = vunpack.c.l.b16 %v500
        %v1337 = vunpack.c.l.b16 %v501
        %v1338 = vunpack.c.l.b16 %v502
        %v1339 = vunpack.c.l.b16 %v503
        %v1340 = vunpack.c.l.b16 %v504
        %v1341 = vunpack.c.l.b16 %v505
        %v1342 = vunpack.c.l.b16 %v506
        %v1343 = vunpack.c.l.b16 %v507
        %v1344 = vunpack.c.l.b16 %v508
        %v1345 = vunpack.c.l.b16 %v509
        %v1346 = vunpack.c.l.b16 %v510
        %v1347 = vunpack.c.l.b16 %v511
        %v1348 = vunpack.c.l.b16 %v512
        %v1349 = vunpack.c.l.b16 %v513
        %v1350 = vunpack.c.l.b16 %v514
        %v1351 = vunpack.c.l.b16 %v515
        %v1352 = vunpack.c.l.b16 %v516
        %v1353 = vunpack.c.l.b16 %v517
        %v1354 = vunpack.c.l.b16 %v518
        %v1355 = vunpack.c.l.b16 %v519
        %v1356 = vunpack.c.l.b16 %v520
        %v1357 = vunpack.c.l.b16 %v521
        %v1358 = vunpack.c.l.b16 %v522
        %v1359 = vunpack.c.l.b16 %v523
        %v1360 = vunpack.c.l.b16 %v524
        %v1361 = vunpack.c.l.b16 %v525
        %v1362 = vunpack.c.l.b16 %v526
        %v1363 = vunpack.c.l.b16 %v527
        %v1364 = vunpack.c.l.b16 %v528
        %v1365 = vunpack.c.l.b16 %v529
        %v1366 = vunpack.c.l.b16 %v530
        %v1367 = vunpack.c.l.b16 %v531
        %v1368 = vunpack.c.l.b16 %v532
        %v1369 = vunpack.c.l.b16 %v533
        %v1370 = vunpack.c.l.b16 %v534
        %v1371 = vunpack.c.l.b16 %v535
        %v1372 = vunpack.c.l.b16 %v536
        %v1373 = vunpack.c.l.b16 %v537
        %v1374 = vunpack.c.l.b16 %v538
        %v1375 = vunpack.c.l.b16 %v539
        %v1376 = vunpack.c.l.b16 %v540
        %v1377 = vunpack.c.l.b16 %v541
        %v1378 = vunpack.c.l.b16 %v542
        %v1379 = vunpack.c.l.b16 %v543
        %v1380 = vunpack.c.l.b16 %v544
        %v1381 = vunpack.c.l.b16 %v545
        %v1382 = vunpack.c.l.b16 %v546
        %v1383 = vunpack.c.l.b16 %v547
        %v1384 = vunpack.c.l.b16 %v548
        %v1385 = vunpack.c.l.b16 %v549
        %v1386 = vunpack.c.l.b16 %v550
        %v1387 = vunpack.c.l.b16 %v551
        %v1388 = vunpack.c.l.b16 %v552
        %v1389 = vunpack.c.l.b16 %v553
        %v1390 = vunpack.c.l.b16 %v554
        %v1391 = vunpack.c.l.b16 %v555
        %v1392 = vunpack.c.l.b16 %v556
        %v1393 = vunpack.c.l.b16 %v557
        %v1394 = vunpack.c.l.b16 %v558
        %v1395 = vunpack.c.l.b16 %v559
        %v1396 = vunpack.c.l.b16 %v560
        %v1397 = vunpack.c.l.b16 %v561
        %v1398 = vunpack.c.l.b16 %v562
        %v1399 = vunpack.c.l.b16 %v563
        %v1400 = vunpack.c.l.b16 %v564
        %v1401 = vunpack.c.l.b16 %v565
        %v1402 = vunpack.c.l.b16 %v566
        %v1403 = vunpack.c.l.b16 %v567
        %v1404 = vunpack.c.l.b16 %v568
        %v1405 = vunpack.c.l.b16 %v569
        %v1406 = vunpack.c.l.b16 %v570
        %v1407 = vunpack.c.l.b16 %v571
        %v1408 = vunpack.c.l.b16 %v572
        %v1409 = vunpack.c.l.b16 %v573
        %v1410 = vunpack.c.l.b16 %v574
        %v1411 = vunpack.c.l.b16 %v575
        %v1412 = vunpack.c.l.b16 %v576
        %v1413 = vunpack.c.l.b16 %v577
        %v1414 = vunpack.c.l.b16 %v578
        %v1415 = vunpack.c.l.b16 %v579
        %v1416 = vunpack.c.l.b16 %v580
        %v1417 = vunpack.c.l.b16 %v581
        %v1418 = vunpack.c.l.b16 %v582
        %v1419 = vunpack.c.l.b16 %v583
        %v1420 = vunpack.c.l.b16 %v584
        %v1421 = vunpack.c.l.b16 %v585
        %v1422 = vunpack.c.l.b16 %v586
        %v1423 = vunpack.c.l.b16 %v587
        %v1424 = vunpack.c.l.b16 %v588
        %v1425 = vunpack.c.l.b16 %v589
        %v1426 = vunpack.c.l.b16 %v590
        %v1427 = vunpack.c.l.b16 %v591
        %v1428 = vunpack.c.l.b16 %v592
        %v1429 = vunpack.c.l.b16 %v593
        %v1430 = vunpack.c.l.b16 %v594
        %v1431 = vunpack.c.l.b16 %v595
        %v1432 = vunpack.c.l.b16 %v596
        %v1433 = vunpack.c.l.b16 %v597
        %v1434 = vunpack.c.l.b16 %v598
        %v1435 = vunpack.c.l.b16 %v599
        %v1436 = vunpack.c.l.b16 %v600
        %v1437 = vunpack.c.l.b16 %v601
        %v1438 = vunpack.c.l.b16 %v602
        %v1439 = vunpack.c.l.b16 %v603
        %v1440 = vunpack.c.l.b16 %v604
        %v1441 = vunpack.c.l.b16 %v605
        %v1442 = vunpack.c.l.b16 %v606
        %v1443 = vunpack.c.l.b16 %v607
        %v1444 = vunpack.c.l.b16 %v608
        %v1445 = vunpack.c.l.b16 %v609
        %v1446 = vunpack.c.l.b16 %v610
        %v1447 = vunpack.c.l.b16 %v611
        %v1448 = vunpack.c.l.b16 %v612
        %v1449 = vunpack.c.l.b16 %v613
        %v1450 = vunpack.c.l.b16 %v614
        %v1451 = vunpack.c.l.b16 %v615
        %v1452 = vunpack.c.l.b16 %v616
        %v1453 = vunpack.c.l.b16 %v617
        %v1454 = vunpack.c.l.b16 %v618
        %v1455 = vunpack.c.l.b16 %v619
        %v1456 = vunpack.c.l.b16 %v620
        %v1457 = vunpack.c.l.b16 %v621
        %v1458 = vunpack.c.l.b16 %v622
        %v1459 = vunpack.c.l.b16 %v623
        %v1460 = vunpack.c.l.b16 %v624
        %v1461 = vunpack.c.l.b16 %v625
        %v1462 = vunpack.c.l.b16 %v626
        %v1463 = vunpack.c.l.b16 %v627
        %v1464 = vunpack.c.l.b16 %v628
        %v1465 = vunpack.c.l.b16 %v629
        %v1466 = vunpack.c.l.b16 %v630
        %v1467 = vunpack.c.l.b16 %v631
        %v1468 = vunpack.c.l.b16 %v632
        %v1469 = vunpack.c.l.b16 %v633
        %v1470 = vunpack.c.l.b16 %v634
        %v1471 = vunpack.c.l.b16 %v635
        %v1472 = vunpack.c.l.b16 %v636
        %v1473 = vunpack.c.l.b16 %v637
        %v1474 = vunpack.c.l.b16 %v638
        %v1475 = vunpack.c.l.b16 %v639
        %v1476 = vunpack.c.l.b16 %v640
        %v1477 = vunpack.c.l.b16 %v641
        %v1478 = vunpack.c.l.b16 %v642
        %v1479 = vunpack.c.l.b16 %v643
        %v1480 = vunpack.c.l.b16 %v644
        %v1481 = vunpack.c.l.b16 %v645
        %v1482 = vunpack.c.l.b16 %v646
        %v1483 = vunpack.c.l.b16 %v647
        %v1484 = vunpack.c.l.b16 %v648
        %v1485 = vunpack.c.l.b16 %v649
        %v1486 = vunpack.c.l.b16 %v650
        %v1487 = vunpack.c.l.b16 %v651
        %v1488 = vunpack.c.l.b16 %v652
        %v1489 = vunpack.c.l.b16 %v653
        %v1490 = vunpack.c.l.b16 %v654
        %v1491 = vunpack.c.l.b16 %v655
        %v1492 = vunpack.c.l.b16 %v656
        %v1493 = vunpack.c.l.b16 %v657
        %v1494 = vunpack.c.l.b16 %v658
        %v1495 = vunpack.c.l.b16 %v659
        %v1496 = vunpack.c.l.b16 %v660
        %v1497 = vunpack.c.l.b16 %v661
        %v1498 = vunpack.c.l.b16 %v662
        %v1499 = vunpack.c.l.b16 %v663
        %v1500 = vunpack.c.l.b16 %v664
        %v1501 = vunpack.c.l.b16 %v665
        %v1502 = vunpack.c.l.b16 %v666
        %v1503 = vunpack.c.l.b16 %v667
        %v1504 = vunpack.c.l.b16 %v668
        %v1505 = vunpack.c.l.b16 %v669
        %v1506 = vunpack.c.l.b16 %v670
        %v1507 = vunpack.c.l.b16 %v671
        %v1508 = vunpack.c.l.b16 %v672
        %v1509 = vunpack.c.l.b16 %v673
        %v1510 = vunpack.c.l.b16 %v674
        %v1511 = vunpack.c.l.b16 %v675
        %v1512 = vunpack.c.l.b16 %v676
        %v1513 = vunpack.c.l.b16 %v677
        %v1514 = vunpack.c.l.b16 %v678
        %v1515 = vunpack.c.l.b16 %v679
        %v1516 = vunpack.c.l.b16 %v680
        %v1517 = vunpack.c.l.b16 %v681
        %v1518 = vunpack.c.l.b16 %v682
        %v1519 = vunpack.c.l.b16 %v683
        %v1520 = vunpack.c.l.b16 %v684
        %v1521 = vunpack.c.l.b16 %v685
        %v1522 = vunpack.c.l.b16 %v686
        %v1523 = vunpack.c.l.b16 %v687
        %v1524 = vunpack.c.l.b16 %v688
        %v1525 = vunpack.c.l.b16 %v689
        %v1526 = vunpack.c.l.b16 %v690
        %v1527 = vunpack.c.l.b16 %v691
        %v1528 = vunpack.c.l.b16 %v692
        %v1529 = vunpack.c.l.b16 %v693
        %v1530 = vunpack.c.l.b16 %v694
        %v1531 = vunpack.c.l.b16 %v695
        %v1532 = vunpack.c.l.b16 %v696
        %v1533 = vunpack.c.l.b16 %v697
        %v1534 = vunpack.c.l.b16 %v698
        %v1535 = vunpack.c.l.b16 %v699
        %v1536 = vunpack.c.l.b16 %v700
        %v1537 = vunpack.c.l.b16 %v701
        %v1538 = vunpack.c.l.b16 %v702
        %v1539 = vunpack.c.l.b16 %v703
        %v1540 = vunpack.c.l.b16 %v704
        %v1541 = vunpack.c.l.b16 %v705
        %v1542 = vunpack.c.l.b16 %v706
        %v1543 = vunpack.c.l.b16 %v707
        %v1544 = vunpack.c.l.b16 %v708
        %v1545 = vunpack.c.l.b16 %v709
        %v1546 = vunpack.c.l.b16 %v710
        %v1547 = vunpack.c.l.b16 %v711
        %v1548 = vunpack.c.l.b16 %v712
        %v1549 = vunpack.c.l.b16 %v713
        %v1550 = vunpack.c.l.b16 %v714
        %v1551 = vunpack.c.l.b16 %v715
        %v1552 = vunpack.c.l.b16 %v716
        %v1553 = vunpack.c.l.b16 %v717
        %v1554 = vunpack.c.l.b16 %v718
        %v1555 = vunpack.c.l.b16 %v719
        %v1556 = vunpack.c.l.b16 %v720
        %v1557 = vunpack.c.l.b16 %v721
        %v1558 = vunpack.c.l.b16 %v722
        %v1559 = vunpack.c.l.b16 %v723
        %v1560 = vunpack.c.l.b16 %v724
        %v1561 = vunpack.c.l.b16 %v725
        %v1562 = vunpack.c.l.b16 %v726
        %v1563 = vunpack.c.l.b16 %v727
        %v1564 = vunpack.c.l.b16 %v728
        %v1565 = vunpack.c.l.b16 %v729
        %v1566 = vunpack.c.l.b16 %v730
        %v1567 = vunpack.c.l.b16 %v731
        %v1568 = vunpack.c.l.b16 %v732
        %v1569 = vunpack.c.l.b16 %v733
        %v1570 = vunpack.c.l.b16 %v734
        %v1571 = vunpack.c.l.b16 %v735
        %v1572 = vunpack.c.l.b16 %v736
        %v1573 = vunpack.c.l.b16 %v737
        %v1574 = vunpack.c.l.b16 %v738
        %v1575 = vunpack.c.l.b16 %v739
        %v1576 = vunpack.c.l.b16 %v740
        %v1577 = vunpack.c.l.b16 %v741
        %v1578 = vunpack.c.l.b16 %v742
        %v1579 = vunpack.c.l.b16 %v743
        %v1580 = vunpack.c.l.b16 %v744
        %v1581 = vunpack.c.l.b16 %v745
        %v1582 = vunpack.c.l.b16 %v746
        %v1583 = vunpack.c.l.b16 %v747
        %v1584 = vunpack.c.l.b16 %v748
        %v1585 = vpack.c.b16 %v1226, %v1225
        %v1586 = vpack.c.b16 %v1228, %v1227
        %v1587 = vpack.c.b16 %v1230, %v1229
        %v1588 = vpack.c.b16 %v1232, %v1231
        %v1589 = vpack.c.b16 %v1234, %v1233
        %v1590 = vpack.c.b16 %v1236, %v1235
        %v1591 = vpack.c.b16 %v1238, %v1237
        %v1592 = vpack.c.b16 %v1240, %v1239
        %v1593 = vpack.c.b16 %v1242, %v1241
        %v1594 = vpack.c.b16 %v1244, %v1243
        %v1595 = vpack.c.b16 %v1246, %v1245
        %v1596 = vpack.c.b16 %v1248, %v1247
        %v1597 = vpack.c.b16 %v1250, %v1249
        %v1598 = vpack.c.b16 %v1252, %v1251
        %v1599 = vpack.c.b16 %v1254, %v1253
        %v1600 = vpack.c.b16 %v1256, %v1255
        %v1601 = vpack.c.b16 %v1258, %v1257
        %v1602 = vpack.c.b16 %v1260, %v1259
        %v1603 = vpack.c.b16 %v1262, %v1261
        %v1604 = vpack.c.b16 %v1264, %v1263
        %v1605 = vpack.c.b16 %v1266, %v1265
        %v1606 = vpack.c.b16 %v1268, %v1267
        %v1607 = vpack.c.b16 %v1270, %v1269
        %v1608 = vpack.c.b16 %v1272, %v1271
        %v1609 = vpack.c.b16 %v1274, %v1273
        %v1610 = vpack.c.b16 %v1276, %v1275
        %v1611 = vpack.c.b16 %v1278, %v1277
        %v1612 = vpack.c.b16 %v1280, %v1279
        %v1613 = vpack.c.b16 %v1282, %v1281
        %v1614 = vpack.c.b16 %v1284, %v1283
        %v1615 = vpack.c.b16 %v1286, %v1285
        %v1616 = vpack.c.b16 %v1288, %v1287
        %v1617 = vpack.c.b16 %v1290, %v1289
        %v1618 = vpack.c.b16 %v1292, %v1291
        %v1619 = vpack.c.b16 %v1294, %v1293
        %v1620 = vpack.c.b16 %v1296, %v1295
        %v1621 = vpack.c.b16 %v1298, %v1297
        %v1622 = vpack.c.b16 %v1300, %v1299
        %v1623 = vpack.c.b16 %v1302, %v1301
        %v1624 = vpack.c.b16 %v1304, %v1303
        %v1625 = vpack.c.b16 %v1306, %v1305
        %v1626 = vpack.c.b16 %v1308, %v1307
        %v1627 = vpack.c.b16 %v1310, %v1309
        %v1628 = vpack.c.b16 %v1312, %v1311
        %v1629 = vpack.c.b16 %v1314, %v1313
        %v1630 = vpack.c.b16 %v1316, %v1315
        %v1631 = vpack.c.b16 %v1318, %v1317
        %v1632 = vpack.c.b16 %v1320, %v1319
        %v1633 = vpack.c.b16 %v1322, %v1321
        %v1634 = vpack.c.b16 %v1324, %v1323
        %v1635 = vpack.c.b16 %v1326, %v1325
        %v1636 = vpack.c.b16 %v1328, %v1327
        %v1637 = vpack.c.b16 %v1330, %v1329
        %v1638 = vpack.c.b16 %v1332, %v1331
        %v1639 = vpack.c.b16 %v1334, %v1333
        %v1640 = vpack.c.b16 %v1336, %v1335
        %v1641 = vpack.c.b16 %v1338, %v1337
        %v1642 = vpack.c.b16 %v1340, %v1339
        %v1643 = vpack.c.b16 %v1342, %v1341
        %v1644 = vpack.c.b16 %v1344, %v1343
        %v1645 = vpack.c.b16 %v1346, %v1345
        %v1646 = vpack.c.b16 %v1348, %v1347
        %v1647 = vpack.c.b16 %v1350, %v1349
        %v1648 = vpack.c.b16 %v1352, %v1351
        %v1649 = vpack.c.b16 %v1354, %v1353
        %v1650 = vpack.c.b16 %v1356, %v1355
        %v1651 = vpack.c.b16 %v1358, %v1357
        %v1652 = vpack.c.b16 %v1360, %v1359
        %v1653 = vpack.c.b16 %v1362, %v1361
        %v1654 = vpack.c.b16 %v1364, %v1363
        %v1655 = vpack.c.b16 %v1366, %v1365
        %v1656 = vpack.c.b16 %v1368, %v1367
        %v1657 = vpack.c.b16 %v1370, %v1369
        %v1658 = vpack.c.b16 %v1372, %v1371
        %v1659 = vpack.c.b16 %v1374, %v1373
        %v1660 = vpack.c.b16 %v1376, %v1375
        %v1661 = vpack.c.b16 %v1378, %v1377
        %v1662 = vpack.c.b16 %v1380, %v1379
        %v1663 = vpack.c.b16 %v1382, %v1381
        %v1664 = vpack.c.b16 %v1384, %v1383
        %v1665 = vpack.c.b16 %v1386, %v1385
        %v1666 = vpack.c.b16 %v1388, %v1387
        %v1667 = vpack.c.b16 %v1390, %v1389
        %v1668 = vpack.c.b16 %v1392, %v1391
        %v1669 = vpack.c.b16 %v1394, %v1393
        %v1670 = vpack.c.b16 %v1396, %v1395
        %v1671 = vpack.c.b16 %v1398, %v1397
        %v1672 = vpack.c.b16 %v1400, %v1399
        %v1673 = vpack.c.b16 %v1402, %v1401
        %v1674 = vpack.c.b16 %v1404, %v1403
        %v1675 = vpack.c.b16 %v1406, %v1405
        %v1676 = vpack.c.b16 %v1408, %v1407
        %v1677 = vpack.c.b16 %v1410, %v1409
        %v1678 = vpack.c.b16 %v1412, %v1411
        %v1679 = vpack.c.b16 %v1414, %v1413
        %v1680 = vpack.c.b16 %v1416, %v1415
        %v1681 = vpack.c.b16 %v1418, %v1417
        %v1682 = vpack.c.b16 %v1420, %v1419
        %v1683 = vpack.c.b16 %v1422, %v1421
        %v1684 = vpack.c.b16 %v1424, %v1423
        %v1685 = vpack.c.b16 %v1426, %v1425
        %v1686 = vpack.c.b16 %v1428, %v1427
        %v1687 = vpack.c.b16 %v1430, %v1429
        %v1688 = vpack.c.b16 %v1432, %v1431
        %v1689 = vpack.c.b16 %v1434, %v1433
        %v1690 = vpack.c.b16 %v1436, %v1435
        %v1691 = vpack.c.b16 %v1438, %v1437
        %v1692 = vpack.c.b16 %v1440, %v1439
        %v1693 = vpack.c.b16 %v1442, %v1441
        %v1694 = vpack.c.b16 %v1444, %v1443
        %v1695 = vpack.c.b16 %v1446, %v1445
        %v1696 = vpack.c.b16 %v1448, %v1447
        %v1697 = vpack.c.b16 %v1450, %v1449
        %v1698 = vpack.c.b16 %v1452, %v1451
        %v1699 = vpack.c.b16 %v1454, %v1453
        %v1700 = vpack.c.b16 %v1456, %v1455
        %v1701 = vpack.c.b16 %v1458, %v1457
        %v1702 = vpack.c.b16 %v1460, %v1459
        %v1703 = vpack.c.b16 %v1462, %v1461
        %v1704 = vpack.c.b16 %v1464, %v1463
        %v1705 = vpack.c.b16 %v1466, %v1465
        %v1706 = vpack.c.b16 %v1468, %v1467
        %v1707 = vpack.c.b16 %v1470, %v1469
        %v1708 = vpack.c.b16 %v1472, %v1471
        %v1709 = vpack.c.b16 %v1474, %v1473
        %v1710 = vpack.c.b16 %v1476, %v1475
        %v1711 = vpack.c.b16 %v1478, %v1477
        %v1712 = vpack.c.b16 %v1480, %v1479
        %v1713 = vpack.c.b16 %v1482, %v1481
        %v1714 = vpack.c.b16 %v1484, %v1483
        %v1715 = vpack.c.b16 %v1486, %v1485
        %v1716 = vpack.c.b16 %v1488, %v1487
        %v1717 = vpack.c.b16 %v1490, %v1489
        %v1718 = vpack.c.b16 %v1492, %v1491
        %v1719 = vpack.c.b16 %v1494, %v1493
        %v1720 = vpack.c.b16 %v1496, %v1495
        %v1721 = vpack.c.b16 %v1498, %v1497
        %v1722 = vpack.c.b16 %v1500, %v1499
        %v1723 = vpack.c.b16 %v1502, %v1501
        %v1724 = vpack.c.b16 %v1504, %v1503
        %v1725 = vpack.c.b16 %v1506, %v1505
        %v1726 = vpack.c.b16 %v1508, %v1507
        %v1727 = vpack.c.b16 %v1510, %v1509
        %v1728 = vpack.c.b16 %v1512, %v1511
        %v1729 = vpack.c.b16 %v1514, %v1513
        %v1730 = vpack.c.b16 %v1516, %v1515
        %v1731 = vpack.c.b16 %v1518, %v1517
        %v1732 = vpack.c.b16 %v1520, %v1519
        %v1733 = vpack.c.b16 %v1522, %v1521
        %v1734 = vpack.c.b16 %v1524, %v1523
        %v1735 = vpack.c.b16 %v1526, %v1525
        %v1736 = vpack.c.b16 %v1528, %v1527
        %v1737 = vpack.c.b16 %v1530, %v1529
        %v1738 = vpack.c.b16 %v1532, %v1531
        %v1739 = vpack.c.b16 %v1534, %v1533
        %v1740 = vpack.c.b16 %v1536, %v1535
        %v1741 = vpack.c.b16 %v1538, %v1537
        %v1742 = vpack.c.b16 %v1540, %v1539
        %v1743 = vpack.c.b16 %v1542, %v1541
        %v1744 = vpack.c.b16 %v1544, %v1543
        %v1745 = vpack.c.b16 %v1546, %v1545
        %v1746 = vpack.c.b16 %v1548, %v1547
        %v1747 = vpack.c.b16 %v1550, %v1549
        %v1748 = vpack.c.b16 %v1552, %v1551
        %v1749 = vpack.c.b16 %v1554, %v1553
        %v1750 = vpack.c.b16 %v1556, %v1555
        %v1751 = vpack.c.b16 %v1558, %v1557
        %v1752 = vpack.c.b16 %v1560, %v1559
        %v1753 = vpack.c.b16 %v1562, %v1561
        %v1754 = vpack.c.b16 %v1564, %v1563
        %v1755 = vpack.c.b16 %v1566, %v1565
        %v1756 = vpack.c.b16 %v1568, %v1567
        %v1757 = vpack.c.b16 %v1570, %v1569
        %v1758 = vpack.c.b16 %v1572, %v1571
        %v1759 = vpack.c.b16 %v1574, %v1573
        %v1760 = vpack.c.b16 %v1576, %v1575
        %v1761 = vpack.c.b16 %v1578, %v1577
        %v1762 = vpack.c.b16 %v1580, %v1579
        %v1763 = vpack.c.b16 %v1582, %v1581
        %v1764 = vpack.c.b16 %v1584, %v1583
        %vm1945 = vcmask 523264
        %v1947 = vsel %vm1945, %v842, 0
        %1949 = vmatprep.subr.bf16.mxu0 0
        %1950 = vmatpush1.bf16.msra.mxu0 %v1592
        %1951 = vmatprep.subr.bf16.mxu0 0
        %1952 = vmatpush1.bf16.msra.mxu0 %v1591
        %1953 = vmatprep.subr.bf16.mxu0 0
        %1954 = vmatpush1.bf16.msra.mxu0 %v1590
        %1955 = vmatprep.subr.bf16.mxu0 0
        %1956 = vmatpush1.bf16.msra.mxu0 %v1589
        %1957 = vmatprep.subr.bf16.mxu0 0
        %1958 = vmatpush1.bf16.msra.mxu0 %v1588
        %1959 = vmatprep.subr.bf16.mxu0 0
        %1960 = vmatpush1.bf16.msra.mxu0 %v1587
        %1961 = vmatprep.subr.bf16.mxu0 0
        %1962 = vmatpush1.bf16.msra.mxu0 %v1586
        %1963 = vmatprep.subr.bf16.mxu0 0
        %1964 = vmatpush1.bf16.msra.mxu0 %v1585
        %1965 = vmatprep.subr.bf16.mxu0 0
        %1966 = vmatpush2.bf16.msra.mxu0 %v1600
        %1967 = vmatprep.subr.bf16.mxu0 0
        %1968 = vmatpush2.bf16.msra.mxu0 %v1599
        %1969 = vmatprep.subr.bf16.mxu0 0
        %1970 = vmatpush2.bf16.msra.mxu0 %v1598
        %1971 = vmatprep.subr.bf16.mxu0 0
        %1972 = vmatpush2.bf16.msra.mxu0 %v1597
        %1973 = vmatprep.subr.bf16.mxu0 0
        %1974 = vmatpush2.bf16.msra.mxu0 %v1596
        %1975 = vmatprep.subr.bf16.mxu0 0
        %1976 = vmatpush2.bf16.msra.mxu0 %v1595
        %1977 = vmatprep.subr.bf16.mxu0 0
        %1978 = vmatpush2.bf16.msra.mxu0 %v1594
        %1979 = vmatprep.subr.bf16.mxu0 0
        %1980 = vmatpush2.bf16.msra.mxu0 %v1593
        %1981 = vmatprep.mubr.bf16.mxu0 %v821
        %1982 = vmatmul.mubr.bf16.gmra.mxu0 %v820
        %v1983 = vpop.f32.mrf.mxu0
        %v1984 = vadd.f32 %v749, %v1983
        %v1985 = vpop.f32.mrf.mxu0
        %v1986 = vpop.f32.mrf.mxu0
        %v1987 = vadd.f32 %v749, %v1986
        %v1988 = vpop.f32.mrf.mxu0
        %1989 = vdwg.mxu0
        %1990 = vmatprep.subr.bf16.mxu0 0
        %1991 = vmatpush1.bf16.msra.mxu0 %v1608
        %1992 = vmatprep.subr.bf16.mxu0 0
        %1993 = vmatpush1.bf16.msra.mxu0 %v1607
        %1994 = vmatprep.subr.bf16.mxu0 0
        %1995 = vmatpush1.bf16.msra.mxu0 %v1606
        %1996 = vmatprep.subr.bf16.mxu0 0
        %1997 = vmatpush1.bf16.msra.mxu0 %v1605
        %1998 = vmatprep.subr.bf16.mxu0 0
        %1999 = vmatpush1.bf16.msra.mxu0 %v1604
        %2000 = vmatprep.subr.bf16.mxu0 0
        %2001 = vmatpush1.bf16.msra.mxu0 %v1603
        %2002 = vmatprep.subr.bf16.mxu0 0
        %2003 = vmatpush1.bf16.msra.mxu0 %v1602
        %2004 = vmatprep.subr.bf16.mxu0 0
        %2005 = vmatpush1.bf16.msra.mxu0 %v1601
        %2006 = vmatprep.subr.bf16.mxu0 0
        %2007 = vmatpush2.bf16.msra.mxu0 %v1616
        %2008 = vmatprep.subr.bf16.mxu0 0
        %2009 = vmatpush2.bf16.msra.mxu0 %v1615
        %2010 = vmatprep.subr.bf16.mxu0 0
        %2011 = vmatpush2.bf16.msra.mxu0 %v1614
        %2012 = vmatprep.subr.bf16.mxu0 0
        %2013 = vmatpush2.bf16.msra.mxu0 %v1613
        %2014 = vmatprep.subr.bf16.mxu0 0
        %2015 = vmatpush2.bf16.msra.mxu0 %v1612
        %2016 = vmatprep.subr.bf16.mxu0 0
        %2017 = vmatpush2.bf16.msra.mxu0 %v1611
        %2018 = vmatprep.subr.bf16.mxu0 0
        %2019 = vmatpush2.bf16.msra.mxu0 %v1610
        %2020 = vmatprep.subr.bf16.mxu0 0
        %2021 = vmatpush2.bf16.msra.mxu0 %v1609
        %2022 = vmatprep.mubr.bf16.mxu0 %v823
        %2023 = vmatmul.mubr.bf16.gmra.mxu0 %v822
        %v2024 = vpop.f32.mrf.mxu0
        %v2025 = vadd.f32 %v1984, %v2024
        %v2026 = vpop.f32.mrf.mxu0
        %v2027 = vpop.f32.mrf.mxu0
        %v2028 = vadd.f32 %v1987, %v2027
        %v2029 = vpop.f32.mrf.mxu0
        %2030 = vdwg.mxu0
        %2031 = vmatprep.subr.bf16.mxu0 0
        %2032 = vmatpush1.bf16.msra.mxu0 %v1624
        %2033 = vmatprep.subr.bf16.mxu0 0
        %2034 = vmatpush1.bf16.msra.mxu0 %v1623
        %2035 = vmatprep.subr.bf16.mxu0 0
        %2036 = vmatpush1.bf16.msra.mxu0 %v1622
        %2037 = vmatprep.subr.bf16.mxu0 0
        %2038 = vmatpush1.bf16.msra.mxu0 %v1621
        %2039 = vmatprep.subr.bf16.mxu0 0
        %2040 = vmatpush1.bf16.msra.mxu0 %v1620
        %2041 = vmatprep.subr.bf16.mxu0 0
        %2042 = vmatpush1.bf16.msra.mxu0 %v1619
        %2043 = vmatprep.subr.bf16.mxu0 0
        %2044 = vmatpush1.bf16.msra.mxu0 %v1618
        %2045 = vmatprep.subr.bf16.mxu0 0
        %2046 = vmatpush1.bf16.msra.mxu0 %v1617
        %2047 = vmatprep.subr.bf16.mxu0 0
        %2048 = vmatpush2.bf16.msra.mxu0 %v1632
        %2049 = vmatprep.subr.bf16.mxu0 0
        %2050 = vmatpush2.bf16.msra.mxu0 %v1631
        %2051 = vmatprep.subr.bf16.mxu0 0
        %2052 = vmatpush2.bf16.msra.mxu0 %v1630
        %2053 = vmatprep.subr.bf16.mxu0 0
        %2054 = vmatpush2.bf16.msra.mxu0 %v1629
        %2055 = vmatprep.subr.bf16.mxu0 0
        %2056 = vmatpush2.bf16.msra.mxu0 %v1628
        %2057 = vmatprep.subr.bf16.mxu0 0
        %2058 = vmatpush2.bf16.msra.mxu0 %v1627
        %2059 = vmatprep.subr.bf16.mxu0 0
        %2060 = vmatpush2.bf16.msra.mxu0 %v1626
        %2061 = vmatprep.subr.bf16.mxu0 0
        %2062 = vmatpush2.bf16.msra.mxu0 %v1625
        %2063 = vmatprep.mubr.bf16.mxu0 %v825
        %2064 = vmatmul.mubr.bf16.gmra.mxu0 %v824
        %v2065 = vpop.f32.mrf.mxu0
        %v2066 = vadd.f32 %v2025, %v2065
        %v2067 = vpop.f32.mrf.mxu0
        %v2068 = vpop.f32.mrf.mxu0
        %v2069 = vadd.f32 %v2028, %v2068
        %v2070 = vpop.f32.mrf.mxu0
        %2071 = vdwg.mxu0
        %2072 = vmatprep.subr.bf16.mxu0 0
        %2073 = vmatpush1.bf16.msra.mxu0 %v1640
        %2074 = vmatprep.subr.bf16.mxu0 0
        %2075 = vmatpush1.bf16.msra.mxu0 %v1639
        %2076 = vmatprep.subr.bf16.mxu0 0
        %2077 = vmatpush1.bf16.msra.mxu0 %v1638
        %2078 = vmatprep.subr.bf16.mxu0 0
        %2079 = vmatpush1.bf16.msra.mxu0 %v1637
        %2080 = vmatprep.subr.bf16.mxu0 0
        %2081 = vmatpush1.bf16.msra.mxu0 %v1636
        %2082 = vmatprep.subr.bf16.mxu0 0
        %2083 = vmatpush1.bf16.msra.mxu0 %v1635
        %2084 = vmatprep.subr.bf16.mxu0 0
        %2085 = vmatpush1.bf16.msra.mxu0 %v1634
        %2086 = vmatprep.subr.bf16.mxu0 0
        %2087 = vmatpush1.bf16.msra.mxu0 %v1633
        %2088 = vmatprep.subr.bf16.mxu0 0
        %2089 = vmatpush2.bf16.msra.mxu0 %v1648
        %2090 = vmatprep.subr.bf16.mxu0 0
        %2091 = vmatpush2.bf16.msra.mxu0 %v1647
        %2092 = vmatprep.subr.bf16.mxu0 0
        %2093 = vmatpush2.bf16.msra.mxu0 %v1646
        %2094 = vmatprep.subr.bf16.mxu0 0
        %2095 = vmatpush2.bf16.msra.mxu0 %v1645
        %2096 = vmatprep.subr.bf16.mxu0 0
        %2097 = vmatpush2.bf16.msra.mxu0 %v1644
        %2098 = vmatprep.subr.bf16.mxu0 0
        %2099 = vmatpush2.bf16.msra.mxu0 %v1643
        %2100 = vmatprep.subr.bf16.mxu0 0
        %2101 = vmatpush2.bf16.msra.mxu0 %v1642
        %2102 = vmatprep.subr.bf16.mxu0 0
        %2103 = vmatpush2.bf16.msra.mxu0 %v1641
        %2104 = vmatprep.mubr.bf16.mxu0 %v827
        %2105 = vmatmul.mubr.bf16.gmra.mxu0 %v826
        %v2106 = vpop.f32.mrf.mxu0
        %v2107 = vadd.f32 %v2066, %v2106
        %v2108 = vpop.f32.mrf.mxu0
        %v2109 = vpop.f32.mrf.mxu0
        %v2110 = vadd.f32 %v2069, %v2109
        %v2111 = vpop.f32.mrf.mxu0
        %2112 = vdwg.mxu0
        %2113 = vmatprep.subr.bf16.mxu0 0
        %2114 = vmatpush1.bf16.msra.mxu0 %v1656
        %2115 = vmatprep.subr.bf16.mxu0 0
        %2116 = vmatpush1.bf16.msra.mxu0 %v1655
        %2117 = vmatprep.subr.bf16.mxu0 0
        %2118 = vmatpush1.bf16.msra.mxu0 %v1654
        %2119 = vmatprep.subr.bf16.mxu0 0
        %2120 = vmatpush1.bf16.msra.mxu0 %v1653
        %2121 = vmatprep.subr.bf16.mxu0 0
        %2122 = vmatpush1.bf16.msra.mxu0 %v1652
        %2123 = vmatprep.subr.bf16.mxu0 0
        %2124 = vmatpush1.bf16.msra.mxu0 %v1651
        %2125 = vmatprep.subr.bf16.mxu0 0
        %2126 = vmatpush1.bf16.msra.mxu0 %v1650
        %2127 = vmatprep.subr.bf16.mxu0 0
        %2128 = vmatpush1.bf16.msra.mxu0 %v1649
        %2129 = vmatprep.subr.bf16.mxu0 0
        %2130 = vmatpush2.bf16.msra.mxu0 %v1664
        %2131 = vmatprep.subr.bf16.mxu0 0
        %2132 = vmatpush2.bf16.msra.mxu0 %v1663
        %2133 = vmatprep.subr.bf16.mxu0 0
        %2134 = vmatpush2.bf16.msra.mxu0 %v1662
        %2135 = vmatprep.subr.bf16.mxu0 0
        %2136 = vmatpush2.bf16.msra.mxu0 %v1661
        %2137 = vmatprep.subr.bf16.mxu0 0
        %2138 = vmatpush2.bf16.msra.mxu0 %v1660
        %2139 = vmatprep.subr.bf16.mxu0 0
        %2140 = vmatpush2.bf16.msra.mxu0 %v1659
        %2141 = vmatprep.subr.bf16.mxu0 0
        %2142 = vmatpush2.bf16.msra.mxu0 %v1658
        %2143 = vmatprep.subr.bf16.mxu0 0
        %2144 = vmatpush2.bf16.msra.mxu0 %v1657
        %2145 = vmatprep.mubr.bf16.mxu0 %v829
        %2146 = vmatmul.mubr.bf16.gmra.mxu0 %v828
        %v2147 = vpop.f32.mrf.mxu0
        %v2148 = vadd.f32 %v2107, %v2147
        %v2149 = vpop.f32.mrf.mxu0
        %v2150 = vpop.f32.mrf.mxu0
        %v2151 = vadd.f32 %v2110, %v2150
        %v2152 = vpop.f32.mrf.mxu0
        %2153 = vdwg.mxu0
        %2154 = vmatprep.subr.bf16.mxu0 0
        %2155 = vmatpush1.bf16.msra.mxu0 %v1672
        %2156 = vmatprep.subr.bf16.mxu0 0
        %2157 = vmatpush1.bf16.msra.mxu0 %v1671
        %2158 = vmatprep.subr.bf16.mxu0 0
        %2159 = vmatpush1.bf16.msra.mxu0 %v1670
        %2160 = vmatprep.subr.bf16.mxu0 0
        %2161 = vmatpush1.bf16.msra.mxu0 %v1669
        %2162 = vmatprep.subr.bf16.mxu0 0
        %2163 = vmatpush1.bf16.msra.mxu0 %v1668
        %2164 = vmatprep.subr.bf16.mxu0 0
        %2165 = vmatpush1.bf16.msra.mxu0 %v1667
        %2166 = vmatprep.subr.bf16.mxu0 0
        %2167 = vmatpush1.bf16.msra.mxu0 %v1666
        %2168 = vmatprep.subr.bf16.mxu0 0
        %2169 = vmatpush1.bf16.msra.mxu0 %v1665
        %2170 = vmatprep.subr.bf16.mxu0 0
        %2171 = vmatpush2.bf16.msra.mxu0 %v1680
        %2172 = vmatprep.subr.bf16.mxu0 0
        %2173 = vmatpush2.bf16.msra.mxu0 %v1679
        %2174 = vmatprep.subr.bf16.mxu0 0
        %2175 = vmatpush2.bf16.msra.mxu0 %v1678
        %2176 = vmatprep.subr.bf16.mxu0 0
        %2177 = vmatpush2.bf16.msra.mxu0 %v1677
        %2178 = vmatprep.subr.bf16.mxu0 0
        %2179 = vmatpush2.bf16.msra.mxu0 %v1676
        %2180 = vmatprep.subr.bf16.mxu0 0
        %2181 = vmatpush2.bf16.msra.mxu0 %v1675
        %2182 = vmatprep.subr.bf16.mxu0 0
        %2183 = vmatpush2.bf16.msra.mxu0 %v1674
        %2184 = vmatprep.subr.bf16.mxu0 0
        %2185 = vmatpush2.bf16.msra.mxu0 %v1673
        %2186 = vmatprep.mubr.bf16.mxu0 %v831
        %2187 = vmatmul.mubr.bf16.gmra.mxu0 %v830
        %v2188 = vpop.f32.mrf.mxu0
        %v2189 = vadd.f32 %v2148, %v2188
        %v2190 = vpop.f32.mrf.mxu0
        %v2191 = vpop.f32.mrf.mxu0
        %v2192 = vadd.f32 %v2151, %v2191
        %v2193 = vpop.f32.mrf.mxu0
        %2194 = vdwg.mxu0
        %2195 = vmatprep.subr.bf16.mxu0 0
        %2196 = vmatpush1.bf16.msra.mxu0 %v1688
        %2197 = vmatprep.subr.bf16.mxu0 0
        %2198 = vmatpush1.bf16.msra.mxu0 %v1687
        %2199 = vmatprep.subr.bf16.mxu0 0
        %2200 = vmatpush1.bf16.msra.mxu0 %v1686
        %2201 = vmatprep.subr.bf16.mxu0 0
        %2202 = vmatpush1.bf16.msra.mxu0 %v1685
        %2203 = vmatprep.subr.bf16.mxu0 0
        %2204 = vmatpush1.bf16.msra.mxu0 %v1684
        %2205 = vmatprep.subr.bf16.mxu0 0
        %2206 = vmatpush1.bf16.msra.mxu0 %v1683
        %2207 = vmatprep.subr.bf16.mxu0 0
        %2208 = vmatpush1.bf16.msra.mxu0 %v1682
        %2209 = vmatprep.subr.bf16.mxu0 0
        %2210 = vmatpush1.bf16.msra.mxu0 %v1681
        %2211 = vmatprep.subr.bf16.mxu0 0
        %2212 = vmatpush2.bf16.msra.mxu0 %v1696
        %2213 = vmatprep.subr.bf16.mxu0 0
        %2214 = vmatpush2.bf16.msra.mxu0 %v1695
        %2215 = vmatprep.subr.bf16.mxu0 0
        %2216 = vmatpush2.bf16.msra.mxu0 %v1694
        %2217 = vmatprep.subr.bf16.mxu0 0
        %2218 = vmatpush2.bf16.msra.mxu0 %v1693
        %2219 = vmatprep.subr.bf16.mxu0 0
        %2220 = vmatpush2.bf16.msra.mxu0 %v1692
        %2221 = vmatprep.subr.bf16.mxu0 0
        %2222 = vmatpush2.bf16.msra.mxu0 %v1691
        %2223 = vmatprep.subr.bf16.mxu0 0
        %2224 = vmatpush2.bf16.msra.mxu0 %v1690
        %2225 = vmatprep.subr.bf16.mxu0 0
        %2226 = vmatpush2.bf16.msra.mxu0 %v1689
        %2227 = vmatprep.mubr.bf16.mxu0 %v833
        %2228 = vmatmul.mubr.bf16.gmra.mxu0 %v832
        %v2229 = vpop.f32.mrf.mxu0
        %v2230 = vadd.f32 %v2189, %v2229
        %v2231 = vpop.f32.mrf.mxu0
        %v2232 = vpop.f32.mrf.mxu0
        %v2233 = vadd.f32 %v2192, %v2232
        %v2234 = vpop.f32.mrf.mxu0
        %2235 = vdwg.mxu0
        %2236 = vmatprep.subr.bf16.mxu0 0
        %2237 = vmatpush1.bf16.msra.mxu0 %v1704
        %2238 = vmatprep.subr.bf16.mxu0 0
        %2239 = vmatpush1.bf16.msra.mxu0 %v1703
        %2240 = vmatprep.subr.bf16.mxu0 0
        %2241 = vmatpush1.bf16.msra.mxu0 %v1702
        %2242 = vmatprep.subr.bf16.mxu0 0
        %2243 = vmatpush1.bf16.msra.mxu0 %v1701
        %2244 = vmatprep.subr.bf16.mxu0 0
        %2245 = vmatpush1.bf16.msra.mxu0 %v1700
        %2246 = vmatprep.subr.bf16.mxu0 0
        %2247 = vmatpush1.bf16.msra.mxu0 %v1699
        %2248 = vmatprep.subr.bf16.mxu0 0
        %2249 = vmatpush1.bf16.msra.mxu0 %v1698
        %2250 = vmatprep.subr.bf16.mxu0 0
        %2251 = vmatpush1.bf16.msra.mxu0 %v1697
        %2252 = vmatprep.subr.bf16.mxu0 0
        %2253 = vmatpush2.bf16.msra.mxu0 %v1712
        %2254 = vmatprep.subr.bf16.mxu0 0
        %2255 = vmatpush2.bf16.msra.mxu0 %v1711
        %2256 = vmatprep.subr.bf16.mxu0 0
        %2257 = vmatpush2.bf16.msra.mxu0 %v1710
        %2258 = vmatprep.subr.bf16.mxu0 0
        %2259 = vmatpush2.bf16.msra.mxu0 %v1709
        %2260 = vmatprep.subr.bf16.mxu0 0
        %2261 = vmatpush2.bf16.msra.mxu0 %v1708
        %2262 = vmatprep.subr.bf16.mxu0 0
        %2263 = vmatpush2.bf16.msra.mxu0 %v1707
        %2264 = vmatprep.subr.bf16.mxu0 0
        %2265 = vmatpush2.bf16.msra.mxu0 %v1706
        %2266 = vmatprep.subr.bf16.mxu0 0
        %2267 = vmatpush2.bf16.msra.mxu0 %v1705
        %2268 = vmatprep.mubr.bf16.mxu0 %v835
        %2269 = vmatmul.mubr.bf16.gmra.mxu0 %v834
        %v2270 = vpop.f32.mrf.mxu0
        %v2271 = vadd.f32 %v2230, %v2270
        %v2272 = vpop.f32.mrf.mxu0
        %v2273 = vpop.f32.mrf.mxu0
        %v2274 = vadd.f32 %v2233, %v2273
        %v2275 = vpop.f32.mrf.mxu0
        %2276 = vdwg.mxu0
        %2277 = vmatprep.subr.bf16.mxu0 0
        %2278 = vmatpush1.bf16.msra.mxu0 %v1720
        %2279 = vmatprep.subr.bf16.mxu0 0
        %2280 = vmatpush1.bf16.msra.mxu0 %v1719
        %2281 = vmatprep.subr.bf16.mxu0 0
        %2282 = vmatpush1.bf16.msra.mxu0 %v1718
        %2283 = vmatprep.subr.bf16.mxu0 0
        %2284 = vmatpush1.bf16.msra.mxu0 %v1717
        %2285 = vmatprep.subr.bf16.mxu0 0
        %2286 = vmatpush1.bf16.msra.mxu0 %v1716
        %2287 = vmatprep.subr.bf16.mxu0 0
        %2288 = vmatpush1.bf16.msra.mxu0 %v1715
        %2289 = vmatprep.subr.bf16.mxu0 0
        %2290 = vmatpush1.bf16.msra.mxu0 %v1714
        %2291 = vmatprep.subr.bf16.mxu0 0
        %2292 = vmatpush1.bf16.msra.mxu0 %v1713
        %2293 = vmatprep.subr.bf16.mxu0 0
        %2294 = vmatpush2.bf16.msra.mxu0 %v1728
        %2295 = vmatprep.subr.bf16.mxu0 0
        %2296 = vmatpush2.bf16.msra.mxu0 %v1727
        %2297 = vmatprep.subr.bf16.mxu0 0
        %2298 = vmatpush2.bf16.msra.mxu0 %v1726
        %2299 = vmatprep.subr.bf16.mxu0 0
        %2300 = vmatpush2.bf16.msra.mxu0 %v1725
        %2301 = vmatprep.subr.bf16.mxu0 0
        %2302 = vmatpush2.bf16.msra.mxu0 %v1724
        %2303 = vmatprep.subr.bf16.mxu0 0
        %2304 = vmatpush2.bf16.msra.mxu0 %v1723
        %2305 = vmatprep.subr.bf16.mxu0 0
        %2306 = vmatpush2.bf16.msra.mxu0 %v1722
        %2307 = vmatprep.subr.bf16.mxu0 0
        %2308 = vmatpush2.bf16.msra.mxu0 %v1721
        %2309 = vmatprep.mubr.bf16.mxu0 %v837
        %2310 = vmatmul.mubr.bf16.gmra.mxu0 %v836
        %v2311 = vpop.f32.mrf.mxu0
        %v2312 = vadd.f32 %v2271, %v2311
        %v2313 = vpop.f32.mrf.mxu0
        %v2314 = vpop.f32.mrf.mxu0
        %v2315 = vadd.f32 %v2274, %v2314
        %v2316 = vpop.f32.mrf.mxu0
        %2317 = vdwg.mxu0
        %2318 = vmatprep.subr.bf16.mxu0 0
        %2319 = vmatpush1.bf16.msra.mxu0 %v1736
        %2320 = vmatprep.subr.bf16.mxu0 0
        %2321 = vmatpush1.bf16.msra.mxu0 %v1735
        %2322 = vmatprep.subr.bf16.mxu0 0
        %2323 = vmatpush1.bf16.msra.mxu0 %v1734
        %2324 = vmatprep.subr.bf16.mxu0 0
        %2325 = vmatpush1.bf16.msra.mxu0 %v1733
        %2326 = vmatprep.subr.bf16.mxu0 0
        %2327 = vmatpush1.bf16.msra.mxu0 %v1732
        %2328 = vmatprep.subr.bf16.mxu0 0
        %2329 = vmatpush1.bf16.msra.mxu0 %v1731
        %2330 = vmatprep.subr.bf16.mxu0 0
        %2331 = vmatpush1.bf16.msra.mxu0 %v1730
        %2332 = vmatprep.subr.bf16.mxu0 0
        %2333 = vmatpush1.bf16.msra.mxu0 %v1729
        %2334 = vmatprep.subr.bf16.mxu0 0
        %2335 = vmatpush2.bf16.msra.mxu0 %v1744
        %2336 = vmatprep.subr.bf16.mxu0 0
        %2337 = vmatpush2.bf16.msra.mxu0 %v1743
        %2338 = vmatprep.subr.bf16.mxu0 0
        %2339 = vmatpush2.bf16.msra.mxu0 %v1742
        %2340 = vmatprep.subr.bf16.mxu0 0
        %2341 = vmatpush2.bf16.msra.mxu0 %v1741
        %2342 = vmatprep.subr.bf16.mxu0 0
        %2343 = vmatpush2.bf16.msra.mxu0 %v1740
        %2344 = vmatprep.subr.bf16.mxu0 0
        %2345 = vmatpush2.bf16.msra.mxu0 %v1739
        %2346 = vmatprep.subr.bf16.mxu0 0
        %2347 = vmatpush2.bf16.msra.mxu0 %v1738
        %2348 = vmatprep.subr.bf16.mxu0 0
        %2349 = vmatpush2.bf16.msra.mxu0 %v1737
        %2350 = vmatprep.mubr.bf16.mxu0 %v839
        %2351 = vmatmul.mubr.bf16.gmra.mxu0 %v838
        %v2352 = vpop.f32.mrf.mxu0
        %v2353 = vadd.f32 %v2312, %v2352
        %v2354 = vpop.f32.mrf.mxu0
        %v2355 = vpop.f32.mrf.mxu0
        %v2356 = vadd.f32 %v2315, %v2355
        %v2357 = vpop.f32.mrf.mxu0
        %2358 = vdwg.mxu0
        %2359 = vmatprep.subr.bf16.mxu0 0
        %2360 = vmatpush1.bf16.msra.mxu0 %v1752
        %2361 = vmatprep.subr.bf16.mxu0 0
        %2362 = vmatpush1.bf16.msra.mxu0 %v1751
        %2363 = vmatprep.subr.bf16.mxu0 0
        %2364 = vmatpush1.bf16.msra.mxu0 %v1750
        %2365 = vmatprep.subr.bf16.mxu0 0
        %2366 = vmatpush1.bf16.msra.mxu0 %v1749
        %2367 = vmatprep.subr.bf16.mxu0 0
        %2368 = vmatpush1.bf16.msra.mxu0 %v1748
        %2369 = vmatprep.subr.bf16.mxu0 0
        %2370 = vmatpush1.bf16.msra.mxu0 %v1747
        %2371 = vmatprep.subr.bf16.mxu0 0
        %2372 = vmatpush1.bf16.msra.mxu0 %v1746
        %2373 = vmatprep.subr.bf16.mxu0 0
        %2374 = vmatpush1.bf16.msra.mxu0 %v1745
        %2375 = vmatprep.subr.bf16.mxu0 0
        %2376 = vmatpush2.bf16.msra.mxu0 %v1760
        %2377 = vmatprep.subr.bf16.mxu0 0
        %2378 = vmatpush2.bf16.msra.mxu0 %v1759
        %2379 = vmatprep.subr.bf16.mxu0 0
        %2380 = vmatpush2.bf16.msra.mxu0 %v1758
        %2381 = vmatprep.subr.bf16.mxu0 0
        %2382 = vmatpush2.bf16.msra.mxu0 %v1757
        %2383 = vmatprep.subr.bf16.mxu0 0
        %2384 = vmatpush2.bf16.msra.mxu0 %v1756
        %2385 = vmatprep.subr.bf16.mxu0 0
        %2386 = vmatpush2.bf16.msra.mxu0 %v1755
        %2387 = vmatprep.subr.bf16.mxu0 0
        %2388 = vmatpush2.bf16.msra.mxu0 %v1754
        %2389 = vmatprep.subr.bf16.mxu0 0
        %2390 = vmatpush2.bf16.msra.mxu0 %v1753
        %2391 = vmatprep.mubr.bf16.mxu0 %v841
        %2392 = vmatmul.mubr.bf16.gmra.mxu0 %v840
        %v2393 = vpop.f32.mrf.mxu0
        %v2394 = vadd.f32 %v2353, %v2393
        %v2395 = vpop.f32.mrf.mxu0
        %v2396 = vpop.f32.mrf.mxu0
        %v2397 = vadd.f32 %v2356, %v2396
        %v2398 = vpop.f32.mrf.mxu0
        %2399 = vdwg.mxu0
        %2400 = vmatprep.subr.bf16.mxu0 0
        %2401 = vmatpush1.bf16.msra.mxu0 0
        %2402 = vmatprep.subr.bf16.mxu0 0
        %2403 = vmatpush1.bf16.msra.mxu0 0
        %2404 = vmatprep.subr.bf16.mxu0 0
        %2405 = vmatpush1.bf16.msra.mxu0 0
        %2406 = vmatprep.subr.bf16.mxu0 0
        %2407 = vmatpush1.bf16.msra.mxu0 0
        %2408 = vmatprep.subr.bf16.mxu0 0
        %2409 = vmatpush1.bf16.msra.mxu0 %v1764
        %2410 = vmatprep.subr.bf16.mxu0 0
        %2411 = vmatpush1.bf16.msra.mxu0 %v1763
        %2412 = vmatprep.subr.bf16.mxu0 0
        %2413 = vmatpush1.bf16.msra.mxu0 %v1762
        %2414 = vmatprep.subr.bf16.mxu0 0
        %2415 = vmatpush1.bf16.msra.mxu0 %v1761
        %2416 = vmatprep.subr.bf16.mxu0 0
        %2417 = vmatpush2.bf16.msra.mxu0 0
        %2418 = vmatprep.subr.bf16.mxu0 0
        %2419 = vmatpush2.bf16.msra.mxu0 0
        %2420 = vmatprep.subr.bf16.mxu0 0
        %2421 = vmatpush2.bf16.msra.mxu0 0
        %2422 = vmatprep.subr.bf16.mxu0 0
        %2423 = vmatpush2.bf16.msra.mxu0 0
        %2424 = vmatprep.subr.bf16.mxu0 0
        %2425 = vmatpush2.bf16.msra.mxu0 0
        %2426 = vmatprep.subr.bf16.mxu0 0
        %2427 = vmatpush2.bf16.msra.mxu0 0
        %2428 = vmatprep.subr.bf16.mxu0 0
        %2429 = vmatpush2.bf16.msra.mxu0 0
        %2430 = vmatprep.subr.bf16.mxu0 0
        %2431 = vmatpush2.bf16.msra.mxu0 0
        %2432 = vmatprep.mubr.bf16.mxu0 0
        %2433 = vmatmul.mubr.bf16.gmra.mxu0 %v1947
        %v2434 = vpop.f32.mrf.mxu0
        %v2435 = vadd.f32 %v2394, %v2434
        %v2436 = vpop.f32.mrf.mxu0
        %v2437 = vpop.f32.mrf.mxu0
        %v2438 = vadd.f32 %v2397, %v2437
        %v2439 = vpop.f32.mrf.mxu0
        %2440 = vdwg.mxu0
        %v2441 = vmax.f32 %v2435, 0.0
        %v2442 = vmax.f32 %v2438, 0.0
        %v2443 = vld [vmem:[%s2] sm:$0xff]
        %v2444 = vld [vmem:[%s2 + $0x8] sm:$0xff]
        %v2445 = vld [vmem:[%s2 + $0x10] sm:$0xff]
        %v2446 = vld [vmem:[%s2 + $0x18] sm:$0xff]
        %v2447 = vld [vmem:[%s2 + $0x20] sm:$0xff]
        %v2448 = vld [vmem:[%s2 + $0x28] sm:$0xff]
        %v2449 = vld [vmem:[%s2 + $0x30] sm:$0xff]
        %v2450 = vld [vmem:[%s2 + $0x38] sm:$0xff]
        %v2451 = vld [vmem:[%s2 + $0x40] sm:$0xff]
        %v2452 = vld [vmem:[%s2 + $0x48] sm:$0xff]
        %v2453 = vld [vmem:[%s2 + $0x50] sm:$0xff]
        %v2454 = vld [vmem:[%s2 + $0x58] sm:$0xff]
        %v2455 = vld [vmem:[%s2 + $0x60] sm:$0xff]
        %v2456 = vld [vmem:[%s2 + $0x68] sm:$0xff]
        %v2457 = vld [vmem:[%s2 + $0x70] sm:$0xff]
        %v2458 = vld [vmem:[%s2 + $0x78] sm:$0xff]
        %v2459 = vld [vmem:[%s9 + $0x1] ss:$0 sm:$0xff]
        %2460 = vmatprep.subr.mxu0 0.0
        %2461 = vmatpush1.msra.mxu0 %v2458
        %2462 = vmatprep.subr.mxu0 0.0
        %2463 = vmatpush1.msra.mxu0 %v2457
        %2464 = vmatprep.subr.mxu0 0.0
        %2465 = vmatpush1.msra.mxu0 %v2456
        %2466 = vmatprep.subr.mxu0 0.0
        %2467 = vmatpush1.msra.mxu0 %v2455
        %2468 = vmatprep.subr.mxu0 0.0
        %2469 = vmatpush1.msra.mxu0 %v2454
        %2470 = vmatprep.subr.mxu0 0.0
        %2471 = vmatpush1.msra.mxu0 %v2453
        %2472 = vmatprep.subr.mxu0 0.0
        %2473 = vmatpush1.msra.mxu0 %v2452
        %2474 = vmatprep.subr.mxu0 0.0
        %2475 = vmatpush1.msra.mxu0 %v2451
        %2476 = vmatprep.subr.mxu0 0.0
        %2477 = vmatpush1.msra.mxu0 %v2450
        %2478 = vmatprep.subr.mxu0 0.0
        %2479 = vmatpush1.msra.mxu0 %v2449
        %2480 = vmatprep.subr.mxu0 0.0
        %2481 = vmatpush1.msra.mxu0 %v2448
        %2482 = vmatprep.subr.mxu0 0.0
        %2483 = vmatpush1.msra.mxu0 %v2447
        %2484 = vmatprep.subr.mxu0 0.0
        %2485 = vmatpush1.msra.mxu0 %v2446
        %2486 = vmatprep.subr.mxu0 0.0
        %2487 = vmatpush1.msra.mxu0 %v2445
        %2488 = vmatprep.subr.mxu0 0.0
        %2489 = vmatpush1.msra.mxu0 %v2444
        %2490 = vmatprep.subr.mxu0 0.0
        %2491 = vmatpush1.msra.mxu0 %v2443
        %2492 = vmatprep.subr.mxu0 0.0
        %2493 = vmatpush2.msra.mxu0 0.0
        %2494 = vmatprep.subr.mxu0 0.0
        %2495 = vmatpush2.msra.mxu0 0.0
        %2496 = vmatprep.subr.mxu0 0.0
        %2497 = vmatpush2.msra.mxu0 0.0
        %2498 = vmatprep.subr.mxu0 0.0
        %2499 = vmatpush2.msra.mxu0 0.0
        %2500 = vmatprep.subr.mxu0 0.0
        %2501 = vmatpush2.msra.mxu0 0.0
        %2502 = vmatprep.subr.mxu0 0.0
        %2503 = vmatpush2.msra.mxu0 0.0
        %2504 = vmatprep.subr.mxu0 0.0
        %2505 = vmatpush2.msra.mxu0 0.0
        %2506 = vmatprep.subr.mxu0 0.0
        %2507 = vmatpush2.msra.mxu0 0.0
        %2508 = vmatprep.subr.mxu0 0.0
        %2509 = vmatpush2.msra.mxu0 0.0
        %2510 = vmatprep.subr.mxu0 0.0
        %2511 = vmatpush2.msra.mxu0 0.0
        %2512 = vmatprep.subr.mxu0 0.0
        %2513 = vmatpush2.msra.mxu0 0.0
        %2514 = vmatprep.subr.mxu0 0.0
        %2515 = vmatpush2.msra.mxu0 0.0
        %2516 = vmatprep.subr.mxu0 0.0
        %2517 = vmatpush2.msra.mxu0 0.0
        %2518 = vmatprep.subr.mxu0 0.0
        %2519 = vmatpush2.msra.mxu0 0.0
        %2520 = vmatprep.subr.mxu0 0.0
        %2521 = vmatpush2.msra.mxu0 0.0
        %2522 = vmatprep.subr.mxu0 0.0
        %2523 = vmatpush2.msra.mxu0 0.0
        %2524 = vmatprep.mubr.f32.mxu0 0.0
        %2525 = vmatmul.mubr.f32.gmra.mxu0 %v2441
        %v2526 = vpop.f32.mrf.mxu0
        %v2527 = vadd.f32 %v2459, %v2526
        %v2528 = vpop.f32.mrf.mxu0
        %2529 = vmatprep.mubr.f32.mxu0 0.0
        %2530 = vmatmul.mubr.f32.gmra.mxu0 %v2442
        %v2531 = vpop.f32.mrf.mxu0
        %v2532 = vadd.f32 %v2459, %v2531
        %v2533 = vpop.f32.mrf.mxu0
        %2534 = vdwg.mxu0
        %v2535 = vmax.f32 %v2527, 0.0
        %v2536 = vmax.f32 %v2532, 0.0
        %v2537 = vld [vmem:[%s3] sm:$0xff]
        %v2538 = vld [vmem:[%s3 + $0x8] sm:$0xff]
        %v2539 = vld [vmem:[%s3 + $0x10] sm:$0xff]
        %v2540 = vld [vmem:[%s3 + $0x18] sm:$0xff]
        %v2541 = vld [vmem:[%s3 + $0x20] sm:$0xff]
        %v2542 = vld [vmem:[%s3 + $0x28] sm:$0xff]
        %v2543 = vld [vmem:[%s3 + $0x30] sm:$0xff]
        %v2544 = vld [vmem:[%s3 + $0x38] sm:$0xff]
        %v2545 = vld [vmem:[%s3 + $0x40] sm:$0xff]
        %v2546 = vld [vmem:[%s3 + $0x48] sm:$0xff]
        %v2547 = vld [vmem:[%s3 + $0x50] sm:$0xff]
        %v2548 = vld [vmem:[%s3 + $0x58] sm:$0xff]
        %v2549 = vld [vmem:[%s3 + $0x60] sm:$0xff]
        %v2550 = vld [vmem:[%s3 + $0x68] sm:$0xff]
        %v2551 = vld [vmem:[%s3 + $0x70] sm:$0xff]
        %v2552 = vld [vmem:[%s3 + $0x78] sm:$0xff]
        %v2553 = vld [vmem:[%s9 + $0x2] ss:$0 sm:$0xff]
        %2554 = vmatprep.subr.mxu0 0.0
        %2555 = vmatpush1.msra.mxu0 %v2552
        %2556 = vmatprep.subr.mxu0 0.0
        %2557 = vmatpush1.msra.mxu0 %v2551
        %2558 = vmatprep.subr.mxu0 0.0
        %2559 = vmatpush1.msra.mxu0 %v2550
        %2560 = vmatprep.subr.mxu0 0.0
        %2561 = vmatpush1.msra.mxu0 %v2549
        %2562 = vmatprep.subr.mxu0 0.0
        %2563 = vmatpush1.msra.mxu0 %v2548
        %2564 = vmatprep.subr.mxu0 0.0
        %2565 = vmatpush1.msra.mxu0 %v2547
        %2566 = vmatprep.subr.mxu0 0.0
        %2567 = vmatpush1.msra.mxu0 %v2546
        %2568 = vmatprep.subr.mxu0 0.0
        %2569 = vmatpush1.msra.mxu0 %v2545
        %2570 = vmatprep.subr.mxu0 0.0
        %2571 = vmatpush1.msra.mxu0 %v2544
        %2572 = vmatprep.subr.mxu0 0.0
        %2573 = vmatpush1.msra.mxu0 %v2543
        %2574 = vmatprep.subr.mxu0 0.0
        %2575 = vmatpush1.msra.mxu0 %v2542
        %2576 = vmatprep.subr.mxu0 0.0
        %2577 = vmatpush1.msra.mxu0 %v2541
        %2578 = vmatprep.subr.mxu0 0.0
        %2579 = vmatpush1.msra.mxu0 %v2540
        %2580 = vmatprep.subr.mxu0 0.0
        %2581 = vmatpush1.msra.mxu0 %v2539
        %2582 = vmatprep.subr.mxu0 0.0
        %2583 = vmatpush1.msra.mxu0 %v2538
        %2584 = vmatprep.subr.mxu0 0.0
        %2585 = vmatpush1.msra.mxu0 %v2537
        %2586 = vmatprep.subr.mxu0 0.0
        %2587 = vmatpush2.msra.mxu0 0.0
        %2588 = vmatprep.subr.mxu0 0.0
        %2589 = vmatpush2.msra.mxu0 0.0
        %2590 = vmatprep.subr.mxu0 0.0
        %2591 = vmatpush2.msra.mxu0 0.0
        %2592 = vmatprep.subr.mxu0 0.0
        %2593 = vmatpush2.msra.mxu0 0.0
        %2594 = vmatprep.subr.mxu0 0.0
        %2595 = vmatpush2.msra.mxu0 0.0
        %2596 = vmatprep.subr.mxu0 0.0
        %2597 = vmatpush2.msra.mxu0 0.0
        %2598 = vmatprep.subr.mxu0 0.0
        %2599 = vmatpush2.msra.mxu0 0.0
        %2600 = vmatprep.subr.mxu0 0.0
        %2601 = vmatpush2.msra.mxu0 0.0
        %2602 = vmatprep.subr.mxu0 0.0
        %2603 = vmatpush2.msra.mxu0 0.0
        %2604 = vmatprep.subr.mxu0 0.0
        %2605 = vmatpush2.msra.mxu0 0.0
        %2606 = vmatprep.subr.mxu0 0.0
        %2607 = vmatpush2.msra.mxu0 0.0
        %2608 = vmatprep.subr.mxu0 0.0
        %2609 = vmatpush2.msra.mxu0 0.0
        %2610 = vmatprep.subr.mxu0 0.0
        %2611 = vmatpush2.msra.mxu0 0.0
        %2612 = vmatprep.subr.mxu0 0.0
        %2613 = vmatpush2.msra.mxu0 0.0
        %2614 = vmatprep.subr.mxu0 0.0
        %2615 = vmatpush2.msra.mxu0 0.0
        %2616 = vmatprep.subr.mxu0 0.0
        %2617 = vmatpush2.msra.mxu0 0.0
        %2618 = vmatprep.mubr.f32.mxu0 0.0
        %2619 = vmatmul.mubr.f32.gmra.mxu0 %v2535
        %v2620 = vpop.f32.mrf.mxu0
        %v2621 = vadd.f32 %v2553, %v2620
        %v2622 = vpop.f32.mrf.mxu0
        %2623 = vmatprep.mubr.f32.mxu0 0.0
        %2624 = vmatmul.mubr.f32.gmra.mxu0 %v2536
        %v2625 = vpop.f32.mrf.mxu0
        %v2626 = vadd.f32 %v2553, %v2625
        %v2627 = vpop.f32.mrf.mxu0
        %2628 = vdwg.mxu0
        %v2629 = vmax.f32 %v2621, 0.0
        %v2630 = vmax.f32 %v2626, 0.0
        %v2631 = vld [vmem:[%s4] sm:$0xff]
        %v2632 = vld [vmem:[%s4 + $0x8] sm:$0xff]
        %v2633 = vld [vmem:[%s4 + $0x10] sm:$0xff]
        %v2634 = vld [vmem:[%s4 + $0x18] sm:$0xff]
        %v2635 = vld [vmem:[%s4 + $0x20] sm:$0xff]
        %v2636 = vld [vmem:[%s4 + $0x28] sm:$0xff]
        %v2637 = vld [vmem:[%s4 + $0x30] sm:$0xff]
        %v2638 = vld [vmem:[%s4 + $0x38] sm:$0xff]
        %v2639 = vld [vmem:[%s4 + $0x40] sm:$0xff]
        %v2640 = vld [vmem:[%s4 + $0x48] sm:$0xff]
        %v2641 = vld [vmem:[%s4 + $0x50] sm:$0xff]
        %v2642 = vld [vmem:[%s4 + $0x58] sm:$0xff]
        %v2643 = vld [vmem:[%s4 + $0x60] sm:$0xff]
        %v2644 = vld [vmem:[%s4 + $0x68] sm:$0xff]
        %v2645 = vld [vmem:[%s4 + $0x70] sm:$0xff]
        %v2646 = vld [vmem:[%s4 + $0x78] sm:$0xff]
        %v2647 = vld [vmem:[%s9 + $0x3] ss:$0 sm:$0xff]
        %2648 = vmatprep.subr.mxu0 0.0
        %2649 = vmatpush1.msra.mxu0 %v2646
        %2650 = vmatprep.subr.mxu0 0.0
        %2651 = vmatpush1.msra.mxu0 %v2645
        %2652 = vmatprep.subr.mxu0 0.0
        %2653 = vmatpush1.msra.mxu0 %v2644
        %2654 = vmatprep.subr.mxu0 0.0
        %2655 = vmatpush1.msra.mxu0 %v2643
        %2656 = vmatprep.subr.mxu0 0.0
        %2657 = vmatpush1.msra.mxu0 %v2642
        %2658 = vmatprep.subr.mxu0 0.0
        %2659 = vmatpush1.msra.mxu0 %v2641
        %2660 = vmatprep.subr.mxu0 0.0
        %2661 = vmatpush1.msra.mxu0 %v2640
        %2662 = vmatprep.subr.mxu0 0.0
        %2663 = vmatpush1.msra.mxu0 %v2639
        %2664 = vmatprep.subr.mxu0 0.0
        %2665 = vmatpush1.msra.mxu0 %v2638
        %2666 = vmatprep.subr.mxu0 0.0
        %2667 = vmatpush1.msra.mxu0 %v2637
        %2668 = vmatprep.subr.mxu0 0.0
        %2669 = vmatpush1.msra.mxu0 %v2636
        %2670 = vmatprep.subr.mxu0 0.0
        %2671 = vmatpush1.msra.mxu0 %v2635
        %2672 = vmatprep.subr.mxu0 0.0
        %2673 = vmatpush1.msra.mxu0 %v2634
        %2674 = vmatprep.subr.mxu0 0.0
        %2675 = vmatpush1.msra.mxu0 %v2633
        %2676 = vmatprep.subr.mxu0 0.0
        %2677 = vmatpush1.msra.mxu0 %v2632
        %2678 = vmatprep.subr.mxu0 0.0
        %2679 = vmatpush1.msra.mxu0 %v2631
        %2680 = vmatprep.subr.mxu0 0.0
        %2681 = vmatpush2.msra.mxu0 0.0
        %2682 = vmatprep.subr.mxu0 0.0
        %2683 = vmatpush2.msra.mxu0 0.0
        %2684 = vmatprep.subr.mxu0 0.0
        %2685 = vmatpush2.msra.mxu0 0.0
        %2686 = vmatprep.subr.mxu0 0.0
        %2687 = vmatpush2.msra.mxu0 0.0
        %2688 = vmatprep.subr.mxu0 0.0
        %2689 = vmatpush2.msra.mxu0 0.0
        %2690 = vmatprep.subr.mxu0 0.0
        %2691 = vmatpush2.msra.mxu0 0.0
        %2692 = vmatprep.subr.mxu0 0.0
        %2693 = vmatpush2.msra.mxu0 0.0
        %2694 = vmatprep.subr.mxu0 0.0
        %2695 = vmatpush2.msra.mxu0 0.0
        %2696 = vmatprep.subr.mxu0 0.0
        %2697 = vmatpush2.msra.mxu0 0.0
        %2698 = vmatprep.subr.mxu0 0.0
        %2699 = vmatpush2.msra.mxu0 0.0
        %2700 = vmatprep.subr.mxu0 0.0
        %2701 = vmatpush2.msra.mxu0 0.0
        %2702 = vmatprep.subr.mxu0 0.0
        %2703 = vmatpush2.msra.mxu0 0.0
        %2704 = vmatprep.subr.mxu0 0.0
        %2705 = vmatpush2.msra.mxu0 0.0
        %2706 = vmatprep.subr.mxu0 0.0
        %2707 = vmatpush2.msra.mxu0 0.0
        %2708 = vmatprep.subr.mxu0 0.0
        %2709 = vmatpush2.msra.mxu0 0.0
        %2710 = vmatprep.subr.mxu0 0.0
        %2711 = vmatpush2.msra.mxu0 0.0
        %2712 = vmatprep.mubr.f32.mxu0 0.0
        %2713 = vmatmul.mubr.f32.gmra.mxu0 %v2629
        %v2714 = vpop.f32.mrf.mxu0
        %v2715 = vadd.f32 %v2647, %v2714
        %v2716 = vpop.f32.mrf.mxu0
        %2717 = vmatprep.mubr.f32.mxu0 0.0
        %2718 = vmatmul.mubr.f32.gmra.mxu0 %v2630
        %v2719 = vpop.f32.mrf.mxu0
        %v2720 = vadd.f32 %v2647, %v2719
        %v2721 = vpop.f32.mrf.mxu0
        %2722 = vdwg.mxu0
        %v2723 = vld [vmem:[%s5] sm:$0xff]
        %v2724 = vld [vmem:[%s5 + $0x8] sm:$0xff]
        %v2725 = vld [vmem:[%s5 + $0x10] sm:$0xff]
        %v2726 = vld [vmem:[%s5 + $0x18] sm:$0xff]
        %v2727 = vld [vmem:[%s5 + $0x20] sm:$0xff]
        %v2728 = vld [vmem:[%s5 + $0x28] sm:$0xff]
        %v2729 = vld [vmem:[%s5 + $0x30] sm:$0xff]
        %v2730 = vld [vmem:[%s5 + $0x38] sm:$0xff]
        %v2731 = vld [vmem:[%s5 + $0x40] sm:$0xff]
        %v2732 = vld [vmem:[%s5 + $0x48] sm:$0xff]
        %v2733 = vld [vmem:[%s5 + $0x50] sm:$0xff]
        %v2734 = vld [vmem:[%s5 + $0x58] sm:$0xff]
        %v2735 = vld [vmem:[%s5 + $0x60] sm:$0xff]
        %v2736 = vld [vmem:[%s5 + $0x68] sm:$0xff]
        %v2737 = vld [vmem:[%s5 + $0x70] sm:$0xff]
        %v2738 = vld [vmem:[%s5 + $0x78] sm:$0xff]
        %v2739 = vld [vmem:[%s9 + $0x4] ss:$0 sm:$0xff]
        %2740 = vmatprep.subr.mxu0 0.0
        %2741 = vmatpush1.msra.mxu0 %v2738
        %2742 = vmatprep.subr.mxu0 0.0
        %2743 = vmatpush1.msra.mxu0 %v2737
        %2744 = vmatprep.subr.mxu0 0.0
        %2745 = vmatpush1.msra.mxu0 %v2736
        %2746 = vmatprep.subr.mxu0 0.0
        %2747 = vmatpush1.msra.mxu0 %v2735
        %2748 = vmatprep.subr.mxu0 0.0
        %2749 = vmatpush1.msra.mxu0 %v2734
        %2750 = vmatprep.subr.mxu0 0.0
        %2751 = vmatpush1.msra.mxu0 %v2733
        %2752 = vmatprep.subr.mxu0 0.0
        %2753 = vmatpush1.msra.mxu0 %v2732
        %2754 = vmatprep.subr.mxu0 0.0
        %2755 = vmatpush1.msra.mxu0 %v2731
        %2756 = vmatprep.subr.mxu0 0.0
        %2757 = vmatpush1.msra.mxu0 %v2730
        %2758 = vmatprep.subr.mxu0 0.0
        %2759 = vmatpush1.msra.mxu0 %v2729
        %2760 = vmatprep.subr.mxu0 0.0
        %2761 = vmatpush1.msra.mxu0 %v2728
        %2762 = vmatprep.subr.mxu0 0.0
        %2763 = vmatpush1.msra.mxu0 %v2727
        %2764 = vmatprep.subr.mxu0 0.0
        %2765 = vmatpush1.msra.mxu0 %v2726
        %2766 = vmatprep.subr.mxu0 0.0
        %2767 = vmatpush1.msra.mxu0 %v2725
        %2768 = vmatprep.subr.mxu0 0.0
        %2769 = vmatpush1.msra.mxu0 %v2724
        %2770 = vmatprep.subr.mxu0 0.0
        %2771 = vmatpush1.msra.mxu0 %v2723
        %2772 = vmatprep.subr.mxu0 0.0
        %2773 = vmatpush2.msra.mxu0 0.0
        %2774 = vmatprep.subr.mxu0 0.0
        %2775 = vmatpush2.msra.mxu0 0.0
        %2776 = vmatprep.subr.mxu0 0.0
        %2777 = vmatpush2.msra.mxu0 0.0
        %2778 = vmatprep.subr.mxu0 0.0
        %2779 = vmatpush2.msra.mxu0 0.0
        %2780 = vmatprep.subr.mxu0 0.0
        %2781 = vmatpush2.msra.mxu0 0.0
        %2782 = vmatprep.subr.mxu0 0.0
        %2783 = vmatpush2.msra.mxu0 0.0
        %2784 = vmatprep.subr.mxu0 0.0
        %2785 = vmatpush2.msra.mxu0 0.0
        %2786 = vmatprep.subr.mxu0 0.0
        %2787 = vmatpush2.msra.mxu0 0.0
        %2788 = vmatprep.subr.mxu0 0.0
        %2789 = vmatpush2.msra.mxu0 0.0
        %2790 = vmatprep.subr.mxu0 0.0
        %2791 = vmatpush2.msra.mxu0 0.0
        %2792 = vmatprep.subr.mxu0 0.0
        %2793 = vmatpush2.msra.mxu0 0.0
        %2794 = vmatprep.subr.mxu0 0.0
        %2795 = vmatpush2.msra.mxu0 0.0
        %2796 = vmatprep.subr.mxu0 0.0
        %2797 = vmatpush2.msra.mxu0 0.0
        %2798 = vmatprep.subr.mxu0 0.0
        %2799 = vmatpush2.msra.mxu0 0.0
        %2800 = vmatprep.subr.mxu0 0.0
        %2801 = vmatpush2.msra.mxu0 0.0
        %2802 = vmatprep.subr.mxu0 0.0
        %2803 = vmatpush2.msra.mxu0 0.0
        %2804 = vmatprep.mubr.f32.mxu0 0.0
        %2805 = vmatmul.mubr.f32.gmra.mxu0 %v2715
        %v2806 = vpop.f32.mrf.mxu0
        %v2807 = vadd.f32 %v2739, %v2806
        %v2808 = vpop.f32.mrf.mxu0
        %2809 = vmatprep.mubr.f32.mxu0 0.0
        %2810 = vmatmul.mubr.f32.gmra.mxu0 %v2720
        %v2811 = vpop.f32.mrf.mxu0
        %v2812 = vadd.f32 %v2739, %v2811
        %v2813 = vpop.f32.mrf.mxu0
        %2814 = vdwg.mxu0
        %v2815 = vmax.f32 %v2807, 0.0
        %v2816 = vmax.f32 %v2812, 0.0
        %v2817 = vld [vmem:[%s6] sm:$0xff]
        %v2818 = vld [vmem:[%s6 + $0x8] sm:$0xff]
        %v2819 = vld [vmem:[%s6 + $0x10] sm:$0xff]
        %v2820 = vld [vmem:[%s6 + $0x18] sm:$0xff]
        %v2821 = vld [vmem:[%s6 + $0x20] sm:$0xff]
        %v2822 = vld [vmem:[%s6 + $0x28] sm:$0xff]
        %v2823 = vld [vmem:[%s6 + $0x30] sm:$0xff]
        %v2824 = vld [vmem:[%s6 + $0x38] sm:$0xff]
        %v2825 = vld [vmem:[%s6 + $0x40] sm:$0xff]
        %v2826 = vld [vmem:[%s6 + $0x48] sm:$0xff]
        %v2827 = vld [vmem:[%s6 + $0x50] sm:$0xff]
        %v2828 = vld [vmem:[%s6 + $0x58] sm:$0xff]
        %v2829 = vld [vmem:[%s6 + $0x60] sm:$0xff]
        %v2830 = vld [vmem:[%s6 + $0x68] sm:$0xff]
        %v2831 = vld [vmem:[%s6 + $0x70] sm:$0xff]
        %v2832 = vld [vmem:[%s6 + $0x78] sm:$0xff]
        %v2833 = vld [vmem:[%s9 + $0x5] ss:$0 sm:$0xff]
        %2834 = vmatprep.subr.mxu0 0.0
        %2835 = vmatpush1.msra.mxu0 %v2832
        %2836 = vmatprep.subr.mxu0 0.0
        %2837 = vmatpush1.msra.mxu0 %v2831
        %2838 = vmatprep.subr.mxu0 0.0
        %2839 = vmatpush1.msra.mxu0 %v2830
        %2840 = vmatprep.subr.mxu0 0.0
        %2841 = vmatpush1.msra.mxu0 %v2829
        %2842 = vmatprep.subr.mxu0 0.0
        %2843 = vmatpush1.msra.mxu0 %v2828
        %2844 = vmatprep.subr.mxu0 0.0
        %2845 = vmatpush1.msra.mxu0 %v2827
        %2846 = vmatprep.subr.mxu0 0.0
        %2847 = vmatpush1.msra.mxu0 %v2826
        %2848 = vmatprep.subr.mxu0 0.0
        %2849 = vmatpush1.msra.mxu0 %v2825
        %2850 = vmatprep.subr.mxu0 0.0
        %2851 = vmatpush1.msra.mxu0 %v2824
        %2852 = vmatprep.subr.mxu0 0.0
        %2853 = vmatpush1.msra.mxu0 %v2823
        %2854 = vmatprep.subr.mxu0 0.0
        %2855 = vmatpush1.msra.mxu0 %v2822
        %2856 = vmatprep.subr.mxu0 0.0
        %2857 = vmatpush1.msra.mxu0 %v2821
        %2858 = vmatprep.subr.mxu0 0.0
        %2859 = vmatpush1.msra.mxu0 %v2820
        %2860 = vmatprep.subr.mxu0 0.0
        %2861 = vmatpush1.msra.mxu0 %v2819
        %2862 = vmatprep.subr.mxu0 0.0
        %2863 = vmatpush1.msra.mxu0 %v2818
        %2864 = vmatprep.subr.mxu0 0.0
        %2865 = vmatpush1.msra.mxu0 %v2817
        %2866 = vmatprep.subr.mxu0 0.0
        %2867 = vmatpush2.msra.mxu0 0.0
        %2868 = vmatprep.subr.mxu0 0.0
        %2869 = vmatpush2.msra.mxu0 0.0
        %2870 = vmatprep.subr.mxu0 0.0
        %2871 = vmatpush2.msra.mxu0 0.0
        %2872 = vmatprep.subr.mxu0 0.0
        %2873 = vmatpush2.msra.mxu0 0.0
        %2874 = vmatprep.subr.mxu0 0.0
        %2875 = vmatpush2.msra.mxu0 0.0
        %2876 = vmatprep.subr.mxu0 0.0
        %2877 = vmatpush2.msra.mxu0 0.0
        %2878 = vmatprep.subr.mxu0 0.0
        %2879 = vmatpush2.msra.mxu0 0.0
        %2880 = vmatprep.subr.mxu0 0.0
        %2881 = vmatpush2.msra.mxu0 0.0
        %2882 = vmatprep.subr.mxu0 0.0
        %2883 = vmatpush2.msra.mxu0 0.0
        %2884 = vmatprep.subr.mxu0 0.0
        %2885 = vmatpush2.msra.mxu0 0.0
        %2886 = vmatprep.subr.mxu0 0.0
        %2887 = vmatpush2.msra.mxu0 0.0
        %2888 = vmatprep.subr.mxu0 0.0
        %2889 = vmatpush2.msra.mxu0 0.0
        %2890 = vmatprep.subr.mxu0 0.0
        %2891 = vmatpush2.msra.mxu0 0.0
        %2892 = vmatprep.subr.mxu0 0.0
        %2893 = vmatpush2.msra.mxu0 0.0
        %2894 = vmatprep.subr.mxu0 0.0
        %2895 = vmatpush2.msra.mxu0 0.0
        %2896 = vmatprep.subr.mxu0 0.0
        %2897 = vmatpush2.msra.mxu0 0.0
        %2898 = vmatprep.mubr.f32.mxu0 0.0
        %2899 = vmatmul.mubr.f32.gmra.mxu0 %v2815
        %v2900 = vpop.f32.mrf.mxu0
        %v2901 = vadd.f32 %v2833, %v2900
        %v2902 = vpop.f32.mrf.mxu0
        %2903 = vmatprep.mubr.f32.mxu0 0.0
        %2904 = vmatmul.mubr.f32.gmra.mxu0 %v2816
        %v2905 = vpop.f32.mrf.mxu0
        %v2906 = vadd.f32 %v2833, %v2905
        %v2907 = vpop.f32.mrf.mxu0
        %2908 = vdwg.mxu0
        %v2909 = vmax.f32 %v2901, 0.0
        %v2910 = vmax.f32 %v2906, 0.0
        %v2911 = vld [vmem:[%s7] sm:$0xff]
        %v2912 = vld [vmem:[%s7 + $0x8] sm:$0xff]
        %v2913 = vld [vmem:[%s7 + $0x10] sm:$0xff]
        %v2914 = vld [vmem:[%s7 + $0x18] sm:$0xff]
        %v2915 = vld [vmem:[%s7 + $0x20] sm:$0xff]
        %v2916 = vld [vmem:[%s7 + $0x28] sm:$0xff]
        %v2917 = vld [vmem:[%s7 + $0x30] sm:$0xff]
        %v2918 = vld [vmem:[%s7 + $0x38] sm:$0xff]
        %v2919 = vld [vmem:[%s7 + $0x40] sm:$0xff]
        %v2920 = vld [vmem:[%s7 + $0x48] sm:$0xff]
        %v2921 = vld [vmem:[%s7 + $0x50] sm:$0xff]
        %v2922 = vld [vmem:[%s7 + $0x58] sm:$0xff]
        %v2923 = vld [vmem:[%s7 + $0x60] sm:$0xff]
        %v2924 = vld [vmem:[%s7 + $0x68] sm:$0xff]
        %v2925 = vld [vmem:[%s7 + $0x70] sm:$0xff]
        %v2926 = vld [vmem:[%s7 + $0x78] sm:$0xff]
        %v2927 = vld [vmem:[%s9 + $0x6] ss:$0 sm:$0xff]
        %2928 = vmatprep.subr.mxu0 0.0
        %2929 = vmatpush1.msra.mxu0 %v2926
        %2930 = vmatprep.subr.mxu0 0.0
        %2931 = vmatpush1.msra.mxu0 %v2925
        %2932 = vmatprep.subr.mxu0 0.0
        %2933 = vmatpush1.msra.mxu0 %v2924
        %2934 = vmatprep.subr.mxu0 0.0
        %2935 = vmatpush1.msra.mxu0 %v2923
        %2936 = vmatprep.subr.mxu0 0.0
        %2937 = vmatpush1.msra.mxu0 %v2922
        %2938 = vmatprep.subr.mxu0 0.0
        %2939 = vmatpush1.msra.mxu0 %v2921
        %2940 = vmatprep.subr.mxu0 0.0
        %2941 = vmatpush1.msra.mxu0 %v2920
        %2942 = vmatprep.subr.mxu0 0.0
        %2943 = vmatpush1.msra.mxu0 %v2919
        %2944 = vmatprep.subr.mxu0 0.0
        %2945 = vmatpush1.msra.mxu0 %v2918
        %2946 = vmatprep.subr.mxu0 0.0
        %2947 = vmatpush1.msra.mxu0 %v2917
        %2948 = vmatprep.subr.mxu0 0.0
        %2949 = vmatpush1.msra.mxu0 %v2916
        %2950 = vmatprep.subr.mxu0 0.0
        %2951 = vmatpush1.msra.mxu0 %v2915
        %2952 = vmatprep.subr.mxu0 0.0
        %2953 = vmatpush1.msra.mxu0 %v2914
        %2954 = vmatprep.subr.mxu0 0.0
        %2955 = vmatpush1.msra.mxu0 %v2913
        %2956 = vmatprep.subr.mxu0 0.0
        %2957 = vmatpush1.msra.mxu0 %v2912
        %2958 = vmatprep.subr.mxu0 0.0
        %2959 = vmatpush1.msra.mxu0 %v2911
        %2960 = vmatprep.subr.mxu0 0.0
        %2961 = vmatpush2.msra.mxu0 0.0
        %2962 = vmatprep.subr.mxu0 0.0
        %2963 = vmatpush2.msra.mxu0 0.0
        %2964 = vmatprep.subr.mxu0 0.0
        %2965 = vmatpush2.msra.mxu0 0.0
        %2966 = vmatprep.subr.mxu0 0.0
        %2967 = vmatpush2.msra.mxu0 0.0
        %2968 = vmatprep.subr.mxu0 0.0
        %2969 = vmatpush2.msra.mxu0 0.0
        %2970 = vmatprep.subr.mxu0 0.0
        %2971 = vmatpush2.msra.mxu0 0.0
        %2972 = vmatprep.subr.mxu0 0.0
        %2973 = vmatpush2.msra.mxu0 0.0
        %2974 = vmatprep.subr.mxu0 0.0
        %2975 = vmatpush2.msra.mxu0 0.0
        %2976 = vmatprep.subr.mxu0 0.0
        %2977 = vmatpush2.msra.mxu0 0.0
        %2978 = vmatprep.subr.mxu0 0.0
        %2979 = vmatpush2.msra.mxu0 0.0
        %2980 = vmatprep.subr.mxu0 0.0
        %2981 = vmatpush2.msra.mxu0 0.0
        %2982 = vmatprep.subr.mxu0 0.0
        %2983 = vmatpush2.msra.mxu0 0.0
        %2984 = vmatprep.subr.mxu0 0.0
        %2985 = vmatpush2.msra.mxu0 0.0
        %2986 = vmatprep.subr.mxu0 0.0
        %2987 = vmatpush2.msra.mxu0 0.0
        %2988 = vmatprep.subr.mxu0 0.0
        %2989 = vmatpush2.msra.mxu0 0.0
        %2990 = vmatprep.subr.mxu0 0.0
        %2991 = vmatpush2.msra.mxu0 0.0
        %2992 = vmatprep.mubr.f32.mxu0 0.0
        %2993 = vmatmul.mubr.f32.gmra.mxu0 %v2909
        %v2994 = vpop.f32.mrf.mxu0
        %v2995 = vadd.f32 %v2927, %v2994
        %v2996 = vpop.f32.mrf.mxu0
        %2997 = vmatprep.mubr.f32.mxu0 0.0
        %2998 = vmatmul.mubr.f32.gmra.mxu0 %v2910
        %v2999 = vpop.f32.mrf.mxu0
        %v3000 = vadd.f32 %v2927, %v2999
        %v3001 = vpop.f32.mrf.mxu0
        %3002 = vdwg.mxu0
        %v3003 = vmax.f32 %v2995, 0.0
        %v3004 = vmax.f32 %v3000, 0.0
        %v3005 = vpack.c.bf16 %v3004, %v3003
        %v3006 = vld [vmem:[%s8] sm:$0xff]
        %v3007 = vld [vmem:[%s8 + $0x8] sm:$0xff]
        %v3008 = vld [vmem:[%s8 + $0x10] sm:$0xff]
        %v3009 = vld [vmem:[%s8 + $0x18] sm:$0xff]
        %v3010 = vld [vmem:[%s8 + $0x20] sm:$0xff]
        %v3011 = vld [vmem:[%s8 + $0x28] sm:$0xff]
        %v3012 = vld [vmem:[%s8 + $0x30] sm:$0xff]
        %v3013 = vld [vmem:[%s8 + $0x38] sm:$0xff]
        %v3014 = vld [vmem:[%s8 + $0x40] sm:$0xff]
        %v3015 = vld [vmem:[%s8 + $0x48] sm:$0xff]
        %v3016 = vld [vmem:[%s8 + $0x50] sm:$0xff]
        %v3017 = vld [vmem:[%s8 + $0x58] sm:$0xf]
        %v3018 = vld [vmem:[%s8 + $0x5c] sm:$0xff]
        %v3019 = vld [vmem:[%s8 + $0x64] sm:$0xff]
        %v3020 = vld [vmem:[%s8 + $0x6c] sm:$0xff]
        %v3021 = vld [vmem:[%s8 + $0x74] sm:$0xff]
        %v3022 = vld [vmem:[%s8 + $0x7c] sm:$0xff]
        %v3023 = vld [vmem:[%s8 + $0x84] sm:$0xff]
        %v3024 = vld [vmem:[%s8 + $0x8c] sm:$0xff]
        %v3025 = vld [vmem:[%s8 + $0x94] sm:$0xff]
        %v3026 = vld [vmem:[%s8 + $0x9c] sm:$0xff]
        %v3027 = vld [vmem:[%s8 + $0xa4] sm:$0xff]
        %v3028 = vld [vmem:[%s8 + $0xac] sm:$0xff]
        %v3029 = vld [vmem:[%s8 + $0xb4] sm:$0xf]
        %v3030 = vld [vmem:[%s8 + $0xb8] sm:$0xff]
        %v3031 = vld [vmem:[%s8 + $0xc0] sm:$0xff]
        %v3032 = vld [vmem:[%s8 + $0xc8] sm:$0xff]
        %v3033 = vld [vmem:[%s8 + $0xd0] sm:$0xff]
        %v3034 = vld [vmem:[%s8 + $0xd8] sm:$0xff]
        %v3035 = vld [vmem:[%s8 + $0xe0] sm:$0xff]
        %v3036 = vld [vmem:[%s8 + $0xe8] sm:$0xff]
        %v3037 = vld [vmem:[%s8 + $0xf0] sm:$0xff]
        %v3038 = vld [vmem:[%s8 + $0xf8] sm:$0xff]
        %v3039 = vld [vmem:[%s8 + $0x100] sm:$0xff]
        %v3040 = vld [vmem:[%s8 + $0x108] sm:$0xff]
        %v3041 = vld [vmem:[%s8 + $0x110] sm:$0xf]
        %v3042 = vld [vmem:[%s8 + $0x114] sm:$0xff]
        %v3043 = vld [vmem:[%s8 + $0x11c] sm:$0xff]
        %v3044 = vld [vmem:[%s8 + $0x124] sm:$0xff]
        %v3045 = vld [vmem:[%s8 + $0x12c] sm:$0xff]
        %v3046 = vld [vmem:[%s8 + $0x134] sm:$0xff]
        %v3047 = vld [vmem:[%s8 + $0x13c] sm:$0xff]
        %v3048 = vld [vmem:[%s8 + $0x144] sm:$0xff]
        %v3049 = vld [vmem:[%s8 + $0x14c] sm:$0xff]
        %v3050 = vld [vmem:[%s8 + $0x154] sm:$0xff]
        %v3051 = vld [vmem:[%s8 + $0x15c] sm:$0xff]
        %v3052 = vld [vmem:[%s8 + $0x164] sm:$0xff]
        %v3053 = vld [vmem:[%s8 + $0x16c] sm:$0xf]
        %v3054 = vld [vmem:[%s8 + $0x170] sm:$0xff]
        %v3055 = vld [vmem:[%s8 + $0x178] sm:$0xff]
        %v3056 = vld [vmem:[%s8 + $0x180] sm:$0xff]
        %v3057 = vld [vmem:[%s8 + $0x188] sm:$0xff]
        %v3058 = vld [vmem:[%s8 + $0x190] sm:$0xff]
        %v3059 = vld [vmem:[%s8 + $0x198] sm:$0xff]
        %v3060 = vld [vmem:[%s8 + $0x1a0] sm:$0xff]
        %v3061 = vld [vmem:[%s8 + $0x1a8] sm:$0xff]
        %v3062 = vld [vmem:[%s8 + $0x1b0] sm:$0xff]
        %v3063 = vld [vmem:[%s8 + $0x1b8] sm:$0xff]
        %v3064 = vld [vmem:[%s8 + $0x1c0] sm:$0xff]
        %v3065 = vld [vmem:[%s8 + $0x1c8] sm:$0xf]
        %v3066 = vld [vmem:[%s8 + $0x1cc] sm:$0xff]
        %v3067 = vld [vmem:[%s8 + $0x1d4] sm:$0xff]
        %v3068 = vld [vmem:[%s8 + $0x1dc] sm:$0xff]
        %v3069 = vld [vmem:[%s8 + $0x1e4] sm:$0xff]
        %v3070 = vld [vmem:[%s8 + $0x1ec] sm:$0xff]
        %v3071 = vld [vmem:[%s8 + $0x1f4] sm:$0xff]
        %v3072 = vld [vmem:[%s8 + $0x1fc] sm:$0xff]
        %v3073 = vld [vmem:[%s8 + $0x204] sm:$0xff]
        %v3074 = vld [vmem:[%s8 + $0x20c] sm:$0xff]
        %v3075 = vld [vmem:[%s8 + $0x214] sm:$0xff]
        %v3076 = vld [vmem:[%s8 + $0x21c] sm:$0xff]
        %v3077 = vld [vmem:[%s8 + $0x224] sm:$0xf]
        %v3078 = vld [vmem:[%s8 + $0x228] sm:$0xff]
        %v3079 = vld [vmem:[%s8 + $0x230] sm:$0xff]
        %v3080 = vld [vmem:[%s8 + $0x238] sm:$0xff]
        %v3081 = vld [vmem:[%s8 + $0x240] sm:$0xff]
        %v3082 = vld [vmem:[%s8 + $0x248] sm:$0xff]
        %v3083 = vld [vmem:[%s8 + $0x250] sm:$0xff]
        %v3084 = vld [vmem:[%s8 + $0x258] sm:$0xff]
        %v3085 = vld [vmem:[%s8 + $0x260] sm:$0xff]
        %v3086 = vld [vmem:[%s8 + $0x268] sm:$0xff]
        %v3087 = vld [vmem:[%s8 + $0x270] sm:$0xff]
        %v3088 = vld [vmem:[%s8 + $0x278] sm:$0xff]
        %v3089 = vld [vmem:[%s8 + $0x280] sm:$0xf]
        %v3090 = vld [vmem:[%s8 + $0x284] sm:$0xff]
        %v3091 = vld [vmem:[%s8 + $0x28c] sm:$0xff]
        %v3092 = vld [vmem:[%s8 + $0x294] sm:$0xff]
        %v3093 = vld [vmem:[%s8 + $0x29c] sm:$0xff]
        %v3094 = vld [vmem:[%s8 + $0x2a4] sm:$0xff]
        %v3095 = vld [vmem:[%s8 + $0x2ac] sm:$0xff]
        %v3096 = vld [vmem:[%s8 + $0x2b4] sm:$0xff]
        %v3097 = vld [vmem:[%s8 + $0x2bc] sm:$0xff]
        %v3098 = vld [vmem:[%s8 + $0x2c4] sm:$0xff]
        %v3099 = vld [vmem:[%s8 + $0x2cc] sm:$0xff]
        %v3100 = vld [vmem:[%s8 + $0x2d4] sm:$0xff]
        %v3101 = vld [vmem:[%s8 + $0x2dc] sm:$0xf]
        %v3102 = vld [vmem:[%s8 + $0x2e0] sm:$0xff]
        %v3103 = vld [vmem:[%s8 + $0x2e8] sm:$0xff]
        %v3104 = vld [vmem:[%s8 + $0x2f0] sm:$0xff]
        %v3105 = vld [vmem:[%s8 + $0x2f8] sm:$0xff]
        %v3106 = vld [vmem:[%s8 + $0x300] sm:$0xff]
        %v3107 = vld [vmem:[%s8 + $0x308] sm:$0xff]
        %v3108 = vld [vmem:[%s8 + $0x310] sm:$0xff]
        %v3109 = vld [vmem:[%s8 + $0x318] sm:$0xff]
        %v3110 = vld [vmem:[%s8 + $0x320] sm:$0xff]
        %v3111 = vld [vmem:[%s8 + $0x328] sm:$0xff]
        %v3112 = vld [vmem:[%s8 + $0x330] sm:$0xff]
        %v3113 = vld [vmem:[%s8 + $0x338] sm:$0xf]
        %v3114 = vld [vmem:[%s8 + $0x33c] sm:$0xff]
        %v3115 = vld [vmem:[%s8 + $0x344] sm:$0xff]
        %v3116 = vld [vmem:[%s8 + $0x34c] sm:$0xff]
        %v3117 = vld [vmem:[%s8 + $0x354] sm:$0xff]
        %v3118 = vld [vmem:[%s8 + $0x35c] sm:$0xff]
        %v3119 = vld [vmem:[%s8 + $0x364] sm:$0xff]
        %v3120 = vld [vmem:[%s8 + $0x36c] sm:$0xff]
        %v3121 = vld [vmem:[%s8 + $0x374] sm:$0xff]
        %v3122 = vld [vmem:[%s8 + $0x37c] sm:$0xff]
        %v3123 = vld [vmem:[%s8 + $0x384] sm:$0xff]
        %v3124 = vld [vmem:[%s8 + $0x38c] sm:$0xff]
        %v3125 = vld [vmem:[%s8 + $0x394] sm:$0xf]
        %v3126 = vld [vmem:[%s8 + $0x398] sm:$0xff]
        %v3127 = vld [vmem:[%s8 + $0x3a0] sm:$0xff]
        %v3128 = vld [vmem:[%s8 + $0x3a8] sm:$0xff]
        %v3129 = vld [vmem:[%s8 + $0x3b0] sm:$0xff]
        %v3130 = vld [vmem:[%s8 + $0x3b8] sm:$0xff]
        %v3131 = vld [vmem:[%s8 + $0x3c0] sm:$0xff]
        %v3132 = vld [vmem:[%s8 + $0x3c8] sm:$0xff]
        %v3133 = vld [vmem:[%s8 + $0x3d0] sm:$0xff]
        %v3134 = vld [vmem:[%s8 + $0x3d8] sm:$0xff]
        %v3135 = vld [vmem:[%s8 + $0x3e0] sm:$0xff]
        %v3136 = vld [vmem:[%s8 + $0x3e8] sm:$0xff]
        %v3137 = vld [vmem:[%s8 + $0x3f0] sm:$0xf]
        %v3138 = vld [vmem:[%s8 + $0x3f4] sm:$0xff]
        %v3139 = vld [vmem:[%s8 + $0x3fc] sm:$0xff]
        %v3140 = vld [vmem:[%s8 + $0x404] sm:$0xff]
        %v3141 = vld [vmem:[%s8 + $0x40c] sm:$0xff]
        %v3142 = vld [vmem:[%s8 + $0x414] sm:$0xff]
        %v3143 = vld [vmem:[%s8 + $0x41c] sm:$0xff]
        %v3144 = vld [vmem:[%s8 + $0x424] sm:$0xff]
        %v3145 = vld [vmem:[%s8 + $0x42c] sm:$0xff]
        %v3146 = vld [vmem:[%s8 + $0x434] sm:$0xff]
        %v3147 = vld [vmem:[%s8 + $0x43c] sm:$0xff]
        %v3148 = vld [vmem:[%s8 + $0x444] sm:$0xff]
        %v3149 = vld [vmem:[%s8 + $0x44c] sm:$0xf]
        %v3150 = vld [vmem:[%s8 + $0x450] sm:$0xff]
        %v3151 = vld [vmem:[%s8 + $0x458] sm:$0xff]
        %v3152 = vld [vmem:[%s8 + $0x460] sm:$0xff]
        %v3153 = vld [vmem:[%s8 + $0x468] sm:$0xff]
        %v3154 = vld [vmem:[%s8 + $0x470] sm:$0xff]
        %v3155 = vld [vmem:[%s8 + $0x478] sm:$0xff]
        %v3156 = vld [vmem:[%s8 + $0x480] sm:$0xff]
        %v3157 = vld [vmem:[%s8 + $0x488] sm:$0xff]
        %v3158 = vld [vmem:[%s8 + $0x490] sm:$0xff]
        %v3159 = vld [vmem:[%s8 + $0x498] sm:$0xff]
        %v3160 = vld [vmem:[%s8 + $0x4a0] sm:$0xff]
        %v3161 = vld [vmem:[%s8 + $0x4a8] sm:$0xf]
        %v3162 = vld [vmem:[%s8 + $0x4ac] sm:$0xff]
        %v3163 = vld [vmem:[%s8 + $0x4b4] sm:$0xff]
        %v3164 = vld [vmem:[%s8 + $0x4bc] sm:$0xff]
        %v3165 = vld [vmem:[%s8 + $0x4c4] sm:$0xff]
        %v3166 = vld [vmem:[%s8 + $0x4cc] sm:$0xff]
        %v3167 = vld [vmem:[%s8 + $0x4d4] sm:$0xff]
        %v3168 = vld [vmem:[%s8 + $0x4dc] sm:$0xff]
        %v3169 = vld [vmem:[%s8 + $0x4e4] sm:$0xff]
        %v3170 = vld [vmem:[%s8 + $0x4ec] sm:$0xff]
        %v3171 = vld [vmem:[%s8 + $0x4f4] sm:$0xff]
        %v3172 = vld [vmem:[%s8 + $0x4fc] sm:$0xff]
        %v3173 = vld [vmem:[%s8 + $0x504] sm:$0xf]
        %v3174 = vld [vmem:[%s8 + $0x508] sm:$0xff]
        %v3175 = vld [vmem:[%s8 + $0x510] sm:$0xff]
        %v3176 = vld [vmem:[%s8 + $0x518] sm:$0xff]
        %v3177 = vld [vmem:[%s8 + $0x520] sm:$0xff]
        %v3178 = vld [vmem:[%s8 + $0x528] sm:$0xff]
        %v3179 = vld [vmem:[%s8 + $0x530] sm:$0xff]
        %v3180 = vld [vmem:[%s8 + $0x538] sm:$0xff]
        %v3181 = vld [vmem:[%s8 + $0x540] sm:$0xff]
        %v3182 = vld [vmem:[%s8 + $0x548] sm:$0xff]
        %v3183 = vld [vmem:[%s8 + $0x550] sm:$0xff]
        %v3184 = vld [vmem:[%s8 + $0x558] sm:$0xff]
        %v3185 = vld [vmem:[%s8 + $0x560] sm:$0xf]
        %v3186 = vld [vmem:[%s8 + $0x564] sm:$0xff]
        %v3187 = vld [vmem:[%s8 + $0x56c] sm:$0xff]
        %v3188 = vld [vmem:[%s8 + $0x574] sm:$0xff]
        %v3189 = vld [vmem:[%s8 + $0x57c] sm:$0xff]
        %v3190 = vld [vmem:[%s8 + $0x584] sm:$0xff]
        %v3191 = vld [vmem:[%s8 + $0x58c] sm:$0xff]
        %v3192 = vld [vmem:[%s8 + $0x594] sm:$0xff]
        %v3193 = vld [vmem:[%s8 + $0x59c] sm:$0xff]
        %v3194 = vld [vmem:[%s8 + $0x5a4] sm:$0xff]
        %v3195 = vld [vmem:[%s8 + $0x5ac] sm:$0xff]
        %v3196 = vld [vmem:[%s8 + $0x5b4] sm:$0xff]
        %v3197 = vld [vmem:[%s8 + $0x5bc] sm:$0xf]
        %s3198 = scalar_lea.vmem %s9, 7
        %v3199 = vld [vmem:[%s3198] ss:$8 sm:$0xf]
        %v3200 = vld [vmem:[%s3198] ss:$8 sm:$0xf0]
        %v3201 = vor.u32 %v3199, %v3200
        %s3202 = scalar_lea.vmem %s9, 71
        %v3203 = vld [vmem:[%s3202] ss:$8 sm:$0xf]
        %v3204 = vld [vmem:[%s3202] ss:$8 sm:$0xf0]
        %v3205 = vor.u32 %v3203, %v3204
        %s3206 = scalar_lea.vmem %s9, 135
        %v3207 = vld [vmem:[%s3206] ss:$8 sm:$0xf]
        %v3208 = vld [vmem:[%s3206] ss:$8 sm:$0x70]
        %v3209 = vor.u32 %v3207, %v3208
        %v3213 = vlaneseq
        %v3214 = vshrl.u32 %v3213, 7
        %v3215 = vsub.s32 0, %v3214
        %v3216 = vrot.slane %v3201, %v3215
        %v3217 = vlaneseq
        %v3218 = vshrl.u32 %v3217, 7
        %v3219 = vsub.s32 1, %v3218
        %v3220 = vrot.slane %v3201, %v3219
        %v3221 = vlaneseq
        %v3222 = vshrl.u32 %v3221, 7
        %v3223 = vsub.s32 2, %v3222
        %v3224 = vrot.slane %v3201, %v3223
        %v3225 = vlaneseq
        %v3226 = vshrl.u32 %v3225, 7
        %v3227 = vsub.s32 3, %v3226
        %v3228 = vrot.slane %v3201, %v3227
        %v3229 = vlaneseq
        %v3230 = vshrl.u32 %v3229, 7
        %v3231 = vsub.s32 4, %v3230
        %v3232 = vrot.slane %v3201, %v3231
        %v3233 = vlaneseq
        %v3234 = vshrl.u32 %v3233, 7
        %v3235 = vsub.s32 5, %v3234
        %v3236 = vrot.slane %v3201, %v3235
        %v3237 = vlaneseq
        %v3238 = vshrl.u32 %v3237, 7
        %v3239 = vsub.s32 6, %v3238
        %v3240 = vrot.slane %v3201, %v3239
        %v3241 = vlaneseq
        %v3242 = vshrl.u32 %v3241, 7
        %v3243 = vsub.s32 7, %v3242
        %v3244 = vrot.slane %v3201, %v3243
        %v3245 = vlaneseq
        %v3246 = vshrl.u32 %v3245, 7
        %v3247 = vsub.s32 0, %v3246
        %v3248 = vrot.slane %v3205, %v3247
        %v3249 = vlaneseq
        %v3250 = vshrl.u32 %v3249, 7
        %v3251 = vsub.s32 1, %v3250
        %v3252 = vrot.slane %v3205, %v3251
        %v3253 = vlaneseq
        %v3254 = vshrl.u32 %v3253, 7
        %v3255 = vsub.s32 2, %v3254
        %v3256 = vrot.slane %v3205, %v3255
        %v3257 = vlaneseq
        %v3258 = vshrl.u32 %v3257, 7
        %v3259 = vsub.s32 3, %v3258
        %v3260 = vrot.slane %v3205, %v3259
        %v3261 = vlaneseq
        %v3262 = vshrl.u32 %v3261, 7
        %v3263 = vsub.s32 4, %v3262
        %v3264 = vrot.slane %v3205, %v3263
        %v3265 = vlaneseq
        %v3266 = vshrl.u32 %v3265, 7
        %v3267 = vsub.s32 5, %v3266
        %v3268 = vrot.slane %v3205, %v3267
        %v3269 = vlaneseq
        %v3270 = vshrl.u32 %v3269, 7
        %v3271 = vsub.s32 6, %v3270
        %v3272 = vrot.slane %v3205, %v3271
        %v3273 = vlaneseq
        %v3274 = vshrl.u32 %v3273, 7
        %v3275 = vsub.s32 7, %v3274
        %v3276 = vrot.slane %v3205, %v3275
        %v3277 = vlaneseq
        %v3278 = vshrl.u32 %v3277, 7
        %v3279 = vsub.s32 0, %v3278
        %v3280 = vrot.slane %v3209, %v3279
        %v3281 = vlaneseq
        %v3282 = vshrl.u32 %v3281, 7
        %v3283 = vsub.s32 1, %v3282
        %v3284 = vrot.slane %v3209, %v3283
        %v3285 = vlaneseq
        %v3286 = vshrl.u32 %v3285, 7
        %v3287 = vsub.s32 2, %v3286
        %v3288 = vrot.slane %v3209, %v3287
        %v3289 = vlaneseq
        %v3290 = vshrl.u32 %v3289, 7
        %v3291 = vsub.s32 3, %v3290
        %v3292 = vrot.slane %v3209, %v3291
        %v3293 = vlaneseq
        %v3294 = vshrl.u32 %v3293, 7
        %v3295 = vsub.s32 4, %v3294
        %v3296 = vrot.slane %v3209, %v3295
        %v3297 = vlaneseq
        %v3298 = vshrl.u32 %v3297, 7
        %v3299 = vsub.s32 5, %v3298
        %v3300 = vrot.slane %v3209, %v3299
        %v3301 = vlaneseq
        %v3302 = vshrl.u32 %v3301, 7
        %v3303 = vsub.s32 6, %v3302
        %v3304 = vrot.slane %v3209, %v3303
        %v3520 = vunpack.c.l.b16 %v3006
        %v3521 = vunpack.c.h.b16 %v3006
        %v3522 = vunpack.c.l.b16 %v3007
        %v3523 = vunpack.c.h.b16 %v3007
        %v3524 = vunpack.c.l.b16 %v3008
        %v3525 = vunpack.c.h.b16 %v3008
        %v3526 = vunpack.c.l.b16 %v3009
        %v3527 = vunpack.c.h.b16 %v3009
        %v3528 = vunpack.c.l.b16 %v3010
        %v3529 = vunpack.c.h.b16 %v3010
        %v3530 = vunpack.c.l.b16 %v3011
        %v3531 = vunpack.c.h.b16 %v3011
        %v3532 = vunpack.c.l.b16 %v3012
        %v3533 = vunpack.c.h.b16 %v3012
        %v3534 = vunpack.c.l.b16 %v3013
        %v3535 = vunpack.c.h.b16 %v3013
        %v3536 = vunpack.c.l.b16 %v3014
        %v3537 = vunpack.c.h.b16 %v3014
        %v3538 = vunpack.c.l.b16 %v3015
        %v3539 = vunpack.c.h.b16 %v3015
        %v3540 = vunpack.c.l.b16 %v3016
        %v3541 = vunpack.c.h.b16 %v3016
        %v3542 = vunpack.c.l.b16 %v3017
        %v3543 = vunpack.c.l.b16 %v3018
        %v3544 = vunpack.c.h.b16 %v3018
        %v3545 = vunpack.c.l.b16 %v3019
        %v3546 = vunpack.c.h.b16 %v3019
        %v3547 = vunpack.c.l.b16 %v3020
        %v3548 = vunpack.c.h.b16 %v3020
        %v3549 = vunpack.c.l.b16 %v3021
        %v3550 = vunpack.c.h.b16 %v3021
        %v3551 = vunpack.c.l.b16 %v3022
        %v3552 = vunpack.c.h.b16 %v3022
        %v3553 = vunpack.c.l.b16 %v3023
        %v3554 = vunpack.c.h.b16 %v3023
        %v3555 = vunpack.c.l.b16 %v3024
        %v3556 = vunpack.c.h.b16 %v3024
        %v3557 = vunpack.c.l.b16 %v3025
        %v3558 = vunpack.c.h.b16 %v3025
        %v3559 = vunpack.c.l.b16 %v3026
        %v3560 = vunpack.c.h.b16 %v3026
        %v3561 = vunpack.c.l.b16 %v3027
        %v3562 = vunpack.c.h.b16 %v3027
        %v3563 = vunpack.c.l.b16 %v3028
        %v3564 = vunpack.c.h.b16 %v3028
        %v3565 = vunpack.c.l.b16 %v3029
        %v3566 = vunpack.c.l.b16 %v3030
        %v3567 = vunpack.c.h.b16 %v3030
        %v3568 = vunpack.c.l.b16 %v3031
        %v3569 = vunpack.c.h.b16 %v3031
        %v3570 = vunpack.c.l.b16 %v3032
        %v3571 = vunpack.c.h.b16 %v3032
        %v3572 = vunpack.c.l.b16 %v3033
        %v3573 = vunpack.c.h.b16 %v3033
        %v3574 = vunpack.c.l.b16 %v3034
        %v3575 = vunpack.c.h.b16 %v3034
        %v3576 = vunpack.c.l.b16 %v3035
        %v3577 = vunpack.c.h.b16 %v3035
        %v3578 = vunpack.c.l.b16 %v3036
        %v3579 = vunpack.c.h.b16 %v3036
        %v3580 = vunpack.c.l.b16 %v3037
        %v3581 = vunpack.c.h.b16 %v3037
        %v3582 = vunpack.c.l.b16 %v3038
        %v3583 = vunpack.c.h.b16 %v3038
        %v3584 = vunpack.c.l.b16 %v3039
        %v3585 = vunpack.c.h.b16 %v3039
        %v3586 = vunpack.c.l.b16 %v3040
        %v3587 = vunpack.c.h.b16 %v3040
        %v3588 = vunpack.c.l.b16 %v3041
        %v3589 = vunpack.c.l.b16 %v3042
        %v3590 = vunpack.c.h.b16 %v3042
        %v3591 = vunpack.c.l.b16 %v3043
        %v3592 = vunpack.c.h.b16 %v3043
        %v3593 = vunpack.c.l.b16 %v3044
        %v3594 = vunpack.c.h.b16 %v3044
        %v3595 = vunpack.c.l.b16 %v3045
        %v3596 = vunpack.c.h.b16 %v3045
        %v3597 = vunpack.c.l.b16 %v3046
        %v3598 = vunpack.c.h.b16 %v3046
        %v3599 = vunpack.c.l.b16 %v3047
        %v3600 = vunpack.c.h.b16 %v3047
        %v3601 = vunpack.c.l.b16 %v3048
        %v3602 = vunpack.c.h.b16 %v3048
        %v3603 = vunpack.c.l.b16 %v3049
        %v3604 = vunpack.c.h.b16 %v3049
        %v3605 = vunpack.c.l.b16 %v3050
        %v3606 = vunpack.c.h.b16 %v3050
        %v3607 = vunpack.c.l.b16 %v3051
        %v3608 = vunpack.c.h.b16 %v3051
        %v3609 = vunpack.c.l.b16 %v3052
        %v3610 = vunpack.c.h.b16 %v3052
        %v3611 = vunpack.c.l.b16 %v3053
        %v3612 = vunpack.c.l.b16 %v3054
        %v3613 = vunpack.c.h.b16 %v3054
        %v3614 = vunpack.c.l.b16 %v3055
        %v3615 = vunpack.c.h.b16 %v3055
        %v3616 = vunpack.c.l.b16 %v3056
        %v3617 = vunpack.c.h.b16 %v3056
        %v3618 = vunpack.c.l.b16 %v3057
        %v3619 = vunpack.c.h.b16 %v3057
        %v3620 = vunpack.c.l.b16 %v3058
        %v3621 = vunpack.c.h.b16 %v3058
        %v3622 = vunpack.c.l.b16 %v3059
        %v3623 = vunpack.c.h.b16 %v3059
        %v3624 = vunpack.c.l.b16 %v3060
        %v3625 = vunpack.c.h.b16 %v3060
        %v3626 = vunpack.c.l.b16 %v3061
        %v3627 = vunpack.c.h.b16 %v3061
        %v3628 = vunpack.c.l.b16 %v3062
        %v3629 = vunpack.c.h.b16 %v3062
        %v3630 = vunpack.c.l.b16 %v3063
        %v3631 = vunpack.c.h.b16 %v3063
        %v3632 = vunpack.c.l.b16 %v3064
        %v3633 = vunpack.c.h.b16 %v3064
        %v3634 = vunpack.c.l.b16 %v3065
        %v3635 = vunpack.c.l.b16 %v3066
        %v3636 = vunpack.c.h.b16 %v3066
        %v3637 = vunpack.c.l.b16 %v3067
        %v3638 = vunpack.c.h.b16 %v3067
        %v3639 = vunpack.c.l.b16 %v3068
        %v3640 = vunpack.c.h.b16 %v3068
        %v3641 = vunpack.c.l.b16 %v3069
        %v3642 = vunpack.c.h.b16 %v3069
        %v3643 = vunpack.c.l.b16 %v3070
        %v3644 = vunpack.c.h.b16 %v3070
        %v3645 = vunpack.c.l.b16 %v3071
        %v3646 = vunpack.c.h.b16 %v3071
        %v3647 = vunpack.c.l.b16 %v3072
        %v3648 = vunpack.c.h.b16 %v3072
        %v3649 = vunpack.c.l.b16 %v3073
        %v3650 = vunpack.c.h.b16 %v3073
        %v3651 = vunpack.c.l.b16 %v3074
        %v3652 = vunpack.c.h.b16 %v3074
        %v3653 = vunpack.c.l.b16 %v3075
        %v3654 = vunpack.c.h.b16 %v3075
        %v3655 = vunpack.c.l.b16 %v3076
        %v3656 = vunpack.c.h.b16 %v3076
        %v3657 = vunpack.c.l.b16 %v3077
        %v3658 = vunpack.c.l.b16 %v3078
        %v3659 = vunpack.c.h.b16 %v3078
        %v3660 = vunpack.c.l.b16 %v3079
        %v3661 = vunpack.c.h.b16 %v3079
        %v3662 = vunpack.c.l.b16 %v3080
        %v3663 = vunpack.c.h.b16 %v3080
        %v3664 = vunpack.c.l.b16 %v3081
        %v3665 = vunpack.c.h.b16 %v3081
        %v3666 = vunpack.c.l.b16 %v3082
        %v3667 = vunpack.c.h.b16 %v3082
        %v3668 = vunpack.c.l.b16 %v3083
        %v3669 = vunpack.c.h.b16 %v3083
        %v3670 = vunpack.c.l.b16 %v3084
        %v3671 = vunpack.c.h.b16 %v3084
        %v3672 = vunpack.c.l.b16 %v3085
        %v3673 = vunpack.c.h.b16 %v3085
        %v3674 = vunpack.c.l.b16 %v3086
        %v3675 = vunpack.c.h.b16 %v3086
        %v3676 = vunpack.c.l.b16 %v3087
        %v3677 = vunpack.c.h.b16 %v3087
        %v3678 = vunpack.c.l.b16 %v3088
        %v3679 = vunpack.c.h.b16 %v3088
        %v3680 = vunpack.c.l.b16 %v3089
        %v3681 = vunpack.c.l.b16 %v3090
        %v3682 = vunpack.c.h.b16 %v3090
        %v3683 = vunpack.c.l.b16 %v3091
        %v3684 = vunpack.c.h.b16 %v3091
        %v3685 = vunpack.c.l.b16 %v3092
        %v3686 = vunpack.c.h.b16 %v3092
        %v3687 = vunpack.c.l.b16 %v3093
        %v3688 = vunpack.c.h.b16 %v3093
        %v3689 = vunpack.c.l.b16 %v3094
        %v3690 = vunpack.c.h.b16 %v3094
        %v3691 = vunpack.c.l.b16 %v3095
        %v3692 = vunpack.c.h.b16 %v3095
        %v3693 = vunpack.c.l.b16 %v3096
        %v3694 = vunpack.c.h.b16 %v3096
        %v3695 = vunpack.c.l.b16 %v3097
        %v3696 = vunpack.c.h.b16 %v3097
        %v3697 = vunpack.c.l.b16 %v3098
        %v3698 = vunpack.c.h.b16 %v3098
        %v3699 = vunpack.c.l.b16 %v3099
        %v3700 = vunpack.c.h.b16 %v3099
        %v3701 = vunpack.c.l.b16 %v3100
        %v3702 = vunpack.c.h.b16 %v3100
        %v3703 = vunpack.c.l.b16 %v3101
        %v3704 = vunpack.c.l.b16 %v3102
        %v3705 = vunpack.c.h.b16 %v3102
        %v3706 = vunpack.c.l.b16 %v3103
        %v3707 = vunpack.c.h.b16 %v3103
        %v3708 = vunpack.c.l.b16 %v3104
        %v3709 = vunpack.c.h.b16 %v3104
        %v3710 = vunpack.c.l.b16 %v3105
        %v3711 = vunpack.c.h.b16 %v3105
        %v3712 = vunpack.c.l.b16 %v3106
        %v3713 = vunpack.c.h.b16 %v3106
        %v3714 = vunpack.c.l.b16 %v3107
        %v3715 = vunpack.c.h.b16 %v3107
        %v3716 = vunpack.c.l.b16 %v3108
        %v3717 = vunpack.c.h.b16 %v3108
        %v3718 = vunpack.c.l.b16 %v3109
        %v3719 = vunpack.c.h.b16 %v3109
        %v3720 = vunpack.c.l.b16 %v3110
        %v3721 = vunpack.c.h.b16 %v3110
        %v3722 = vunpack.c.l.b16 %v3111
        %v3723 = vunpack.c.h.b16 %v3111
        %v3724 = vunpack.c.l.b16 %v3112
        %v3725 = vunpack.c.h.b16 %v3112
        %v3726 = vunpack.c.l.b16 %v3113
        %v3727 = vunpack.c.l.b16 %v3114
        %v3728 = vunpack.c.h.b16 %v3114
        %v3729 = vunpack.c.l.b16 %v3115
        %v3730 = vunpack.c.h.b16 %v3115
        %v3731 = vunpack.c.l.b16 %v3116
        %v3732 = vunpack.c.h.b16 %v3116
        %v3733 = vunpack.c.l.b16 %v3117
        %v3734 = vunpack.c.h.b16 %v3117
        %v3735 = vunpack.c.l.b16 %v3118
        %v3736 = vunpack.c.h.b16 %v3118
        %v3737 = vunpack.c.l.b16 %v3119
        %v3738 = vunpack.c.h.b16 %v3119
        %v3739 = vunpack.c.l.b16 %v3120
        %v3740 = vunpack.c.h.b16 %v3120
        %v3741 = vunpack.c.l.b16 %v3121
        %v3742 = vunpack.c.h.b16 %v3121
        %v3743 = vunpack.c.l.b16 %v3122
        %v3744 = vunpack.c.h.b16 %v3122
        %v3745 = vunpack.c.l.b16 %v3123
        %v3746 = vunpack.c.h.b16 %v3123
        %v3747 = vunpack.c.l.b16 %v3124
        %v3748 = vunpack.c.h.b16 %v3124
        %v3749 = vunpack.c.l.b16 %v3125
        %v3750 = vunpack.c.l.b16 %v3126
        %v3751 = vunpack.c.h.b16 %v3126
        %v3752 = vunpack.c.l.b16 %v3127
        %v3753 = vunpack.c.h.b16 %v3127
        %v3754 = vunpack.c.l.b16 %v3128
        %v3755 = vunpack.c.h.b16 %v3128
        %v3756 = vunpack.c.l.b16 %v3129
        %v3757 = vunpack.c.h.b16 %v3129
        %v3758 = vunpack.c.l.b16 %v3130
        %v3759 = vunpack.c.h.b16 %v3130
        %v3760 = vunpack.c.l.b16 %v3131
        %v3761 = vunpack.c.h.b16 %v3131
        %v3762 = vunpack.c.l.b16 %v3132
        %v3763 = vunpack.c.h.b16 %v3132
        %v3764 = vunpack.c.l.b16 %v3133
        %v3765 = vunpack.c.h.b16 %v3133
        %v3766 = vunpack.c.l.b16 %v3134
        %v3767 = vunpack.c.h.b16 %v3134
        %v3768 = vunpack.c.l.b16 %v3135
        %v3769 = vunpack.c.h.b16 %v3135
        %v3770 = vunpack.c.l.b16 %v3136
        %v3771 = vunpack.c.h.b16 %v3136
        %v3772 = vunpack.c.l.b16 %v3137
        %v3773 = vunpack.c.l.b16 %v3138
        %v3774 = vunpack.c.h.b16 %v3138
        %v3775 = vunpack.c.l.b16 %v3139
        %v3776 = vunpack.c.h.b16 %v3139
        %v3777 = vunpack.c.l.b16 %v3140
        %v3778 = vunpack.c.h.b16 %v3140
        %v3779 = vunpack.c.l.b16 %v3141
        %v3780 = vunpack.c.h.b16 %v3141
        %v3781 = vunpack.c.l.b16 %v3142
        %v3782 = vunpack.c.h.b16 %v3142
        %v3783 = vunpack.c.l.b16 %v3143
        %v3784 = vunpack.c.h.b16 %v3143
        %v3785 = vunpack.c.l.b16 %v3144
        %v3786 = vunpack.c.h.b16 %v3144
        %v3787 = vunpack.c.l.b16 %v3145
        %v3788 = vunpack.c.h.b16 %v3145
        %v3789 = vunpack.c.l.b16 %v3146
        %v3790 = vunpack.c.h.b16 %v3146
        %v3791 = vunpack.c.l.b16 %v3147
        %v3792 = vunpack.c.h.b16 %v3147
        %v3793 = vunpack.c.l.b16 %v3148
        %v3794 = vunpack.c.h.b16 %v3148
        %v3795 = vunpack.c.l.b16 %v3149
        %v3796 = vunpack.c.l.b16 %v3150
        %v3797 = vunpack.c.h.b16 %v3150
        %v3798 = vunpack.c.l.b16 %v3151
        %v3799 = vunpack.c.h.b16 %v3151
        %v3800 = vunpack.c.l.b16 %v3152
        %v3801 = vunpack.c.h.b16 %v3152
        %v3802 = vunpack.c.l.b16 %v3153
        %v3803 = vunpack.c.h.b16 %v3153
        %v3804 = vunpack.c.l.b16 %v3154
        %v3805 = vunpack.c.h.b16 %v3154
        %v3806 = vunpack.c.l.b16 %v3155
        %v3807 = vunpack.c.h.b16 %v3155
        %v3808 = vunpack.c.l.b16 %v3156
        %v3809 = vunpack.c.h.b16 %v3156
        %v3810 = vunpack.c.l.b16 %v3157
        %v3811 = vunpack.c.h.b16 %v3157
        %v3812 = vunpack.c.l.b16 %v3158
        %v3813 = vunpack.c.h.b16 %v3158
        %v3814 = vunpack.c.l.b16 %v3159
        %v3815 = vunpack.c.h.b16 %v3159
        %v3816 = vunpack.c.l.b16 %v3160
        %v3817 = vunpack.c.h.b16 %v3160
        %v3818 = vunpack.c.l.b16 %v3161
        %v3819 = vunpack.c.l.b16 %v3162
        %v3820 = vunpack.c.h.b16 %v3162
        %v3821 = vunpack.c.l.b16 %v3163
        %v3822 = vunpack.c.h.b16 %v3163
        %v3823 = vunpack.c.l.b16 %v3164
        %v3824 = vunpack.c.h.b16 %v3164
        %v3825 = vunpack.c.l.b16 %v3165
        %v3826 = vunpack.c.h.b16 %v3165
        %v3827 = vunpack.c.l.b16 %v3166
        %v3828 = vunpack.c.h.b16 %v3166
        %v3829 = vunpack.c.l.b16 %v3167
        %v3830 = vunpack.c.h.b16 %v3167
        %v3831 = vunpack.c.l.b16 %v3168
        %v3832 = vunpack.c.h.b16 %v3168
        %v3833 = vunpack.c.l.b16 %v3169
        %v3834 = vunpack.c.h.b16 %v3169
        %v3835 = vunpack.c.l.b16 %v3170
        %v3836 = vunpack.c.h.b16 %v3170
        %v3837 = vunpack.c.l.b16 %v3171
        %v3838 = vunpack.c.h.b16 %v3171
        %v3839 = vunpack.c.l.b16 %v3172
        %v3840 = vunpack.c.h.b16 %v3172
        %v3841 = vunpack.c.l.b16 %v3173
        %v3842 = vunpack.c.l.b16 %v3174
        %v3843 = vunpack.c.h.b16 %v3174
        %v3844 = vunpack.c.l.b16 %v3175
        %v3845 = vunpack.c.h.b16 %v3175
        %v3846 = vunpack.c.l.b16 %v3176
        %v3847 = vunpack.c.h.b16 %v3176
        %v3848 = vunpack.c.l.b16 %v3177
        %v3849 = vunpack.c.h.b16 %v3177
        %v3850 = vunpack.c.l.b16 %v3178
        %v3851 = vunpack.c.h.b16 %v3178
        %v3852 = vunpack.c.l.b16 %v3179
        %v3853 = vunpack.c.h.b16 %v3179
        %v3854 = vunpack.c.l.b16 %v3180
        %v3855 = vunpack.c.h.b16 %v3180
        %v3856 = vunpack.c.l.b16 %v3181
        %v3857 = vunpack.c.h.b16 %v3181
        %v3858 = vunpack.c.l.b16 %v3182
        %v3859 = vunpack.c.h.b16 %v3182
        %v3860 = vunpack.c.l.b16 %v3183
        %v3861 = vunpack.c.h.b16 %v3183
        %v3862 = vunpack.c.l.b16 %v3184
        %v3863 = vunpack.c.h.b16 %v3184
        %v3864 = vunpack.c.l.b16 %v3185
        %v3865 = vunpack.c.l.b16 %v3186
        %v3866 = vunpack.c.h.b16 %v3186
        %v3867 = vunpack.c.l.b16 %v3187
        %v3868 = vunpack.c.h.b16 %v3187
        %v3869 = vunpack.c.l.b16 %v3188
        %v3870 = vunpack.c.h.b16 %v3188
        %v3871 = vunpack.c.l.b16 %v3189
        %v3872 = vunpack.c.h.b16 %v3189
        %v3873 = vunpack.c.l.b16 %v3190
        %v3874 = vunpack.c.h.b16 %v3190
        %v3875 = vunpack.c.l.b16 %v3191
        %v3876 = vunpack.c.h.b16 %v3191
        %v3877 = vunpack.c.l.b16 %v3192
        %v3878 = vunpack.c.h.b16 %v3192
        %v3879 = vunpack.c.l.b16 %v3193
        %v3880 = vunpack.c.h.b16 %v3193
        %v3881 = vunpack.c.l.b16 %v3194
        %v3882 = vunpack.c.h.b16 %v3194
        %v3883 = vunpack.c.l.b16 %v3195
        %v3884 = vunpack.c.h.b16 %v3195
        %v3885 = vunpack.c.l.b16 %v3196
        %v3886 = vunpack.c.h.b16 %v3196
        %v3887 = vunpack.c.l.b16 %v3197
        %v3888 = vpack.c.b16 %v3543, %v3520
        %v3889 = vpack.c.b16 %v3544, %v3521
        %v3890 = vpack.c.b16 %v3545, %v3522
        %v3891 = vpack.c.b16 %v3546, %v3523
        %v3892 = vpack.c.b16 %v3547, %v3524
        %v3893 = vpack.c.b16 %v3548, %v3525
        %v3894 = vpack.c.b16 %v3549, %v3526
        %v3895 = vpack.c.b16 %v3550, %v3527
        %v3896 = vpack.c.b16 %v3551, %v3528
        %v3897 = vpack.c.b16 %v3552, %v3529
        %v3898 = vpack.c.b16 %v3553, %v3530
        %v3899 = vpack.c.b16 %v3554, %v3531
        %v3900 = vpack.c.b16 %v3555, %v3532
        %v3901 = vpack.c.b16 %v3556, %v3533
        %v3902 = vpack.c.b16 %v3557, %v3534
        %v3903 = vpack.c.b16 %v3558, %v3535
        %v3904 = vpack.c.b16 %v3559, %v3536
        %v3905 = vpack.c.b16 %v3560, %v3537
        %v3906 = vpack.c.b16 %v3561, %v3538
        %v3907 = vpack.c.b16 %v3562, %v3539
        %v3908 = vpack.c.b16 %v3563, %v3540
        %v3909 = vpack.c.b16 %v3564, %v3541
        %v3910 = vpack.c.b16 %v3565, %v3542
        %v3911 = vpack.c.b16 %v3589, %v3566
        %v3912 = vpack.c.b16 %v3590, %v3567
        %v3913 = vpack.c.b16 %v3591, %v3568
        %v3914 = vpack.c.b16 %v3592, %v3569
        %v3915 = vpack.c.b16 %v3593, %v3570
        %v3916 = vpack.c.b16 %v3594, %v3571
        %v3917 = vpack.c.b16 %v3595, %v3572
        %v3918 = vpack.c.b16 %v3596, %v3573
        %v3919 = vpack.c.b16 %v3597, %v3574
        %v3920 = vpack.c.b16 %v3598, %v3575
        %v3921 = vpack.c.b16 %v3599, %v3576
        %v3922 = vpack.c.b16 %v3600, %v3577
        %v3923 = vpack.c.b16 %v3601, %v3578
        %v3924 = vpack.c.b16 %v3602, %v3579
        %v3925 = vpack.c.b16 %v3603, %v3580
        %v3926 = vpack.c.b16 %v3604, %v3581
        %v3927 = vpack.c.b16 %v3605, %v3582
        %v3928 = vpack.c.b16 %v3606, %v3583
        %v3929 = vpack.c.b16 %v3607, %v3584
        %v3930 = vpack.c.b16 %v3608, %v3585
        %v3931 = vpack.c.b16 %v3609, %v3586
        %v3932 = vpack.c.b16 %v3610, %v3587
        %v3933 = vpack.c.b16 %v3611, %v3588
        %v3934 = vpack.c.b16 %v3635, %v3612
        %v3935 = vpack.c.b16 %v3636, %v3613
        %v3936 = vpack.c.b16 %v3637, %v3614
        %v3937 = vpack.c.b16 %v3638, %v3615
        %v3938 = vpack.c.b16 %v3639, %v3616
        %v3939 = vpack.c.b16 %v3640, %v3617
        %v3940 = vpack.c.b16 %v3641, %v3618
        %v3941 = vpack.c.b16 %v3642, %v3619
        %v3942 = vpack.c.b16 %v3643, %v3620
        %v3943 = vpack.c.b16 %v3644, %v3621
        %v3944 = vpack.c.b16 %v3645, %v3622
        %v3945 = vpack.c.b16 %v3646, %v3623
        %v3946 = vpack.c.b16 %v3647, %v3624
        %v3947 = vpack.c.b16 %v3648, %v3625
        %v3948 = vpack.c.b16 %v3649, %v3626
        %v3949 = vpack.c.b16 %v3650, %v3627
        %v3950 = vpack.c.b16 %v3651, %v3628
        %v3951 = vpack.c.b16 %v3652, %v3629
        %v3952 = vpack.c.b16 %v3653, %v3630
        %v3953 = vpack.c.b16 %v3654, %v3631
        %v3954 = vpack.c.b16 %v3655, %v3632
        %v3955 = vpack.c.b16 %v3656, %v3633
        %v3956 = vpack.c.b16 %v3657, %v3634
        %v3957 = vpack.c.b16 %v3681, %v3658
        %v3958 = vpack.c.b16 %v3682, %v3659
        %v3959 = vpack.c.b16 %v3683, %v3660
        %v3960 = vpack.c.b16 %v3684, %v3661
        %v3961 = vpack.c.b16 %v3685, %v3662
        %v3962 = vpack.c.b16 %v3686, %v3663
        %v3963 = vpack.c.b16 %v3687, %v3664
        %v3964 = vpack.c.b16 %v3688, %v3665
        %v3965 = vpack.c.b16 %v3689, %v3666
        %v3966 = vpack.c.b16 %v3690, %v3667
        %v3967 = vpack.c.b16 %v3691, %v3668
        %v3968 = vpack.c.b16 %v3692, %v3669
        %v3969 = vpack.c.b16 %v3693, %v3670
        %v3970 = vpack.c.b16 %v3694, %v3671
        %v3971 = vpack.c.b16 %v3695, %v3672
        %v3972 = vpack.c.b16 %v3696, %v3673
        %v3973 = vpack.c.b16 %v3697, %v3674
        %v3974 = vpack.c.b16 %v3698, %v3675
        %v3975 = vpack.c.b16 %v3699, %v3676
        %v3976 = vpack.c.b16 %v3700, %v3677
        %v3977 = vpack.c.b16 %v3701, %v3678
        %v3978 = vpack.c.b16 %v3702, %v3679
        %v3979 = vpack.c.b16 %v3703, %v3680
        %v3980 = vpack.c.b16 %v3727, %v3704
        %v3981 = vpack.c.b16 %v3728, %v3705
        %v3982 = vpack.c.b16 %v3729, %v3706
        %v3983 = vpack.c.b16 %v3730, %v3707
        %v3984 = vpack.c.b16 %v3731, %v3708
        %v3985 = vpack.c.b16 %v3732, %v3709
        %v3986 = vpack.c.b16 %v3733, %v3710
        %v3987 = vpack.c.b16 %v3734, %v3711
        %v3988 = vpack.c.b16 %v3735, %v3712
        %v3989 = vpack.c.b16 %v3736, %v3713
        %v3990 = vpack.c.b16 %v3737, %v3714
        %v3991 = vpack.c.b16 %v3738, %v3715
        %v3992 = vpack.c.b16 %v3739, %v3716
        %v3993 = vpack.c.b16 %v3740, %v3717
        %v3994 = vpack.c.b16 %v3741, %v3718
        %v3995 = vpack.c.b16 %v3742, %v3719
        %v3996 = vpack.c.b16 %v3743, %v3720
        %v3997 = vpack.c.b16 %v3744, %v3721
        %v3998 = vpack.c.b16 %v3745, %v3722
        %v3999 = vpack.c.b16 %v3746, %v3723
        %v4000 = vpack.c.b16 %v3747, %v3724
        %v4001 = vpack.c.b16 %v3748, %v3725
        %v4002 = vpack.c.b16 %v3749, %v3726
        %v4003 = vpack.c.b16 %v3773, %v3750
        %v4004 = vpack.c.b16 %v3774, %v3751
        %v4005 = vpack.c.b16 %v3775, %v3752
        %v4006 = vpack.c.b16 %v3776, %v3753
        %v4007 = vpack.c.b16 %v3777, %v3754
        %v4008 = vpack.c.b16 %v3778, %v3755
        %v4009 = vpack.c.b16 %v3779, %v3756
        %v4010 = vpack.c.b16 %v3780, %v3757
        %v4011 = vpack.c.b16 %v3781, %v3758
        %v4012 = vpack.c.b16 %v3782, %v3759
        %v4013 = vpack.c.b16 %v3783, %v3760
        %v4014 = vpack.c.b16 %v3784, %v3761
        %v4015 = vpack.c.b16 %v3785, %v3762
        %v4016 = vpack.c.b16 %v3786, %v3763
        %v4017 = vpack.c.b16 %v3787, %v3764
        %v4018 = vpack.c.b16 %v3788, %v3765
        %v4019 = vpack.c.b16 %v3789, %v3766
        %v4020 = vpack.c.b16 %v3790, %v3767
        %v4021 = vpack.c.b16 %v3791, %v3768
        %v4022 = vpack.c.b16 %v3792, %v3769
        %v4023 = vpack.c.b16 %v3793, %v3770
        %v4024 = vpack.c.b16 %v3794, %v3771
        %v4025 = vpack.c.b16 %v3795, %v3772
        %v4026 = vpack.c.b16 %v3819, %v3796
        %v4027 = vpack.c.b16 %v3820, %v3797
        %v4028 = vpack.c.b16 %v3821, %v3798
        %v4029 = vpack.c.b16 %v3822, %v3799
        %v4030 = vpack.c.b16 %v3823, %v3800
        %v4031 = vpack.c.b16 %v3824, %v3801
        %v4032 = vpack.c.b16 %v3825, %v3802
        %v4033 = vpack.c.b16 %v3826, %v3803
        %v4034 = vpack.c.b16 %v3827, %v3804
        %v4035 = vpack.c.b16 %v3828, %v3805
        %v4036 = vpack.c.b16 %v3829, %v3806
        %v4037 = vpack.c.b16 %v3830, %v3807
        %v4038 = vpack.c.b16 %v3831, %v3808
        %v4039 = vpack.c.b16 %v3832, %v3809
        %v4040 = vpack.c.b16 %v3833, %v3810
        %v4041 = vpack.c.b16 %v3834, %v3811
        %v4042 = vpack.c.b16 %v3835, %v3812
        %v4043 = vpack.c.b16 %v3836, %v3813
        %v4044 = vpack.c.b16 %v3837, %v3814
        %v4045 = vpack.c.b16 %v3838, %v3815
        %v4046 = vpack.c.b16 %v3839, %v3816
        %v4047 = vpack.c.b16 %v3840, %v3817
        %v4048 = vpack.c.b16 %v3841, %v3818
        %v4049 = vpack.c.b16 %v3865, %v3842
        %v4050 = vpack.c.b16 %v3866, %v3843
        %v4051 = vpack.c.b16 %v3867, %v3844
        %v4052 = vpack.c.b16 %v3868, %v3845
        %v4053 = vpack.c.b16 %v3869, %v3846
        %v4054 = vpack.c.b16 %v3870, %v3847
        %v4055 = vpack.c.b16 %v3871, %v3848
        %v4056 = vpack.c.b16 %v3872, %v3849
        %v4057 = vpack.c.b16 %v3873, %v3850
        %v4058 = vpack.c.b16 %v3874, %v3851
        %v4059 = vpack.c.b16 %v3875, %v3852
        %v4060 = vpack.c.b16 %v3876, %v3853
        %v4061 = vpack.c.b16 %v3877, %v3854
        %v4062 = vpack.c.b16 %v3878, %v3855
        %v4063 = vpack.c.b16 %v3879, %v3856
        %v4064 = vpack.c.b16 %v3880, %v3857
        %v4065 = vpack.c.b16 %v3881, %v3858
        %v4066 = vpack.c.b16 %v3882, %v3859
        %v4067 = vpack.c.b16 %v3883, %v3860
        %v4068 = vpack.c.b16 %v3884, %v3861
        %v4069 = vpack.c.b16 %v3885, %v3862
        %v4070 = vpack.c.b16 %v3886, %v3863
        %v4071 = vpack.c.b16 %v3887, %v3864
        %4256 = vmatprep.subr.bf16.mxu0 %v4050
        %4257 = vmatpush1.bf16.msra.mxu0 %v4049
        %4258 = vmatprep.subr.bf16.mxu0 %v4027
        %4259 = vmatpush1.bf16.msra.mxu0 %v4026
        %4260 = vmatprep.subr.bf16.mxu0 %v4004
        %4261 = vmatpush1.bf16.msra.mxu0 %v4003
        %4262 = vmatprep.subr.bf16.mxu0 %v3981
        %4263 = vmatpush1.bf16.msra.mxu0 %v3980
        %4264 = vmatprep.subr.bf16.mxu0 %v3958
        %4265 = vmatpush1.bf16.msra.mxu0 %v3957
        %4266 = vmatprep.subr.bf16.mxu0 %v3935
        %4267 = vmatpush1.bf16.msra.mxu0 %v3934
        %4268 = vmatprep.subr.bf16.mxu0 %v3912
        %4269 = vmatpush1.bf16.msra.mxu0 %v3911
        %4270 = vmatprep.subr.bf16.mxu0 %v3889
        %4271 = vmatpush1.bf16.msra.mxu0 %v3888
        %4272 = vmatprep.subr.bf16.mxu0 0
        %4273 = vmatpush2.bf16.msra.mxu0 0
        %4274 = vmatprep.subr.bf16.mxu0 0
        %4275 = vmatpush2.bf16.msra.mxu0 0
        %4276 = vmatprep.subr.bf16.mxu0 0
        %4277 = vmatpush2.bf16.msra.mxu0 0
        %4278 = vmatprep.subr.bf16.mxu0 0
        %4279 = vmatpush2.bf16.msra.mxu0 0
        %4280 = vmatprep.subr.bf16.mxu0 0
        %4281 = vmatpush2.bf16.msra.mxu0 0
        %4282 = vmatprep.subr.bf16.mxu0 0
        %4283 = vmatpush2.bf16.msra.mxu0 0
        %4284 = vmatprep.subr.bf16.mxu0 0
        %4285 = vmatpush2.bf16.msra.mxu0 0
        %4286 = vmatprep.subr.bf16.mxu0 0
        %4287 = vmatpush2.bf16.msra.mxu0 0
        %4288 = vmatprep.mubr.bf16.mxu0 0
        %4289 = vmatmul.mubr.bf16.gmra.mxu0 %v3005
        %v4290 = vpop.f32.mrf.mxu0
        %v4291 = vadd.f32 %v3216, %v4290
        %v4292 = vpop.f32.mrf.mxu0
        %v4293 = vadd.f32 %v3220, %v4292
        %v4294 = vpop.f32.mrf.mxu0
        %v4295 = vadd.f32 %v3216, %v4294
        %v4296 = vpop.f32.mrf.mxu0
        %v4297 = vadd.f32 %v3220, %v4296
        %4298 = vdwg.mxu0
        %4299 = vmatprep.subr.bf16.mxu0 %v4052
        %4300 = vmatpush1.bf16.msra.mxu0 %v4051
        %4301 = vmatprep.subr.bf16.mxu0 %v4029
        %4302 = vmatpush1.bf16.msra.mxu0 %v4028
        %4303 = vmatprep.subr.bf16.mxu0 %v4006
        %4304 = vmatpush1.bf16.msra.mxu0 %v4005
        %4305 = vmatprep.subr.bf16.mxu0 %v3983
        %4306 = vmatpush1.bf16.msra.mxu0 %v3982
        %4307 = vmatprep.subr.bf16.mxu0 %v3960
        %4308 = vmatpush1.bf16.msra.mxu0 %v3959
        %4309 = vmatprep.subr.bf16.mxu0 %v3937
        %4310 = vmatpush1.bf16.msra.mxu0 %v3936
        %4311 = vmatprep.subr.bf16.mxu0 %v3914
        %4312 = vmatpush1.bf16.msra.mxu0 %v3913
        %4313 = vmatprep.subr.bf16.mxu0 %v3891
        %4314 = vmatpush1.bf16.msra.mxu0 %v3890
        %4315 = vmatprep.subr.bf16.mxu0 0
        %4316 = vmatpush2.bf16.msra.mxu0 0
        %4317 = vmatprep.subr.bf16.mxu0 0
        %4318 = vmatpush2.bf16.msra.mxu0 0
        %4319 = vmatprep.subr.bf16.mxu0 0
        %4320 = vmatpush2.bf16.msra.mxu0 0
        %4321 = vmatprep.subr.bf16.mxu0 0
        %4322 = vmatpush2.bf16.msra.mxu0 0
        %4323 = vmatprep.subr.bf16.mxu0 0
        %4324 = vmatpush2.bf16.msra.mxu0 0
        %4325 = vmatprep.subr.bf16.mxu0 0
        %4326 = vmatpush2.bf16.msra.mxu0 0
        %4327 = vmatprep.subr.bf16.mxu0 0
        %4328 = vmatpush2.bf16.msra.mxu0 0
        %4329 = vmatprep.subr.bf16.mxu0 0
        %4330 = vmatpush2.bf16.msra.mxu0 0
        %4331 = vmatprep.mubr.bf16.mxu0 0
        %4332 = vmatmul.mubr.bf16.gmra.mxu0 %v3005
        %v4333 = vpop.f32.mrf.mxu0
        %v4334 = vadd.f32 %v3224, %v4333
        %v4335 = vpop.f32.mrf.mxu0
        %v4336 = vadd.f32 %v3228, %v4335
        %v4337 = vpop.f32.mrf.mxu0
        %v4338 = vadd.f32 %v3224, %v4337
        %v4339 = vpop.f32.mrf.mxu0
        %v4340 = vadd.f32 %v3228, %v4339
        %4341 = vdwg.mxu0
        %4342 = vmatprep.subr.bf16.mxu0 %v4054
        %4343 = vmatpush1.bf16.msra.mxu0 %v4053
        %4344 = vmatprep.subr.bf16.mxu0 %v4031
        %4345 = vmatpush1.bf16.msra.mxu0 %v4030
        %4346 = vmatprep.subr.bf16.mxu0 %v4008
        %4347 = vmatpush1.bf16.msra.mxu0 %v4007
        %4348 = vmatprep.subr.bf16.mxu0 %v3985
        %4349 = vmatpush1.bf16.msra.mxu0 %v3984
        %4350 = vmatprep.subr.bf16.mxu0 %v3962
        %4351 = vmatpush1.bf16.msra.mxu0 %v3961
        %4352 = vmatprep.subr.bf16.mxu0 %v3939
        %4353 = vmatpush1.bf16.msra.mxu0 %v3938
        %4354 = vmatprep.subr.bf16.mxu0 %v3916
        %4355 = vmatpush1.bf16.msra.mxu0 %v3915
        %4356 = vmatprep.subr.bf16.mxu0 %v3893
        %4357 = vmatpush1.bf16.msra.mxu0 %v3892
        %4358 = vmatprep.subr.bf16.mxu0 0
        %4359 = vmatpush2.bf16.msra.mxu0 0
        %4360 = vmatprep.subr.bf16.mxu0 0
        %4361 = vmatpush2.bf16.msra.mxu0 0
        %4362 = vmatprep.subr.bf16.mxu0 0
        %4363 = vmatpush2.bf16.msra.mxu0 0
        %4364 = vmatprep.subr.bf16.mxu0 0
        %4365 = vmatpush2.bf16.msra.mxu0 0
        %4366 = vmatprep.subr.bf16.mxu0 0
        %4367 = vmatpush2.bf16.msra.mxu0 0
        %4368 = vmatprep.subr.bf16.mxu0 0
        %4369 = vmatpush2.bf16.msra.mxu0 0
        %4370 = vmatprep.subr.bf16.mxu0 0
        %4371 = vmatpush2.bf16.msra.mxu0 0
        %4372 = vmatprep.subr.bf16.mxu0 0
        %4373 = vmatpush2.bf16.msra.mxu0 0
        %4374 = vmatprep.mubr.bf16.mxu0 0
        %4375 = vmatmul.mubr.bf16.gmra.mxu0 %v3005
        %v4376 = vpop.f32.mrf.mxu0
        %v4377 = vadd.f32 %v3232, %v4376
        %v4378 = vpop.f32.mrf.mxu0
        %v4379 = vadd.f32 %v3236, %v4378
        %v4380 = vpop.f32.mrf.mxu0
        %v4381 = vadd.f32 %v3232, %v4380
        %v4382 = vpop.f32.mrf.mxu0
        %v4383 = vadd.f32 %v3236, %v4382
        %4384 = vdwg.mxu0
        %4385 = vmatprep.subr.bf16.mxu0 %v4056
        %4386 = vmatpush1.bf16.msra.mxu0 %v4055
        %4387 = vmatprep.subr.bf16.mxu0 %v4033
        %4388 = vmatpush1.bf16.msra.mxu0 %v4032
        %4389 = vmatprep.subr.bf16.mxu0 %v4010
        %4390 = vmatpush1.bf16.msra.mxu0 %v4009
        %4391 = vmatprep.subr.bf16.mxu0 %v3987
        %4392 = vmatpush1.bf16.msra.mxu0 %v3986
        %4393 = vmatprep.subr.bf16.mxu0 %v3964
        %4394 = vmatpush1.bf16.msra.mxu0 %v3963
        %4395 = vmatprep.subr.bf16.mxu0 %v3941
        %4396 = vmatpush1.bf16.msra.mxu0 %v3940
        %4397 = vmatprep.subr.bf16.mxu0 %v3918
        %4398 = vmatpush1.bf16.msra.mxu0 %v3917
        %4399 = vmatprep.subr.bf16.mxu0 %v3895
        %4400 = vmatpush1.bf16.msra.mxu0 %v3894
        %4401 = vmatprep.subr.bf16.mxu0 0
        %4402 = vmatpush2.bf16.msra.mxu0 0
        %4403 = vmatprep.subr.bf16.mxu0 0
        %4404 = vmatpush2.bf16.msra.mxu0 0
        %4405 = vmatprep.subr.bf16.mxu0 0
        %4406 = vmatpush2.bf16.msra.mxu0 0
        %4407 = vmatprep.subr.bf16.mxu0 0
        %4408 = vmatpush2.bf16.msra.mxu0 0
        %4409 = vmatprep.subr.bf16.mxu0 0
        %4410 = vmatpush2.bf16.msra.mxu0 0
        %4411 = vmatprep.subr.bf16.mxu0 0
        %4412 = vmatpush2.bf16.msra.mxu0 0
        %4413 = vmatprep.subr.bf16.mxu0 0
        %4414 = vmatpush2.bf16.msra.mxu0 0
        %4415 = vmatprep.subr.bf16.mxu0 0
        %4416 = vmatpush2.bf16.msra.mxu0 0
        %4417 = vmatprep.mubr.bf16.mxu0 0
        %4418 = vmatmul.mubr.bf16.gmra.mxu0 %v3005
        %v4419 = vpop.f32.mrf.mxu0
        %v4420 = vadd.f32 %v3240, %v4419
        %v4421 = vpop.f32.mrf.mxu0
        %v4422 = vadd.f32 %v3244, %v4421
        %v4423 = vpop.f32.mrf.mxu0
        %v4424 = vadd.f32 %v3240, %v4423
        %v4425 = vpop.f32.mrf.mxu0
        %v4426 = vadd.f32 %v3244, %v4425
        %4427 = vdwg.mxu0
        %4428 = vmatprep.subr.bf16.mxu0 %v4058
        %4429 = vmatpush1.bf16.msra.mxu0 %v4057
        %4430 = vmatprep.subr.bf16.mxu0 %v4035
        %4431 = vmatpush1.bf16.msra.mxu0 %v4034
        %4432 = vmatprep.subr.bf16.mxu0 %v4012
        %4433 = vmatpush1.bf16.msra.mxu0 %v4011
        %4434 = vmatprep.subr.bf16.mxu0 %v3989
        %4435 = vmatpush1.bf16.msra.mxu0 %v3988
        %4436 = vmatprep.subr.bf16.mxu0 %v3966
        %4437 = vmatpush1.bf16.msra.mxu0 %v3965
        %4438 = vmatprep.subr.bf16.mxu0 %v3943
        %4439 = vmatpush1.bf16.msra.mxu0 %v3942
        %4440 = vmatprep.subr.bf16.mxu0 %v3920
        %4441 = vmatpush1.bf16.msra.mxu0 %v3919
        %4442 = vmatprep.subr.bf16.mxu0 %v3897
        %4443 = vmatpush1.bf16.msra.mxu0 %v3896
        %4444 = vmatprep.subr.bf16.mxu0 0
        %4445 = vmatpush2.bf16.msra.mxu0 0
        %4446 = vmatprep.subr.bf16.mxu0 0
        %4447 = vmatpush2.bf16.msra.mxu0 0
        %4448 = vmatprep.subr.bf16.mxu0 0
        %4449 = vmatpush2.bf16.msra.mxu0 0
        %4450 = vmatprep.subr.bf16.mxu0 0
        %4451 = vmatpush2.bf16.msra.mxu0 0
        %4452 = vmatprep.subr.bf16.mxu0 0
        %4453 = vmatpush2.bf16.msra.mxu0 0
        %4454 = vmatprep.subr.bf16.mxu0 0
        %4455 = vmatpush2.bf16.msra.mxu0 0
        %4456 = vmatprep.subr.bf16.mxu0 0
        %4457 = vmatpush2.bf16.msra.mxu0 0
        %4458 = vmatprep.subr.bf16.mxu0 0
        %4459 = vmatpush2.bf16.msra.mxu0 0
        %4460 = vmatprep.mubr.bf16.mxu0 0
        %4461 = vmatmul.mubr.bf16.gmra.mxu0 %v3005
        %v4462 = vpop.f32.mrf.mxu0
        %v4463 = vadd.f32 %v3248, %v4462
        %v4464 = vpop.f32.mrf.mxu0
        %v4465 = vadd.f32 %v3252, %v4464
        %v4466 = vpop.f32.mrf.mxu0
        %v4467 = vadd.f32 %v3248, %v4466
        %v4468 = vpop.f32.mrf.mxu0
        %v4469 = vadd.f32 %v3252, %v4468
        %4470 = vdwg.mxu0
        %4471 = vmatprep.subr.bf16.mxu0 %v4060
        %4472 = vmatpush1.bf16.msra.mxu0 %v4059
        %4473 = vmatprep.subr.bf16.mxu0 %v4037
        %4474 = vmatpush1.bf16.msra.mxu0 %v4036
        %4475 = vmatprep.subr.bf16.mxu0 %v4014
        %4476 = vmatpush1.bf16.msra.mxu0 %v4013
        %4477 = vmatprep.subr.bf16.mxu0 %v3991
        %4478 = vmatpush1.bf16.msra.mxu0 %v3990
        %4479 = vmatprep.subr.bf16.mxu0 %v3968
        %4480 = vmatpush1.bf16.msra.mxu0 %v3967
        %4481 = vmatprep.subr.bf16.mxu0 %v3945
        %4482 = vmatpush1.bf16.msra.mxu0 %v3944
        %4483 = vmatprep.subr.bf16.mxu0 %v3922
        %4484 = vmatpush1.bf16.msra.mxu0 %v3921
        %4485 = vmatprep.subr.bf16.mxu0 %v3899
        %4486 = vmatpush1.bf16.msra.mxu0 %v3898
        %4487 = vmatprep.subr.bf16.mxu0 0
        %4488 = vmatpush2.bf16.msra.mxu0 0
        %4489 = vmatprep.subr.bf16.mxu0 0
        %4490 = vmatpush2.bf16.msra.mxu0 0
        %4491 = vmatprep.subr.bf16.mxu0 0
        %4492 = vmatpush2.bf16.msra.mxu0 0
        %4493 = vmatprep.subr.bf16.mxu0 0
        %4494 = vmatpush2.bf16.msra.mxu0 0
        %4495 = vmatprep.subr.bf16.mxu0 0
        %4496 = vmatpush2.bf16.msra.mxu0 0
        %4497 = vmatprep.subr.bf16.mxu0 0
        %4498 = vmatpush2.bf16.msra.mxu0 0
        %4499 = vmatprep.subr.bf16.mxu0 0
        %4500 = vmatpush2.bf16.msra.mxu0 0
        %4501 = vmatprep.subr.bf16.mxu0 0
        %4502 = vmatpush2.bf16.msra.mxu0 0
        %4503 = vmatprep.mubr.bf16.mxu0 0
        %4504 = vmatmul.mubr.bf16.gmra.mxu0 %v3005
        %v4505 = vpop.f32.mrf.mxu0
        %v4506 = vadd.f32 %v3256, %v4505
        %v4507 = vpop.f32.mrf.mxu0
        %v4508 = vadd.f32 %v3260, %v4507
        %v4509 = vpop.f32.mrf.mxu0
        %v4510 = vadd.f32 %v3256, %v4509
        %v4511 = vpop.f32.mrf.mxu0
        %v4512 = vadd.f32 %v3260, %v4511
        %4513 = vdwg.mxu0
        %4514 = vmatprep.subr.bf16.mxu0 %v4062
        %4515 = vmatpush1.bf16.msra.mxu0 %v4061
        %4516 = vmatprep.subr.bf16.mxu0 %v4039
        %4517 = vmatpush1.bf16.msra.mxu0 %v4038
        %4518 = vmatprep.subr.bf16.mxu0 %v4016
        %4519 = vmatpush1.bf16.msra.mxu0 %v4015
        %4520 = vmatprep.subr.bf16.mxu0 %v3993
        %4521 = vmatpush1.bf16.msra.mxu0 %v3992
        %4522 = vmatprep.subr.bf16.mxu0 %v3970
        %4523 = vmatpush1.bf16.msra.mxu0 %v3969
        %4524 = vmatprep.subr.bf16.mxu0 %v3947
        %4525 = vmatpush1.bf16.msra.mxu0 %v3946
        %4526 = vmatprep.subr.bf16.mxu0 %v3924
        %4527 = vmatpush1.bf16.msra.mxu0 %v3923
        %4528 = vmatprep.subr.bf16.mxu0 %v3901
        %4529 = vmatpush1.bf16.msra.mxu0 %v3900
        %4530 = vmatprep.subr.bf16.mxu0 0
        %4531 = vmatpush2.bf16.msra.mxu0 0
        %4532 = vmatprep.subr.bf16.mxu0 0
        %4533 = vmatpush2.bf16.msra.mxu0 0
        %4534 = vmatprep.subr.bf16.mxu0 0
        %4535 = vmatpush2.bf16.msra.mxu0 0
        %4536 = vmatprep.subr.bf16.mxu0 0
        %4537 = vmatpush2.bf16.msra.mxu0 0
        %4538 = vmatprep.subr.bf16.mxu0 0
        %4539 = vmatpush2.bf16.msra.mxu0 0
        %4540 = vmatprep.subr.bf16.mxu0 0
        %4541 = vmatpush2.bf16.msra.mxu0 0
        %4542 = vmatprep.subr.bf16.mxu0 0
        %4543 = vmatpush2.bf16.msra.mxu0 0
        %4544 = vmatprep.subr.bf16.mxu0 0
        %4545 = vmatpush2.bf16.msra.mxu0 0
        %4546 = vmatprep.mubr.bf16.mxu0 0
        %4547 = vmatmul.mubr.bf16.gmra.mxu0 %v3005
        %v4548 = vpop.f32.mrf.mxu0
        %v4549 = vadd.f32 %v3264, %v4548
        %v4550 = vpop.f32.mrf.mxu0
        %v4551 = vadd.f32 %v3268, %v4550
        %v4552 = vpop.f32.mrf.mxu0
        %v4553 = vadd.f32 %v3264, %v4552
        %v4554 = vpop.f32.mrf.mxu0
        %v4555 = vadd.f32 %v3268, %v4554
        %4556 = vdwg.mxu0
        %4557 = vmatprep.subr.bf16.mxu0 %v4064
        %4558 = vmatpush1.bf16.msra.mxu0 %v4063
        %4559 = vmatprep.subr.bf16.mxu0 %v4041
        %4560 = vmatpush1.bf16.msra.mxu0 %v4040
        %4561 = vmatprep.subr.bf16.mxu0 %v4018
        %4562 = vmatpush1.bf16.msra.mxu0 %v4017
        %4563 = vmatprep.subr.bf16.mxu0 %v3995
        %4564 = vmatpush1.bf16.msra.mxu0 %v3994
        %4565 = vmatprep.subr.bf16.mxu0 %v3972
        %4566 = vmatpush1.bf16.msra.mxu0 %v3971
        %4567 = vmatprep.subr.bf16.mxu0 %v3949
        %4568 = vmatpush1.bf16.msra.mxu0 %v3948
        %4569 = vmatprep.subr.bf16.mxu0 %v3926
        %4570 = vmatpush1.bf16.msra.mxu0 %v3925
        %4571 = vmatprep.subr.bf16.mxu0 %v3903
        %4572 = vmatpush1.bf16.msra.mxu0 %v3902
        %4573 = vmatprep.subr.bf16.mxu0 0
        %4574 = vmatpush2.bf16.msra.mxu0 0
        %4575 = vmatprep.subr.bf16.mxu0 0
        %4576 = vmatpush2.bf16.msra.mxu0 0
        %4577 = vmatprep.subr.bf16.mxu0 0
        %4578 = vmatpush2.bf16.msra.mxu0 0
        %4579 = vmatprep.subr.bf16.mxu0 0
        %4580 = vmatpush2.bf16.msra.mxu0 0
        %4581 = vmatprep.subr.bf16.mxu0 0
        %4582 = vmatpush2.bf16.msra.mxu0 0
        %4583 = vmatprep.subr.bf16.mxu0 0
        %4584 = vmatpush2.bf16.msra.mxu0 0
        %4585 = vmatprep.subr.bf16.mxu0 0
        %4586 = vmatpush2.bf16.msra.mxu0 0
        %4587 = vmatprep.subr.bf16.mxu0 0
        %4588 = vmatpush2.bf16.msra.mxu0 0
        %4589 = vmatprep.mubr.bf16.mxu0 0
        %4590 = vmatmul.mubr.bf16.gmra.mxu0 %v3005
        %v4591 = vpop.f32.mrf.mxu0
        %v4592 = vadd.f32 %v3272, %v4591
        %v4593 = vpop.f32.mrf.mxu0
        %v4594 = vadd.f32 %v3276, %v4593
        %v4595 = vpop.f32.mrf.mxu0
        %v4596 = vadd.f32 %v3272, %v4595
        %v4597 = vpop.f32.mrf.mxu0
        %v4598 = vadd.f32 %v3276, %v4597
        %4599 = vdwg.mxu0
        %4600 = vmatprep.subr.bf16.mxu0 %v4066
        %4601 = vmatpush1.bf16.msra.mxu0 %v4065
        %4602 = vmatprep.subr.bf16.mxu0 %v4043
        %4603 = vmatpush1.bf16.msra.mxu0 %v4042
        %4604 = vmatprep.subr.bf16.mxu0 %v4020
        %4605 = vmatpush1.bf16.msra.mxu0 %v4019
        %4606 = vmatprep.subr.bf16.mxu0 %v3997
        %4607 = vmatpush1.bf16.msra.mxu0 %v3996
        %4608 = vmatprep.subr.bf16.mxu0 %v3974
        %4609 = vmatpush1.bf16.msra.mxu0 %v3973
        %4610 = vmatprep.subr.bf16.mxu0 %v3951
        %4611 = vmatpush1.bf16.msra.mxu0 %v3950
        %4612 = vmatprep.subr.bf16.mxu0 %v3928
        %4613 = vmatpush1.bf16.msra.mxu0 %v3927
        %4614 = vmatprep.subr.bf16.mxu0 %v3905
        %4615 = vmatpush1.bf16.msra.mxu0 %v3904
        %4616 = vmatprep.subr.bf16.mxu0 0
        %4617 = vmatpush2.bf16.msra.mxu0 0
        %4618 = vmatprep.subr.bf16.mxu0 0
        %4619 = vmatpush2.bf16.msra.mxu0 0
        %4620 = vmatprep.subr.bf16.mxu0 0
        %4621 = vmatpush2.bf16.msra.mxu0 0
        %4622 = vmatprep.subr.bf16.mxu0 0
        %4623 = vmatpush2.bf16.msra.mxu0 0
        %4624 = vmatprep.subr.bf16.mxu0 0
        %4625 = vmatpush2.bf16.msra.mxu0 0
        %4626 = vmatprep.subr.bf16.mxu0 0
        %4627 = vmatpush2.bf16.msra.mxu0 0
        %4628 = vmatprep.subr.bf16.mxu0 0
        %4629 = vmatpush2.bf16.msra.mxu0 0
        %4630 = vmatprep.subr.bf16.mxu0 0
        %4631 = vmatpush2.bf16.msra.mxu0 0
        %4632 = vmatprep.mubr.bf16.mxu0 0
        %4633 = vmatmul.mubr.bf16.gmra.mxu0 %v3005
        %v4634 = vpop.f32.mrf.mxu0
        %v4635 = vadd.f32 %v3280, %v4634
        %v4636 = vpop.f32.mrf.mxu0
        %v4637 = vadd.f32 %v3284, %v4636
        %v4638 = vpop.f32.mrf.mxu0
        %v4639 = vadd.f32 %v3280, %v4638
        %v4640 = vpop.f32.mrf.mxu0
        %v4641 = vadd.f32 %v3284, %v4640
        %4642 = vdwg.mxu0
        %4643 = vmatprep.subr.bf16.mxu0 %v4068
        %4644 = vmatpush1.bf16.msra.mxu0 %v4067
        %4645 = vmatprep.subr.bf16.mxu0 %v4045
        %4646 = vmatpush1.bf16.msra.mxu0 %v4044
        %4647 = vmatprep.subr.bf16.mxu0 %v4022
        %4648 = vmatpush1.bf16.msra.mxu0 %v4021
        %4649 = vmatprep.subr.bf16.mxu0 %v3999
        %4650 = vmatpush1.bf16.msra.mxu0 %v3998
        %4651 = vmatprep.subr.bf16.mxu0 %v3976
        %4652 = vmatpush1.bf16.msra.mxu0 %v3975
        %4653 = vmatprep.subr.bf16.mxu0 %v3953
        %4654 = vmatpush1.bf16.msra.mxu0 %v3952
        %4655 = vmatprep.subr.bf16.mxu0 %v3930
        %4656 = vmatpush1.bf16.msra.mxu0 %v3929
        %4657 = vmatprep.subr.bf16.mxu0 %v3907
        %4658 = vmatpush1.bf16.msra.mxu0 %v3906
        %4659 = vmatprep.subr.bf16.mxu0 0
        %4660 = vmatpush2.bf16.msra.mxu0 0
        %4661 = vmatprep.subr.bf16.mxu0 0
        %4662 = vmatpush2.bf16.msra.mxu0 0
        %4663 = vmatprep.subr.bf16.mxu0 0
        %4664 = vmatpush2.bf16.msra.mxu0 0
        %4665 = vmatprep.subr.bf16.mxu0 0
        %4666 = vmatpush2.bf16.msra.mxu0 0
        %4667 = vmatprep.subr.bf16.mxu0 0
        %4668 = vmatpush2.bf16.msra.mxu0 0
        %4669 = vmatprep.subr.bf16.mxu0 0
        %4670 = vmatpush2.bf16.msra.mxu0 0
        %4671 = vmatprep.subr.bf16.mxu0 0
        %4672 = vmatpush2.bf16.msra.mxu0 0
        %4673 = vmatprep.subr.bf16.mxu0 0
        %4674 = vmatpush2.bf16.msra.mxu0 0
        %4675 = vmatprep.mubr.bf16.mxu0 0
        %4676 = vmatmul.mubr.bf16.gmra.mxu0 %v3005
        %v4677 = vpop.f32.mrf.mxu0
        %v4678 = vadd.f32 %v3288, %v4677
        %v4679 = vpop.f32.mrf.mxu0
        %v4680 = vadd.f32 %v3292, %v4679
        %v4681 = vpop.f32.mrf.mxu0
        %v4682 = vadd.f32 %v3288, %v4681
        %v4683 = vpop.f32.mrf.mxu0
        %v4684 = vadd.f32 %v3292, %v4683
        %4685 = vdwg.mxu0
        %4686 = vmatprep.subr.bf16.mxu0 %v4070
        %4687 = vmatpush1.bf16.msra.mxu0 %v4069
        %4688 = vmatprep.subr.bf16.mxu0 %v4047
        %4689 = vmatpush1.bf16.msra.mxu0 %v4046
        %4690 = vmatprep.subr.bf16.mxu0 %v4024
        %4691 = vmatpush1.bf16.msra.mxu0 %v4023
        %4692 = vmatprep.subr.bf16.mxu0 %v4001
        %4693 = vmatpush1.bf16.msra.mxu0 %v4000
        %4694 = vmatprep.subr.bf16.mxu0 %v3978
        %4695 = vmatpush1.bf16.msra.mxu0 %v3977
        %4696 = vmatprep.subr.bf16.mxu0 %v3955
        %4697 = vmatpush1.bf16.msra.mxu0 %v3954
        %4698 = vmatprep.subr.bf16.mxu0 %v3932
        %4699 = vmatpush1.bf16.msra.mxu0 %v3931
        %4700 = vmatprep.subr.bf16.mxu0 %v3909
        %4701 = vmatpush1.bf16.msra.mxu0 %v3908
        %4702 = vmatprep.subr.bf16.mxu0 0
        %4703 = vmatpush2.bf16.msra.mxu0 0
        %4704 = vmatprep.subr.bf16.mxu0 0
        %4705 = vmatpush2.bf16.msra.mxu0 0
        %4706 = vmatprep.subr.bf16.mxu0 0
        %4707 = vmatpush2.bf16.msra.mxu0 0
        %4708 = vmatprep.subr.bf16.mxu0 0
        %4709 = vmatpush2.bf16.msra.mxu0 0
        %4710 = vmatprep.subr.bf16.mxu0 0
        %4711 = vmatpush2.bf16.msra.mxu0 0
        %4712 = vmatprep.subr.bf16.mxu0 0
        %4713 = vmatpush2.bf16.msra.mxu0 0
        %4714 = vmatprep.subr.bf16.mxu0 0
        %4715 = vmatpush2.bf16.msra.mxu0 0
        %4716 = vmatprep.subr.bf16.mxu0 0
        %4717 = vmatpush2.bf16.msra.mxu0 0
        %4718 = vmatprep.mubr.bf16.mxu0 0
        %4719 = vmatmul.mubr.bf16.gmra.mxu0 %v3005
        %v4720 = vpop.f32.mrf.mxu0
        %v4721 = vadd.f32 %v3296, %v4720
        %v4722 = vpop.f32.mrf.mxu0
        %v4723 = vadd.f32 %v3300, %v4722
        %v4724 = vpop.f32.mrf.mxu0
        %v4725 = vadd.f32 %v3296, %v4724
        %v4726 = vpop.f32.mrf.mxu0
        %v4727 = vadd.f32 %v3300, %v4726
        %4728 = vdwg.mxu0
        %4729 = vmatprep.subr.bf16.mxu0 0
        %4730 = vmatpush1.bf16.msra.mxu0 %v4071
        %4731 = vmatprep.subr.bf16.mxu0 0
        %4732 = vmatpush1.bf16.msra.mxu0 %v4048
        %4733 = vmatprep.subr.bf16.mxu0 0
        %4734 = vmatpush1.bf16.msra.mxu0 %v4025
        %4735 = vmatprep.subr.bf16.mxu0 0
        %4736 = vmatpush1.bf16.msra.mxu0 %v4002
        %4737 = vmatprep.subr.bf16.mxu0 0
        %4738 = vmatpush1.bf16.msra.mxu0 %v3979
        %4739 = vmatprep.subr.bf16.mxu0 0
        %4740 = vmatpush1.bf16.msra.mxu0 %v3956
        %4741 = vmatprep.subr.bf16.mxu0 0
        %4742 = vmatpush1.bf16.msra.mxu0 %v3933
        %4743 = vmatprep.subr.bf16.mxu0 0
        %4744 = vmatpush1.bf16.msra.mxu0 %v3910
        %4745 = vmatprep.subr.bf16.mxu0 0
        %4746 = vmatpush2.bf16.msra.mxu0 0
        %4747 = vmatprep.subr.bf16.mxu0 0
        %4748 = vmatpush2.bf16.msra.mxu0 0
        %4749 = vmatprep.subr.bf16.mxu0 0
        %4750 = vmatpush2.bf16.msra.mxu0 0
        %4751 = vmatprep.subr.bf16.mxu0 0
        %4752 = vmatpush2.bf16.msra.mxu0 0
        %4753 = vmatprep.subr.bf16.mxu0 0
        %4754 = vmatpush2.bf16.msra.mxu0 0
        %4755 = vmatprep.subr.bf16.mxu0 0
        %4756 = vmatpush2.bf16.msra.mxu0 0
        %4757 = vmatprep.subr.bf16.mxu0 0
        %4758 = vmatpush2.bf16.msra.mxu0 0
        %4759 = vmatprep.subr.bf16.mxu0 0
        %4760 = vmatpush2.bf16.msra.mxu0 0
        %4761 = vmatprep.mubr.bf16.mxu0 0
        %4762 = vmatmul.mubr.bf16.gmra.mxu0 %v3005
        %v4763 = vpop.f32.mrf.mxu0
        %v4764 = vadd.f32 %v3304, %v4763
        %v4765 = vpop.f32.mrf.mxu0
        %v4766 = vpop.f32.mrf.mxu0
        %v4767 = vadd.f32 %v3304, %v4766
        %v4768 = vpop.f32.mrf.mxu0
        %4769 = vdwg.mxu0
        %v4770 = vtanh.pop %v4291
        %v4771 = vtanh.pop %v4293
        %v4772 = vtanh.pop %v4334
        %v4773 = vtanh.pop %v4336
        %v4774 = vtanh.pop %v4377
        %v4775 = vtanh.pop %v4379
        %v4776 = vtanh.pop %v4420
        %v4777 = vtanh.pop %v4422
        %v4778 = vtanh.pop %v4463
        %v4779 = vtanh.pop %v4465
        %v4780 = vtanh.pop %v4506
        %v4781 = vtanh.pop %v4508
        %v4782 = vtanh.pop %v4549
        %v4783 = vtanh.pop %v4551
        %v4784 = vtanh.pop %v4592
        %v4785 = vtanh.pop %v4594
        %v4786 = vtanh.pop %v4635
        %v4787 = vtanh.pop %v4637
        %v4788 = vtanh.pop %v4678
        %v4789 = vtanh.pop %v4680
        %v4790 = vtanh.pop %v4721
        %v4791 = vtanh.pop %v4723
        %v4792 = vtanh.pop %v4764
        %v4793 = vtanh.pop %v4295
        %v4794 = vtanh.pop %v4297
        %v4795 = vtanh.pop %v4338
        %v4796 = vtanh.pop %v4340
        %v4797 = vtanh.pop %v4381
        %v4798 = vtanh.pop %v4383
        %v4799 = vtanh.pop %v4424
        %v4800 = vtanh.pop %v4426
        %v4801 = vtanh.pop %v4467
        %v4802 = vtanh.pop %v4469
        %v4803 = vtanh.pop %v4510
        %v4804 = vtanh.pop %v4512
        %v4805 = vtanh.pop %v4553
        %v4806 = vtanh.pop %v4555
        %v4807 = vtanh.pop %v4596
        %v4808 = vtanh.pop %v4598
        %v4809 = vtanh.pop %v4639
        %v4810 = vtanh.pop %v4641
        %v4811 = vtanh.pop %v4682
        %v4812 = vtanh.pop %v4684
        %v4813 = vtanh.pop %v4725
        %v4814 = vtanh.pop %v4727
        %v4815 = vtanh.pop %v4767
        %4816 = vst [vmem:[%s355] sm:$0xff] %v4770
        %4817 = vst [vmem:[%s355 + $0x8] sm:$0xff] %v4771
        %4818 = vst [vmem:[%s355 + $0x10] sm:$0xff] %v4772
        %4819 = vst [vmem:[%s355 + $0x18] sm:$0xff] %v4773
        %4820 = vst [vmem:[%s355 + $0x20] sm:$0xff] %v4774
        %4821 = vst [vmem:[%s355 + $0x28] sm:$0xff] %v4775
        %4822 = vst [vmem:[%s355 + $0x30] sm:$0xff] %v4776
        %4823 = vst [vmem:[%s355 + $0x38] sm:$0xff] %v4777
        %4824 = vst [vmem:[%s355 + $0x40] sm:$0xff] %v4778
        %4825 = vst [vmem:[%s355 + $0x48] sm:$0xff] %v4779
        %4826 = vst [vmem:[%s355 + $0x50] sm:$0xff] %v4780
        %4827 = vst [vmem:[%s355 + $0x58] sm:$0xff] %v4781
        %4828 = vst [vmem:[%s355 + $0x60] sm:$0xff] %v4782
        %4829 = vst [vmem:[%s355 + $0x68] sm:$0xff] %v4783
        %4830 = vst [vmem:[%s355 + $0x70] sm:$0xff] %v4784
        %4831 = vst [vmem:[%s355 + $0x78] sm:$0xff] %v4785
        %4832 = vst [vmem:[%s355 + $0x80] sm:$0xff] %v4786
        %4833 = vst [vmem:[%s355 + $0x88] sm:$0xff] %v4787
        %4834 = vst [vmem:[%s355 + $0x90] sm:$0xff] %v4788
        %4835 = vst [vmem:[%s355 + $0x98] sm:$0xff] %v4789
        %4836 = vst [vmem:[%s355 + $0xa0] sm:$0xff] %v4790
        %4837 = vst [vmem:[%s355 + $0xa8] sm:$0xff] %v4791
        %4838 = vst.msk [vmem:[%s355 + $0xb0] sm:$0xff] %vm1945, %v4792
        %4839 = vst [vmem:[%s355 + $0xb8] sm:$0xff] %v4793
        %4840 = vst [vmem:[%s355 + $0xc0] sm:$0xff] %v4794
        %4841 = vst [vmem:[%s355 + $0xc8] sm:$0xff] %v4795
        %4842 = vst [vmem:[%s355 + $0xd0] sm:$0xff] %v4796
        %4843 = vst [vmem:[%s355 + $0xd8] sm:$0xff] %v4797
        %4844 = vst [vmem:[%s355 + $0xe0] sm:$0xff] %v4798
        %4845 = vst [vmem:[%s355 + $0xe8] sm:$0xff] %v4799
        %4846 = vst [vmem:[%s355 + $0xf0] sm:$0xff] %v4800
        %4847 = vst [vmem:[%s355 + $0xf8] sm:$0xff] %v4801
        %4848 = vst [vmem:[%s355 + $0x100] sm:$0xff] %v4802
        %4849 = vst [vmem:[%s355 + $0x108] sm:$0xff] %v4803
        %4850 = vst [vmem:[%s355 + $0x110] sm:$0xff] %v4804
        %4851 = vst [vmem:[%s355 + $0x118] sm:$0xff] %v4805
        %4852 = vst [vmem:[%s355 + $0x120] sm:$0xff] %v4806
        %4853 = vst [vmem:[%s355 + $0x128] sm:$0xff] %v4807
        %4854 = vst [vmem:[%s355 + $0x130] sm:$0xff] %v4808
        %4855 = vst [vmem:[%s355 + $0x138] sm:$0xff] %v4809
        %4856 = vst [vmem:[%s355 + $0x140] sm:$0xff] %v4810
        %4857 = vst [vmem:[%s355 + $0x148] sm:$0xff] %v4811
        %4858 = vst [vmem:[%s355 + $0x150] sm:$0xff] %v4812
        %4859 = vst [vmem:[%s355 + $0x158] sm:$0xff] %v4813
        %4860 = vst [vmem:[%s355 + $0x160] sm:$0xff] %v4814
        %4861 = vst.msk [vmem:[%s355 + $0x168] sm:$0xff] %vm1945, %v4815
        %s4862 = sand.u32 %s247, 1
        %s4863 = scalar_lea.sflag [#allocation3], %s4862
        %s4864 = sand.u32 %s247, 1
        %s4865 = smul.addr %s4864, 368
        %s4866 = scalar_lea.vmem [#allocation2], %s4865
        // Predicated region
        $region61: #{tpu_custom_call.1} parent=59 // pred_check
          %p4867 = pneg %p257
        $region62: #{tpu_custom_call.1} parent=59 // pred_check_branch
          %4869 = sbr.rel (%p4867) target = $region64
        $region63: #{tpu_custom_call.1} parent=59 // pred_region
          %s4870 = smul.u32 2, %s24
          %s4872 = ssub.s32 5888, 5888
          %4873 = vsyncadd %s4863, %s4872
          %s4874 = smul.addr %s4870, 23
          %s4875 = smul.addr %s4874, 128
          %s4876 = scalar_lea.hbm %s10, %s4875
          %s4877 = sshll.u32 %s4866, 4
          %s4878 = int_to_ptr.vmem [resolvable:$true] %s4877
          %4883 = dma.vmem_to_hbm [thread:$0]  %s4878, 5888, %s4876, %s4863, 2944, 2944, 184
        $region64: #{tpu_custom_call.1} parent=59 // pred_fallthru
          _
      $region60: #{tpu_custom_call.1} parent=5 // pred_fallthru
        _
      %p4884 = scmp.le.s32.totalorder 2, %s19
      // Predicated region
      $region65: #{tpu_custom_call.1} parent=5 // pred_check
        %p4885 = pneg %p4884
      $region66: #{tpu_custom_call.1} parent=5 // pred_check_branch
        %4887 = sbr.rel (%p4885) target = $region68
      $region67: #{tpu_custom_call.1} parent=5 // pred_region
        %s4888 = ssub.s32 %s19, 2
        // Predicated region
        $region69: #{tpu_custom_call.1} parent=67 // pred_check
          %p4889 = pneg %p263
        $region70: #{tpu_custom_call.1} parent=67 // pred_check_branch
          %4891 = sbr.rel (%p4889) target = $region72
        $region71: #{tpu_custom_call.1} parent=67 // pred_region
          %s4892 = sand.u32 %s248, 1
          %s4893 = scalar_lea.sflag [#allocation3], %s4892
          %s4894 = sand.u32 %s248, 1
          %s4895 = smul.addr %s4894, 368
          %s4896 = scalar_lea.vmem [#allocation2], %s4895
          %4897 = dma.done %s4893, 5888
        $region72: #{tpu_custom_call.1} parent=67 // pred_fallthru
          _
      $region68: #{tpu_custom_call.1} parent=5 // pred_fallthru
        _
    $region6: #{tpu_custom_call.1} parent=1 // loop_footer
      %s23 = sadd.s32 1, %s19
    $region7: #{tpu_custom_call.1} parent=1 // loop_footer_branch
      %18 = sbr.rel target = $region3
    $region8: #{tpu_custom_call.1} parent=1 // loop_exit
      _
    %4898 = vsyncpa [#allocation3], 1
    %s4899 = scalar_lea.sflag [#allocation3], 1
    %4900 = vsyncpa %s4899, 1

</llo_original>
